<compile_context>
chip_gen: v6e
topology: v6e:2x2x1
jax: 0.10.0
libtpu: 0.0.40
codegen_flags: <defaults>
</compile_context>

<pallas_src>
import functools

import jax
import jax.numpy as jnp
from jax.experimental import pallas as pl
from jax.experimental.pallas import tpu as pltpu


_CH_CHUNK = 256  # lane-chunk of the hidden dim for the depthwise + projection


# --------------------------------------------------------------------------
# Fused InvertedResidual kernel (one grid step = one batch element x one tile
# of output rows). The padded input block is (Hp, Wp, Cin); the expanded
# activation slab for this row tile is kept in an f32 VMEM scratch.
# --------------------------------------------------------------------------
def _fused_ir_kernel(x_ref, *rest, H, W, TR, stride, expand, shortcut,
                     n_row_tiles):
    if expand:
        we_ref, b1_ref, wd_ref, b2_ref, wp_ref, b3_ref, o_ref, h_ref = rest
    else:
        wd_ref, b2_ref, wp_ref, b3_ref, o_ref, h_ref = rest

    Wp = W + 2
    Wo = (W - 1) // stride + 1
    in_rows = (TR - 1) * stride + 3
    Chid = h_ref.shape[-1]
    Cout = wp_ref.shape[-1]

    r = pl.program_id(1)
    row0 = r * (TR * stride)                 # top padded-input row of this tile

    # ---- load the padded input row slab needed by this tile ----------------
    slab = x_ref[pl.ds(row0, in_rows), :, :]            # (in_rows, Wp, Cin)

    # ---- 1x1 expansion (MXU) + BN bias + ReLU6 -> f32 VMEM slab -------------
    if expand:
        xm = slab.reshape(in_rows * Wp, slab.shape[-1])
        h = jnp.dot(xm, we_ref[...], preferred_element_type=jnp.float32)
        h = jnp.clip(h + b1_ref[0, :], 0.0, 6.0)
        h_ref[...] = h.reshape(in_rows, Wp, Chid)        # scratch is f32

        # The depthwise conv must see zeros at the 1-pixel padding border, but
        # expanding the zero-padded input yields relu6(bias) there.  Zero only
        # the two padded columns (every tile) and the top/bottom padded rows
        # (first/last tile), instead of masking the whole slab.
        zero_col = jnp.zeros((in_rows, 1, Chid), jnp.float32)
        h_ref[:, 0:1, :] = zero_col
        h_ref[:, Wp - 1:Wp, :] = zero_col

        zero_row = jnp.zeros((1, Wp, Chid), jnp.float32)

        @pl.when(r == 0)
        def _():
            h_ref[0:1, :, :] = zero_row

        bot_local = (H + 1) - (n_row_tiles - 1) * TR * stride   # static int
        if 0 <= bot_local < in_rows:
            @pl.when(r == n_row_tiles - 1)
            def _():
                h_ref[bot_local:bot_local + 1, :, :] = zero_row
    else:
        # expand_ratio == 1: depthwise acts directly on the (already zero
        # padded) input; borders are exact zeros so no masking is required.
        h_ref[...] = slab.astype(jnp.float32)

    # ---- depthwise 3x3 + BN bias + ReLU6, then 1x1 projection (MXU) --------
    # Chid is processed in lane chunks so the f32 accumulators never outgrow
    # the vector register file for large hidden widths.
    z = jnp.zeros((TR * Wo, Cout), jnp.float32)
    for c0 in range(0, Chid, _CH_CHUNK):
        c1 = min(c0 + _CH_CHUNK, Chid)
        cs = c1 - c0
        acc = jnp.zeros((TR, Wo, cs), jnp.float32)
        if stride == 1:
            for kh in range(3):
                row = h_ref[kh:kh + TR, :, c0:c1]        # one f32 load per kh
                for kw in range(3):
                    patch = row[:, kw:kw + Wo, :]        # shifted views of `row`
                    acc = acc + patch * wd_ref[kh * 3 + kw, c0:c1]
        else:
            # TODO(synk): de-interleave W parity in the scratch so stride-2 taps
            # become dense slices instead of strided sublane reads.
            for kh in range(3):
                for kw in range(3):
                    patch = h_ref[pl.ds(kh, TR, stride=stride),
                                  pl.ds(kw, Wo, stride=stride), c0:c1]
                    acc = acc + patch * wd_ref[kh * 3 + kw, c0:c1]
        dw = jnp.clip(acc + b2_ref[0, c0:c1], 0.0, 6.0)
        z = z + jnp.dot(dw.reshape(TR * Wo, cs).astype(wp_ref.dtype),
                        wp_ref[c0:c1, :], preferred_element_type=jnp.float32)

    z = (z + b3_ref[0, :]).reshape(TR, Wo, Cout)

    if shortcut:
        # stride == 1 and Cin == Cout: residual straight from the input block
        # already resident in VMEM (padded coords -> +1 offsets).
        # Note: in the bf16 path the residual is added from the bf16-cast input.
        res = x_ref[pl.ds(row0 + 1, TR), 1:1 + W, :]
        z = z + res.astype(jnp.float32)

    o_ref[...] = z.astype(o_ref.dtype)


def _vmem_budget():
    """Generation-aware per-step VMEM budget and matching scoped-VMEM limit."""
    try:
        kind = jax.devices()[0].device_kind.lower()
    except Exception:
        kind = ""
    if "v7" in kind:                        # v7x: 64 MiB physical VMEM per core
        return 40 << 20, 48 << 20
    if ("v2" in kind) or ("v3" in kind):    # older chips: small VMEM, keep default
        return 8 << 20, None
    if ("v4" in kind) or ("v5" in kind) or ("v6" in kind):  # 128 MiB physical
        return 64 << 20, 96 << 20
    return 12 << 20, None                   # unknown: stay under default scoped limit


def _choose_row_tile(N, Ho, H, W, Cin, Chid, Cout, stride, act_bytes, budget):
    """Largest divisor of Ho whose per-step VMEM footprint fits the budget.

    Prefers the biggest tile (bigger matmul M, fewer grid steps); for N == 1 it
    keeps at least two row tiles so a 2-TensorCore chip (v7x) has parallel work.
    """
    Hp, Wp = H + 2, W + 2
    Wo = (W - 1) // stride + 1
    fixed = 2 * (Cin * Chid + Chid * Cout) * act_bytes      # matmul weights (dbl-buf)
    fixed += 2 * (9 + 3) * max(Chid, Cout) * 4              # dw weights + biases
    fixed += 2 * Hp * Wp * Cin * act_bytes                  # x block (dbl-buf)
    max_tr = Ho if N > 1 else max(1, Ho // 2)
    for tr in range(Ho, 0, -1):
        if Ho % tr or tr > max_tr:
            continue
        in_rows = (tr - 1) * stride + 3
        est = fixed
        est += in_rows * Wp * Chid * 4                      # f32 expansion slab
        est += tr * Wo * (min(Chid, _CH_CHUNK) + Cout) * 4  # live f32 accumulators
        est += 2 * tr * Wo * Cout * act_bytes               # output block (dbl-buf)
        if est <= budget:
            return tr
    return 1


# --------------------------------------------------------------------------
# NHWC entry point (preferred for chaining blocks: no layout transposes).
# --------------------------------------------------------------------------
def inverted_residual_nhwc(x_nhwc, params, stride, expand_ratio,
                           compute_dtype=None, row_tile=None):
    N, H, W, Cin = x_nhwc.shape
    Cout = params["w_proj"].shape[1]
    Chid = params["w_dw"].shape[1]
    use_shortcut = (stride == 1) and (Cin == Cout)
    Ho = (H - 1) // stride + 1
    Wo = (W - 1) // stride + 1
    Hp, Wp = H + 2, W + 2

    budget, vmem_limit = _vmem_budget()
    if compute_dtype is None:
        # bf16 MXU operands by default on TPU (bf16-native MXUs); accumulation
        # and the depthwise path stay f32 inside the kernel.
        try:
            on_tpu = jax.devices()[0].platform == "tpu"
        except Exception:
            on_tpu = False
        compute_dtype = jnp.bfloat16 if on_tpu else jnp.float32

    # Fold the BN scale into the conv weights; only biases are added in-kernel.
    wd = (params["w_dw"] * params["scale2"][None, :]).astype(jnp.float32)
    wp = (params["w_proj"] * params["scale3"][None, :]).astype(compute_dtype)
    b2 = params["bias2"].reshape(1, Chid).astype(jnp.float32)
    b3 = params["bias3"].reshape(1, Cout).astype(jnp.float32)

    # TODO(synk): fuse this 1-pixel zero pad into the previous block's output
    # write (or use clamped in-kernel halo reads) to save one HBM round trip.
    xp = jnp.pad(x_nhwc, ((0, 0), (1, 1), (1, 1), (0, 0))).astype(compute_dtype)

    act_bytes = jnp.dtype(compute_dtype).itemsize
    TR = row_tile or _choose_row_tile(N, Ho, H, W, Cin, Chid, Cout, stride,
                                      act_bytes, budget)
    assert Ho % TR == 0, (Ho, TR)
    in_rows = (TR - 1) * stride + 3
    n_row_tiles = Ho // TR

    expand = expand_ratio != 1
    kern = functools.partial(_fused_ir_kernel, H=H, W=W, TR=TR, stride=stride,
                             expand=expand, shortcut=use_shortcut,
                             n_row_tiles=n_row_tiles)

    in_specs = [pl.BlockSpec((None, Hp, Wp, Cin), lambda n, r: (n, 0, 0, 0))]
    args = [xp]
    if expand:
        we = (params["w_expand"] * params["scale1"][None, :]).astype(compute_dtype)
        b1 = params["bias1"].reshape(1, Chid).astype(jnp.float32)
        in_specs += [pl.BlockSpec((Cin, Chid), lambda n, r: (0, 0)),
                     pl.BlockSpec((1, Chid), lambda n, r: (0, 0))]
        args += [we, b1]
    in_specs += [pl.BlockSpec((9, Chid), lambda n, r: (0, 0)),
                 pl.BlockSpec((1, Chid), lambda n, r: (0, 0)),
                 pl.BlockSpec((Chid, Cout), lambda n, r: (0, 0)),
                 pl.BlockSpec((1, Cout), lambda n, r: (0, 0))]
    args += [wd, b2, wp, b3]

    cp_kwargs = dict(dimension_semantics=("parallel", "parallel"))
    if vmem_limit is not None:
        cp_kwargs["vmem_limit_bytes"] = vmem_limit

    return pl.pallas_call(
        kern,
        out_shape=jax.ShapeDtypeStruct((N, Ho, Wo, Cout), compute_dtype),
        grid=(N, n_row_tiles),
        in_specs=in_specs,
        out_specs=pl.BlockSpec((None, TR, Wo, Cout), lambda n, r: (n, r, 0, 0)),
        scratch_shapes=[pltpu.VMEM((in_rows, Wp, Chid), jnp.float32)],
        compiler_params=pltpu.CompilerParams(**cp_kwargs),
    )(*args)


# --------------------------------------------------------------------------
# NCHW wrapper (PyTorch parity). Layout is converted once at the module
# boundary; for a chain of blocks, stay in NHWC via inverted_residual_nhwc.
# --------------------------------------------------------------------------
def inverted_residual(x_nchw, params, stride, expand_ratio,
                      compute_dtype=jnp.float32):
    x = jnp.transpose(x_nchw, (0, 2, 3, 1))
    y = inverted_residual_nhwc(x, params, stride, expand_ratio, compute_dtype)
    return jnp.transpose(y, (0, 3, 1, 2))


# --------------------------------------------------------------------------
# Pure-JAX reference (NCHW, lax conv) used only to validate the kernel.
# --------------------------------------------------------------------------
def ref_inverted_residual(x, p, stride, expand_ratio, use_shortcut, hidden):
    h = x
    if expand_ratio != 1:
        w = jnp.transpose(p["w_expand"])[:, :, None, None]
        h = jax.lax.conv_general_dilated(h, w, (1, 1), "VALID",
                                         dimension_numbers=("NCHW", "OIHW", "NCHW"))
        h = h * p["scale1"][None, :, None, None] + p["bias1"][None, :, None, None]
        h = jnp.clip(h, 0.0, 6.0)
    wd = jnp.transpose(p["w_dw"]).reshape(hidden, 3, 3)[:, None, :, :]
    h = jax.lax.conv_general_dilated(h, wd, (stride, stride), ((1, 1), (1, 1)),
                                     dimension_numbers=("NCHW", "OIHW", "NCHW"),
                                     feature_group_count=hidden)
    h = h * p["scale2"][None, :, None, None] + p["bias2"][None, :, None, None]
    h = jnp.clip(h, 0.0, 6.0)
    wp = jnp.transpose(p["w_proj"])[:, :, None, None]
    h = jax.lax.conv_general_dilated(h, wp, (1, 1), "VALID",
                                     dimension_numbers=("NCHW", "OIHW", "NCHW"))
    h = h * p["scale3"][None, :, None, None] + p["bias3"][None, :, None, None]
    if use_shortcut:
        h = x + h
    return h


def fold_bn(gamma, beta, mean, var, eps=1e-5):
    scale = gamma / jnp.sqrt(var + eps)
    bias = beta - mean * scale
    return scale, bias


def make_bn(c):
    gamma = 1.0 + 0.01 * jnp.arange(c, dtype=jnp.float32)
    beta = 0.01 * jnp.arange(c, dtype=jnp.float32)
    mean = 0.005 * jnp.arange(c, dtype=jnp.float32)
    var = 1.0 + 0.02 * jnp.arange(c, dtype=jnp.float32)
    return fold_bn(gamma, beta, mean, var)


def make_params(key, cin, cout, expand_ratio):
    chid = cin * expand_ratio
    k0, k1, k2 = jax.random.split(key, 3)
    p = {}
    if expand_ratio != 1:
        p["w_expand"] = 0.1 * jax.random.normal(k0, (cin, chid), jnp.float32)
        p["scale1"], p["bias1"] = make_bn(chid)
    p["w_dw"] = 0.1 * jax.random.normal(k1, (9, chid), jnp.float32)   # (kh*3+kw, C)
    p["scale2"], p["bias2"] = make_bn(chid)
    p["w_proj"] = 0.1 * jax.random.normal(k2, (chid, cout), jnp.float32)
    p["scale3"], p["bias3"] = make_bn(cout)
    return p


if __name__ == "__main__":
    key = jax.random.PRNGKey(0)
    kx, kp1, kp2, kp3 = jax.random.split(key, 4)

    # ---- Config A: expand_ratio=4, stride=1, Cin==Cout -> residual shortcut ----
    N, Cin, H, W = 2, 8, 16, 16
    expand_ratio, stride, Cout = 4, 1, 8
    params_a = make_params(kp1, Cin, Cout, expand_ratio)
    x_a = jax.random.normal(kx, (N, Cin, H, W), jnp.float32)

    out_a = inverted_residual(x_a, params_a, stride, expand_ratio,
                              compute_dtype=jnp.float32)
    out_a = jax.block_until_ready(out_a)
    ref_a = ref_inverted_residual(x_a, params_a, stride, expand_ratio,
                                  use_shortcut=True, hidden=Cin * expand_ratio)
    assert out_a.shape == ref_a.shape, (out_a.shape, ref_a.shape)
    err_a = float(jnp.max(jnp.abs(out_a - ref_a)))
    assert jnp.allclose(out_a, ref_a, atol=5e-4, rtol=5e-4), err_a

    # ---- Config A with bf16 MXU operands (f32 accumulation): loose tolerance ----
    out_ab = inverted_residual(x_a, params_a, stride, expand_ratio,
                               compute_dtype=jnp.bfloat16)
    out_ab = jax.block_until_ready(out_ab).astype(jnp.float32)
    err_ab = float(jnp.max(jnp.abs(out_ab - ref_a)))
    assert err_ab < 0.2, err_ab

    # ---- Config B: expand_ratio=1 (no expansion conv), Cin != Cout, no shortcut ----
    N2, Cin2, H2, W2, Cout2 = 2, 16, 16, 16, 24
    params_b = make_params(kp2, Cin2, Cout2, 1)
    x_b = jax.random.normal(kx, (N2, Cin2, H2, W2), jnp.float32)
    out_b = inverted_residual(x_b, params_b, 1, 1, compute_dtype=jnp.float32)
    out_b = jax.block_until_ready(out_b)
    ref_b = ref_inverted_residual(x_b, params_b, 1, 1,
                                  use_shortcut=False, hidden=Cin2)
    assert out_b.shape == ref_b.shape, (out_b.shape, ref_b.shape)
    err_b = float(jnp.max(jnp.abs(out_b - ref_b)))
    assert jnp.allclose(out_b, ref_b, atol=5e-4, rtol=5e-4), err_b

    # ---- Config C: stride=2 downsampling block (expand_ratio=6, no shortcut) ----
    N3, Cin3, H3, W3, Cout3, er3 = 2, 8, 16, 16, 16, 6
    params_c = make_params(kp3, Cin3, Cout3, er3)
    x_c = jax.random.normal(kx, (N3, Cin3, H3, W3), jnp.float32)
    out_c = inverted_residual(x_c, params_c, 2, er3, compute_dtype=jnp.float32)
    out_c = jax.block_until_ready(out_c)
    ref_c = ref_inverted_residual(x_c, params_c, 2, er3,
                                  use_shortcut=False, hidden=Cin3 * er3)
    assert out_c.shape == ref_c.shape, (out_c.shape, ref_c.shape)
    err_c = float(jnp.max(jnp.abs(out_c - ref_c)))
    assert jnp.allclose(out_c, ref_c, atol=5e-4, rtol=5e-4), err_c

    print("KERNEL_OK")
</pallas_src>

<mosaic_0001>
module attributes {stable_mosaic.version = 11 : i64} {
  func.func @_fused_ir_kernel(%arg0: i32, %arg1: i32, %arg2: memref<1x18x18x8xf32, #tpu.memory_space<vmem>>, %arg3: memref<8x32xf32, #tpu.memory_space<vmem>>, %arg4: memref<1x32xf32, #tpu.memory_space<vmem>>, %arg5: memref<9x32xf32, #tpu.memory_space<vmem>>, %arg6: memref<1x32xf32, #tpu.memory_space<vmem>>, %arg7: memref<32x8xf32, #tpu.memory_space<vmem>>, %arg8: memref<1x8xf32, #tpu.memory_space<vmem>>, %arg9: memref<1x16x16x8xf32, #tpu.memory_space<vmem>>, %arg10: memref<18x18x32xf32, #tpu.memory_space<vmem>>) attributes {dimension_semantics = [#tpu.dimension_semantics<parallel>, #tpu.dimension_semantics<parallel>], iteration_bounds = array<i64: 2, 1>, scalar_prefetch = 0 : i64, scratch_operands = 1 : i64, tpu.core_type = #tpu.core_type<tc>, window_params = [{transform_indices = @transform_0, window_bounds = array<i64: 1, 18, 18, 8>}, {pipeline_mode = #tpu.pipeline_mode<synchronous>, transform_indices = @transform_1, window_bounds = array<i64: 8, 32>}, {pipeline_mode = #tpu.pipeline_mode<synchronous>, transform_indices = @transform_2, window_bounds = array<i64: 1, 32>}, {pipeline_mode = #tpu.pipeline_mode<synchronous>, transform_indices = @transform_3, window_bounds = array<i64: 9, 32>}, {pipeline_mode = #tpu.pipeline_mode<synchronous>, transform_indices = @transform_4, window_bounds = array<i64: 1, 32>}, {pipeline_mode = #tpu.pipeline_mode<synchronous>, transform_indices = @transform_5, window_bounds = array<i64: 32, 8>}, {pipeline_mode = #tpu.pipeline_mode<synchronous>, transform_indices = @transform_6, window_bounds = array<i64: 1, 8>}, {transform_indices = @transform_7, window_bounds = array<i64: 1, 16, 16, 8>}]} {
    %c16_i32 = arith.constant 16 : i32
    %0 = arith.muli %arg1, %c16_i32 : i32
    %c0 = arith.constant 0 : index
    %1 = arith.index_cast %0 : i32 to index
    %c0_0 = arith.constant 0 : index
    %c0_1 = arith.constant 0 : index
    %2 = vector.load %arg2[%c0, %1, %c0_0, %c0_1] : memref<1x18x18x8xf32, #tpu.memory_space<vmem>>, vector<1x18x18x8xf32>
    %3 = vector.shape_cast %2 : vector<1x18x18x8xf32> to vector<18x18x8xf32>
    %4 = vector.shape_cast %3 : vector<18x18x8xf32> to vector<324x8xf32>
    %c0_2 = arith.constant 0 : index
    %c0_3 = arith.constant 0 : index
    %5 = vector.load %arg3[%c0_2, %c0_3] : memref<8x32xf32, #tpu.memory_space<vmem>>, vector<8x32xf32>
    %cst = arith.constant dense<0.000000e+00> : vector<324x32xf32>
    %6 = tpu.matmul %4, %5, %cst {dimension_numbers = #tpu.dot_dimension_numbers<[1], [0], [0], [1], [0, 0, 1, 1], [], []>} : vector<324x8xf32>, vector<8x32xf32>, vector<324x32xf32> -> vector<324x32xf32>
    %c0_4 = arith.constant 0 : index
    %c0_5 = arith.constant 0 : index
    %7 = vector.load %arg4[%c0_4, %c0_5] : memref<1x32xf32, #tpu.memory_space<vmem>>, vector<1x32xf32>
    %8 = vector.shape_cast %7 : vector<1x32xf32> to vector<32xf32>
    %9 = vector.shape_cast %8 : vector<32xf32> to vector<1x32xf32>
    %10 = vector.broadcast %9 : vector<1x32xf32> to vector<324x32xf32>
    %11 = arith.addf %6, %10 : vector<324x32xf32>
    %cst_6 = arith.constant 0.000000e+00 : f32
    %cst_7 = arith.constant 6.000000e+00 : f32
    %12 = vector.broadcast %cst_6 : f32 to vector<324x32xf32>
    %13 = arith.maximumf %12, %11 : vector<324x32xf32>
    %14 = vector.broadcast %cst_7 : f32 to vector<324x32xf32>
    %15 = arith.minimumf %14, %13 : vector<324x32xf32>
    %16 = vector.shape_cast %15 : vector<324x32xf32> to vector<18x18x32xf32>
    %c0_8 = arith.constant 0 : index
    %c0_9 = arith.constant 0 : index
    %c0_10 = arith.constant 0 : index
    %17 = vector.load %arg10[%c0_8, %c0_9, %c0_10] : memref<18x18x32xf32, #tpu.memory_space<vmem>>, vector<18x18x32xf32>
    tpu.vector_store %arg10[%c0_8, %c0_9, %c0_10], %16 {strides = array<i32>} : memref<18x18x32xf32, #tpu.memory_space<vmem>>, vector<18x18x32xf32>,
    %cst_11 = arith.constant 0.000000e+00 : f32
    %18 = vector.broadcast %cst_11 : f32 to vector<18x1x32xf32>
    %c0_12 = arith.constant 0 : index
    %c0_13 = arith.constant 0 : index
    %c0_14 = arith.constant 0 : index
    %19 = vector.load %arg10[%c0_12, %c0_13, %c0_14] : memref<18x18x32xf32, #tpu.memory_space<vmem>>, vector<18x1x32xf32>
    tpu.vector_store %arg10[%c0_12, %c0_13, %c0_14], %18 {strides = array<i32>} : memref<18x18x32xf32, #tpu.memory_space<vmem>>, vector<18x1x32xf32>,
    %c0_15 = arith.constant 0 : index
    %c17 = arith.constant 17 : index
    %c0_16 = arith.constant 0 : index
    %20 = vector.load %arg10[%c0_15, %c17, %c0_16] : memref<18x18x32xf32, #tpu.memory_space<vmem>>, vector<18x1x32xf32>
    tpu.vector_store %arg10[%c0_15, %c17, %c0_16], %18 {strides = array<i32>} : memref<18x18x32xf32, #tpu.memory_space<vmem>>, vector<18x1x32xf32>,
    %cst_17 = arith.constant 0.000000e+00 : f32
    %21 = vector.broadcast %cst_17 : f32 to vector<1x18x32xf32>
    %c0_i32 = arith.constant 0 : i32
    %22 = arith.cmpi eq, %arg1, %c0_i32 : i32
    %23 = arith.extui %22 : i1 to i32
    %c0_i32_18 = arith.constant 0 : i32
    %24 = arith.cmpi ne, %23, %c0_i32_18 : i32
    scf.if %24 {
      %c0_58 = arith.constant 0 : index
      %c0_59 = arith.constant 0 : index
      %c0_60 = arith.constant 0 : index
      %123 = vector.load %arg10[%c0_58, %c0_59, %c0_60] : memref<18x18x32xf32, #tpu.memory_space<vmem>>, vector<1x18x32xf32>
      tpu.vector_store %arg10[%c0_58, %c0_59, %c0_60], %21 {strides = array<i32>} : memref<18x18x32xf32, #tpu.memory_space<vmem>>, vector<1x18x32xf32>,
    } else {
    }
    %c0_i32_19 = arith.constant 0 : i32
    %25 = arith.cmpi eq, %arg1, %c0_i32_19 : i32
    %26 = arith.extui %25 : i1 to i32
    %c0_i32_20 = arith.constant 0 : i32
    %27 = arith.cmpi ne, %26, %c0_i32_20 : i32
    scf.if %27 {
      %c17_58 = arith.constant 17 : index
      %c0_59 = arith.constant 0 : index
      %c0_60 = arith.constant 0 : index
      %123 = vector.load %arg10[%c17_58, %c0_59, %c0_60] : memref<18x18x32xf32, #tpu.memory_space<vmem>>, vector<1x18x32xf32>
      tpu.vector_store %arg10[%c17_58, %c0_59, %c0_60], %21 {strides = array<i32>} : memref<18x18x32xf32, #tpu.memory_space<vmem>>, vector<1x18x32xf32>,
    } else {
    }
    %cst_21 = arith.constant 0.000000e+00 : f32
    %28 = vector.broadcast %cst_21 : f32 to vector<256x8xf32>
    %cst_22 = arith.constant 0.000000e+00 : f32
    %29 = vector.broadcast %cst_22 : f32 to vector<16x16x32xf32>
    %c0_23 = arith.constant 0 : index
    %c0_24 = arith.constant 0 : index
    %c0_25 = arith.constant 0 : index
    %30 = vector.load %arg10[%c0_23, %c0_24, %c0_25] : memref<18x18x32xf32, #tpu.memory_space<vmem>>, vector<16x18x32xf32>
    %31 = vector.extract_strided_slice %30 {offsets = [0, 0, 0], sizes = [16, 16, 32], strides = [1, 1, 1]} : vector<16x18x32xf32> to vector<16x16x32xf32>
    %c0_26 = arith.constant 0 : index
    %c0_27 = arith.constant 0 : index
    %32 = vector.load %arg5[%c0_26, %c0_27] : memref<9x32xf32, #tpu.memory_space<vmem>>, vector<1x32xf32>
    %33 = vector.shape_cast %32 : vector<1x32xf32> to vector<32xf32>
    %34 = vector.shape_cast %33 : vector<32xf32> to vector<1x1x32xf32>
    %35 = vector.broadcast %34 : vector<1x1x32xf32> to vector<16x16x32xf32>
    %36 = arith.mulf %31, %35 : vector<16x16x32xf32>
    %37 = arith.addf %29, %36 : vector<16x16x32xf32>
    %38 = vector.extract_strided_slice %30 {offsets = [0, 1, 0], sizes = [16, 16, 32], strides = [1, 1, 1]} : vector<16x18x32xf32> to vector<16x16x32xf32>
    %c1 = arith.constant 1 : index
    %c0_28 = arith.constant 0 : index
    %39 = vector.load %arg5[%c1, %c0_28] : memref<9x32xf32, #tpu.memory_space<vmem>>, vector<1x32xf32>
    %40 = vector.shape_cast %39 : vector<1x32xf32> to vector<32xf32>
    %41 = vector.shape_cast %40 : vector<32xf32> to vector<1x1x32xf32>
    %42 = vector.broadcast %41 : vector<1x1x32xf32> to vector<16x16x32xf32>
    %43 = arith.mulf %38, %42 : vector<16x16x32xf32>
    %44 = arith.addf %37, %43 : vector<16x16x32xf32>
    %45 = vector.extract_strided_slice %30 {offsets = [0, 2, 0], sizes = [16, 16, 32], strides = [1, 1, 1]} : vector<16x18x32xf32> to vector<16x16x32xf32>
    %c2 = arith.constant 2 : index
    %c0_29 = arith.constant 0 : index
    %46 = vector.load %arg5[%c2, %c0_29] : memref<9x32xf32, #tpu.memory_space<vmem>>, vector<1x32xf32>
    %47 = vector.shape_cast %46 : vector<1x32xf32> to vector<32xf32>
    %48 = vector.shape_cast %47 : vector<32xf32> to vector<1x1x32xf32>
    %49 = vector.broadcast %48 : vector<1x1x32xf32> to vector<16x16x32xf32>
    %50 = arith.mulf %45, %49 : vector<16x16x32xf32>
    %51 = arith.addf %44, %50 : vector<16x16x32xf32>
    %c1_30 = arith.constant 1 : index
    %c0_31 = arith.constant 0 : index
    %c0_32 = arith.constant 0 : index
    %52 = vector.load %arg10[%c1_30, %c0_31, %c0_32] : memref<18x18x32xf32, #tpu.memory_space<vmem>>, vector<16x18x32xf32>
    %53 = vector.extract_strided_slice %52 {offsets = [0, 0, 0], sizes = [16, 16, 32], strides = [1, 1, 1]} : vector<16x18x32xf32> to vector<16x16x32xf32>
    %c3 = arith.constant 3 : index
    %c0_33 = arith.constant 0 : index
    %54 = vector.load %arg5[%c3, %c0_33] : memref<9x32xf32, #tpu.memory_space<vmem>>, vector<1x32xf32>
    %55 = vector.shape_cast %54 : vector<1x32xf32> to vector<32xf32>
    %56 = vector.shape_cast %55 : vector<32xf32> to vector<1x1x32xf32>
    %57 = vector.broadcast %56 : vector<1x1x32xf32> to vector<16x16x32xf32>
    %58 = arith.mulf %53, %57 : vector<16x16x32xf32>
    %59 = arith.addf %51, %58 : vector<16x16x32xf32>
    %60 = vector.extract_strided_slice %52 {offsets = [0, 1, 0], sizes = [16, 16, 32], strides = [1, 1, 1]} : vector<16x18x32xf32> to vector<16x16x32xf32>
    %c4 = arith.constant 4 : index
    %c0_34 = arith.constant 0 : index
    %61 = vector.load %arg5[%c4, %c0_34] : memref<9x32xf32, #tpu.memory_space<vmem>>, vector<1x32xf32>
    %62 = vector.shape_cast %61 : vector<1x32xf32> to vector<32xf32>
    %63 = vector.shape_cast %62 : vector<32xf32> to vector<1x1x32xf32>
    %64 = vector.broadcast %63 : vector<1x1x32xf32> to vector<16x16x32xf32>
    %65 = arith.mulf %60, %64 : vector<16x16x32xf32>
    %66 = arith.addf %59, %65 : vector<16x16x32xf32>
    %67 = vector.extract_strided_slice %52 {offsets = [0, 2, 0], sizes = [16, 16, 32], strides = [1, 1, 1]} : vector<16x18x32xf32> to vector<16x16x32xf32>
    %c5 = arith.constant 5 : index
    %c0_35 = arith.constant 0 : index
    %68 = vector.load %arg5[%c5, %c0_35] : memref<9x32xf32, #tpu.memory_space<vmem>>, vector<1x32xf32>
    %69 = vector.shape_cast %68 : vector<1x32xf32> to vector<32xf32>
    %70 = vector.shape_cast %69 : vector<32xf32> to vector<1x1x32xf32>
    %71 = vector.broadcast %70 : vector<1x1x32xf32> to vector<16x16x32xf32>
    %72 = arith.mulf %67, %71 : vector<16x16x32xf32>
    %73 = arith.addf %66, %72 : vector<16x16x32xf32>
    %c2_36 = arith.constant 2 : index
    %c0_37 = arith.constant 0 : index
    %c0_38 = arith.constant 0 : index
    %74 = vector.load %arg10[%c2_36, %c0_37, %c0_38] : memref<18x18x32xf32, #tpu.memory_space<vmem>>, vector<16x18x32xf32>
    %75 = vector.extract_strided_slice %74 {offsets = [0, 0, 0], sizes = [16, 16, 32], strides = [1, 1, 1]} : vector<16x18x32xf32> to vector<16x16x32xf32>
    %c6 = arith.constant 6 : index
    %c0_39 = arith.constant 0 : index
    %76 = vector.load %arg5[%c6, %c0_39] : memref<9x32xf32, #tpu.memory_space<vmem>>, vector<1x32xf32>
    %77 = vector.shape_cast %76 : vector<1x32xf32> to vector<32xf32>
    %78 = vector.shape_cast %77 : vector<32xf32> to vector<1x1x32xf32>
    %79 = vector.broadcast %78 : vector<1x1x32xf32> to vector<16x16x32xf32>
    %80 = arith.mulf %75, %79 : vector<16x16x32xf32>
    %81 = arith.addf %73, %80 : vector<16x16x32xf32>
    %82 = vector.extract_strided_slice %74 {offsets = [0, 1, 0], sizes = [16, 16, 32], strides = [1, 1, 1]} : vector<16x18x32xf32> to vector<16x16x32xf32>
    %c7 = arith.constant 7 : index
    %c0_40 = arith.constant 0 : index
    %83 = vector.load %arg5[%c7, %c0_40] : memref<9x32xf32, #tpu.memory_space<vmem>>, vector<1x32xf32>
    %84 = vector.shape_cast %83 : vector<1x32xf32> to vector<32xf32>
    %85 = vector.shape_cast %84 : vector<32xf32> to vector<1x1x32xf32>
    %86 = vector.broadcast %85 : vector<1x1x32xf32> to vector<16x16x32xf32>
    %87 = arith.mulf %82, %86 : vector<16x16x32xf32>
    %88 = arith.addf %81, %87 : vector<16x16x32xf32>
    %89 = vector.extract_strided_slice %74 {offsets = [0, 2, 0], sizes = [16, 16, 32], strides = [1, 1, 1]} : vector<16x18x32xf32> to vector<16x16x32xf32>
    %c8 = arith.constant 8 : index
    %c0_41 = arith.constant 0 : index
    %90 = vector.load %arg5[%c8, %c0_41] : memref<9x32xf32, #tpu.memory_space<vmem>>, vector<1x32xf32>
    %91 = vector.shape_cast %90 : vector<1x32xf32> to vector<32xf32>
    %92 = vector.shape_cast %91 : vector<32xf32> to vector<1x1x32xf32>
    %93 = vector.broadcast %92 : vector<1x1x32xf32> to vector<16x16x32xf32>
    %94 = arith.mulf %89, %93 : vector<16x16x32xf32>
    %95 = arith.addf %88, %94 : vector<16x16x32xf32>
    %c0_42 = arith.constant 0 : index
    %c0_43 = arith.constant 0 : index
    %96 = vector.load %arg6[%c0_42, %c0_43] : memref<1x32xf32, #tpu.memory_space<vmem>>, vector<1x32xf32>
    %97 = vector.shape_cast %96 : vector<1x32xf32> to vector<32xf32>
    %98 = vector.shape_cast %97 : vector<32xf32> to vector<1x1x32xf32>
    %99 = vector.broadcast %98 : vector<1x1x32xf32> to vector<16x16x32xf32>
    %100 = arith.addf %95, %99 : vector<16x16x32xf32>
    %cst_44 = arith.constant 0.000000e+00 : f32
    %cst_45 = arith.constant 6.000000e+00 : f32
    %101 = vector.broadcast %cst_44 : f32 to vector<16x16x32xf32>
    %102 = arith.maximumf %101, %100 : vector<16x16x32xf32>
    %103 = vector.broadcast %cst_45 : f32 to vector<16x16x32xf32>
    %104 = arith.minimumf %103, %102 : vector<16x16x32xf32>
    %105 = vector.shape_cast %104 : vector<16x16x32xf32> to vector<256x32xf32>
    %c0_46 = arith.constant 0 : index
    %c0_47 = arith.constant 0 : index
    %106 = vector.load %arg7[%c0_46, %c0_47] : memref<32x8xf32, #tpu.memory_space<vmem>>, vector<32x8xf32>
    %cst_48 = arith.constant dense<0.000000e+00> : vector<256x8xf32>
    %107 = tpu.matmul %105, %106, %cst_48 {dimension_numbers = #tpu.dot_dimension_numbers<[1], [0], [0], [1], [0, 0, 1, 1], [], []>} : vector<256x32xf32>, vector<32x8xf32>, vector<256x8xf32> -> vector<256x8xf32>
    %108 = arith.addf %28, %107 : vector<256x8xf32>
    %c0_49 = arith.constant 0 : index
    %c0_50 = arith.constant 0 : index
    %109 = vector.load %arg8[%c0_49, %c0_50] : memref<1x8xf32, #tpu.memory_space<vmem>>, vector<1x8xf32>
    %110 = vector.shape_cast %109 : vector<1x8xf32> to vector<8xf32>
    %111 = vector.shape_cast %110 : vector<8xf32> to vector<1x8xf32>
    %112 = vector.broadcast %111 : vector<1x8xf32> to vector<256x8xf32>
    %113 = arith.addf %108, %112 : vector<256x8xf32>
    %114 = vector.shape_cast %113 : vector<256x8xf32> to vector<16x16x8xf32>
    %c1_i32 = arith.constant 1 : i32
    %115 = arith.addi %0, %c1_i32 : i32
    %c0_51 = arith.constant 0 : index
    %116 = arith.index_cast %115 : i32 to index
    %c1_52 = arith.constant 1 : index
    %c0_53 = arith.constant 0 : index
    %117 = vector.load %arg2[%c0_51, %116, %c1_52, %c0_53] : memref<1x18x18x8xf32, #tpu.memory_space<vmem>>, vector<1x16x16x8xf32>
    %118 = vector.shape_cast %117 : vector<1x16x16x8xf32> to vector<16x16x8xf32>
    %119 = arith.addf %114, %118 : vector<16x16x8xf32>
    %c0_54 = arith.constant 0 : index
    %c0_55 = arith.constant 0 : index
    %c0_56 = arith.constant 0 : index
    %c0_57 = arith.constant 0 : index
    %120 = vector.load %arg9[%c0_54, %c0_55, %c0_56, %c0_57] : memref<1x16x16x8xf32, #tpu.memory_space<vmem>>, vector<1x16x16x8xf32>
    %121 = vector.shape_cast %120 : vector<1x16x16x8xf32> to vector<16x16x8xf32>
    %122 = vector.shape_cast %119 : vector<16x16x8xf32> to vector<1x16x16x8xf32>
    tpu.vector_store %arg9[%c0_54, %c0_55, %c0_56, %c0_57], %122 {strides = array<i32>} : memref<1x16x16x8xf32, #tpu.memory_space<vmem>>, vector<1x16x16x8xf32>,
    return
  }
  func.func @transform_0(%arg0: i32, %arg1: i32) -> (i32, i32, i32, i32) {
    %c0_i32 = arith.constant 0 : i32
    %c0_i32_0 = arith.constant 0 : i32
    %c0_i32_1 = arith.constant 0 : i32
    %c0_i32_2 = arith.constant 0 : i32
    return %arg0, %c0_i32, %c0_i32_0, %c0_i32_1 : i32, i32, i32, i32
  }
  func.func @transform_1(%arg0: i32, %arg1: i32) -> (i32, i32) {
    %c0_i32 = arith.constant 0 : i32
    %c0_i32_0 = arith.constant 0 : i32
    %c0_i32_1 = arith.constant 0 : i32
    return %c0_i32, %c0_i32_0 : i32, i32
  }
  func.func @transform_2(%arg0: i32, %arg1: i32) -> (i32, i32) {
    %c0_i32 = arith.constant 0 : i32
    %c0_i32_0 = arith.constant 0 : i32
    %c0_i32_1 = arith.constant 0 : i32
    return %c0_i32, %c0_i32_0 : i32, i32
  }
  func.func @transform_3(%arg0: i32, %arg1: i32) -> (i32, i32) {
    %c0_i32 = arith.constant 0 : i32
    %c0_i32_0 = arith.constant 0 : i32
    %c0_i32_1 = arith.constant 0 : i32
    return %c0_i32, %c0_i32_0 : i32, i32
  }
  func.func @transform_4(%arg0: i32, %arg1: i32) -> (i32, i32) {
    %c0_i32 = arith.constant 0 : i32
    %c0_i32_0 = arith.constant 0 : i32
    %c0_i32_1 = arith.constant 0 : i32
    return %c0_i32, %c0_i32_0 : i32, i32
  }
  func.func @transform_5(%arg0: i32, %arg1: i32) -> (i32, i32) {
    %c0_i32 = arith.constant 0 : i32
    %c0_i32_0 = arith.constant 0 : i32
    %c0_i32_1 = arith.constant 0 : i32
    return %c0_i32, %c0_i32_0 : i32, i32
  }
  func.func @transform_6(%arg0: i32, %arg1: i32) -> (i32, i32) {
    %c0_i32 = arith.constant 0 : i32
    %c0_i32_0 = arith.constant 0 : i32
    %c0_i32_1 = arith.constant 0 : i32
    return %c0_i32, %c0_i32_0 : i32, i32
  }
  func.func @transform_7(%arg0: i32, %arg1: i32) -> (i32, i32, i32, i32) {
    %c0_i32 = arith.constant 0 : i32
    %c0_i32_0 = arith.constant 0 : i32
    %c0_i32_1 = arith.constant 0 : i32
    return %arg0, %arg1, %c0_i32, %c0_i32_0 : i32, i32, i32, i32
  }
}

</mosaic_0001>

<llo_original>
// kernel: tpu_custom_call.1
$region0: #{tpu_custom_call.1}
  #allocation0 [shape = 'u32[]', space=smem, size = 0x4, offset = 0x4, fixed_abs, tag = 'smem constant byte address 0x4 - core index']
  #allocation1 [shape = 'u32[144,128]{1,0:T(1,128)}', space=vmem, size = 0x12000, scoped, tag = 'internal scratch']
  #allocation2 [shape = 'f32[18,18,32]{2,1,0:T(8,128)}', space=vmem, size = 0x36000, scoped, tag = 'scratch operand']
  %s0 = inlined_call_operand.vmem [shape: f32[2,18,18,8], index: 0, kind: input, shape index: {}]
  %s1 = inlined_call_operand.vmem [shape: f32[8,32], index: 1, kind: input, shape index: {}]
  %s2 = inlined_call_operand.vmem [shape: f32[1,32], index: 2, kind: input, shape index: {}]
  %s3 = inlined_call_operand.vmem [shape: f32[9,32], index: 3, kind: input, shape index: {}]
  %s4 = inlined_call_operand.vmem [shape: f32[1,32], index: 4, kind: input, shape index: {}]
  %s5 = inlined_call_operand.vmem [shape: f32[32,8], index: 5, kind: input, shape index: {}]
  %s6 = inlined_call_operand.vmem [shape: f32[1,8], index: 6, kind: input, shape index: {}]
  %s7 = inlined_call_operand.vmem [shape: f32[2,16,16,8], index: 7, kind: output, shape index: {}]
  %s8 = sld [smem:[#allocation0]]
  $region65: #{tpu_custom_call.1} parent=0
    _
  %s10 = ssub.s32 1, %s8
  %s11 = scalar_select 0, %s10, %s8
  loop: start=0, step=1, limit=4
  $region2: #{tpu_custom_call.1} parent=0 // loop_pre_header
    _
  $region3: #{tpu_custom_call.1} parent=0 // loop_header
    %s13 = sphi 0, %s17
    %p14 = scmp.ge.s32.totalorder %s13, 4
    %s20 = sphi 0, %s32
    %s21 = sphi 0, %s28
    %s22 = sphi 0, %s20
    %s23 = sphi 0, %s21
    %s24 = sphi 0, %s22
    %s25 = sphi 0, %s23
    %s35 = sphi 0, %s37
    %s38 = sphi 0, %s35
    %s39 = sphi 0, %s38
    %s55 = sphi 0, %s39
    %s59 = sphi 0, %s59
    %s61 = sphi 0, %s59
    %s62 = sphi 0, %s61
    %s76 = sphi 0, %s62
    %s80 = sphi 0, %s80
    %s82 = sphi 0, %s80
    %s83 = sphi 0, %s82
    %s97 = sphi 0, %s83
    %s101 = sphi 0, %s101
    %s103 = sphi 0, %s101
    %s104 = sphi 0, %s103
    %s118 = sphi 0, %s104
    %s122 = sphi 0, %s122
    %s124 = sphi 0, %s122
    %s125 = sphi 0, %s124
    %s139 = sphi 0, %s125
    %s143 = sphi 0, %s143
    %s145 = sphi 0, %s143
    %s146 = sphi 0, %s145
    %s160 = sphi 0, %s146
    %s164 = sphi 0, %s164
    %s166 = sphi 0, %s164
    %s167 = sphi 0, %s166
    %s181 = sphi 0, %s167
    %s189 = sphi 0, %s191
    %s192 = sphi 0, %s189
    %s193 = sphi 0, %s192
    %s209 = sphi 0, %s193
  $region4: #{tpu_custom_call.1} parent=0 // loop_header_branch
    %16 = sbr.rel (%p14) target = $region8
  $region5: #{tpu_custom_call.1} parent=0 // loop_body
    %s18 = ssub.s32 %s13, 1
    %s19 = ssub.s32 %s13, 2
    %s26 = sadd.s32 1, %s21
    %p27 = scmp.ge.s32.totalorder %s26, 1
    %s28 = scalar_select %p27, 0, %s26
    %s29 = sadd.s32 1, %s20
    %s30 = scalar_select %p27, %s29, %s20
    %p31 = scmp.ge.s32.totalorder %s30, 2
    %s32 = scalar_select %p31, 0, %s30
    %s33 = ssub.s32 %s20, %s32
    %p34 = scmp.eq.s32.totalorder %s33, 0
    %s36 = sadd.s32 %s35, 1
    %s37 = scalar_select %p34, %s35, %s36
    %p40 = pneg %p34
    %p41 = scmp.eq.s32.totalorder %s13, 1
    %p42 = por %p40, %p41
    %p43 = scmp.ne.s32.totalorder %s35, %s38
    %p44 = scmp.eq.s32.totalorder %s13, 0
    %p45 = por %p43, %p44
    %p46 = scmp.ne.s32.totalorder %s35, %s38
    %p47 = scmp.eq.s32.totalorder %s18, 1
    %p48 = por %p46, %p47
    %p49 = scmp.ne.s32.totalorder %s38, %s39
    %p50 = scmp.eq.s32.totalorder %s18, 0
    %p51 = por %p49, %p50
    %p52 = scmp.ne.s32.totalorder %s38, %s39
    %p53 = scmp.eq.s32.totalorder %s19, 1
    %p54 = por %p52, %p53
    %p56 = scmp.ne.s32.totalorder %s39, %s55
    %p57 = scmp.eq.s32.totalorder %s19, 0
    %p58 = por %p56, %p57
    %s60 = sadd.s32 %s59, 1
    %p63 = scmp.eq.s32.totalorder %s13, 1
    %p64 = scmp.ne.s32.totalorder %s59, %s61
    %p65 = scmp.eq.s32.totalorder %s13, 0
    %p66 = por %p64, %p65
    %p67 = scmp.ne.s32.totalorder %s59, %s61
    %p68 = scmp.eq.s32.totalorder %s18, 1
    %p69 = por %p67, %p68
    %p70 = scmp.ne.s32.totalorder %s61, %s62
    %p71 = scmp.eq.s32.totalorder %s18, 0
    %p72 = por %p70, %p71
    %p73 = scmp.ne.s32.totalorder %s61, %s62
    %p74 = scmp.eq.s32.totalorder %s19, 1
    %p75 = por %p73, %p74
    %p77 = scmp.ne.s32.totalorder %s62, %s76
    %p78 = scmp.eq.s32.totalorder %s19, 0
    %p79 = por %p77, %p78
    %s81 = sadd.s32 %s80, 1
    %p84 = scmp.eq.s32.totalorder %s13, 1
    %p85 = scmp.ne.s32.totalorder %s80, %s82
    %p86 = scmp.eq.s32.totalorder %s13, 0
    %p87 = por %p85, %p86
    %p88 = scmp.ne.s32.totalorder %s80, %s82
    %p89 = scmp.eq.s32.totalorder %s18, 1
    %p90 = por %p88, %p89
    %p91 = scmp.ne.s32.totalorder %s82, %s83
    %p92 = scmp.eq.s32.totalorder %s18, 0
    %p93 = por %p91, %p92
    %p94 = scmp.ne.s32.totalorder %s82, %s83
    %p95 = scmp.eq.s32.totalorder %s19, 1
    %p96 = por %p94, %p95
    %p98 = scmp.ne.s32.totalorder %s83, %s97
    %p99 = scmp.eq.s32.totalorder %s19, 0
    %p100 = por %p98, %p99
    %s102 = sadd.s32 %s101, 1
    %p105 = scmp.eq.s32.totalorder %s13, 1
    %p106 = scmp.ne.s32.totalorder %s101, %s103
    %p107 = scmp.eq.s32.totalorder %s13, 0
    %p108 = por %p106, %p107
    %p109 = scmp.ne.s32.totalorder %s101, %s103
    %p110 = scmp.eq.s32.totalorder %s18, 1
    %p111 = por %p109, %p110
    %p112 = scmp.ne.s32.totalorder %s103, %s104
    %p113 = scmp.eq.s32.totalorder %s18, 0
    %p114 = por %p112, %p113
    %p115 = scmp.ne.s32.totalorder %s103, %s104
    %p116 = scmp.eq.s32.totalorder %s19, 1
    %p117 = por %p115, %p116
    %p119 = scmp.ne.s32.totalorder %s104, %s118
    %p120 = scmp.eq.s32.totalorder %s19, 0
    %p121 = por %p119, %p120
    %s123 = sadd.s32 %s122, 1
    %p126 = scmp.eq.s32.totalorder %s13, 1
    %p127 = scmp.ne.s32.totalorder %s122, %s124
    %p128 = scmp.eq.s32.totalorder %s13, 0
    %p129 = por %p127, %p128
    %p130 = scmp.ne.s32.totalorder %s122, %s124
    %p131 = scmp.eq.s32.totalorder %s18, 1
    %p132 = por %p130, %p131
    %p133 = scmp.ne.s32.totalorder %s124, %s125
    %p134 = scmp.eq.s32.totalorder %s18, 0
    %p135 = por %p133, %p134
    %p136 = scmp.ne.s32.totalorder %s124, %s125
    %p137 = scmp.eq.s32.totalorder %s19, 1
    %p138 = por %p136, %p137
    %p140 = scmp.ne.s32.totalorder %s125, %s139
    %p141 = scmp.eq.s32.totalorder %s19, 0
    %p142 = por %p140, %p141
    %s144 = sadd.s32 %s143, 1
    %p147 = scmp.eq.s32.totalorder %s13, 1
    %p148 = scmp.ne.s32.totalorder %s143, %s145
    %p149 = scmp.eq.s32.totalorder %s13, 0
    %p150 = por %p148, %p149
    %p151 = scmp.ne.s32.totalorder %s143, %s145
    %p152 = scmp.eq.s32.totalorder %s18, 1
    %p153 = por %p151, %p152
    %p154 = scmp.ne.s32.totalorder %s145, %s146
    %p155 = scmp.eq.s32.totalorder %s18, 0
    %p156 = por %p154, %p155
    %p157 = scmp.ne.s32.totalorder %s145, %s146
    %p158 = scmp.eq.s32.totalorder %s19, 1
    %p159 = por %p157, %p158
    %p161 = scmp.ne.s32.totalorder %s146, %s160
    %p162 = scmp.eq.s32.totalorder %s19, 0
    %p163 = por %p161, %p162
    %s165 = sadd.s32 %s164, 1
    %p168 = scmp.eq.s32.totalorder %s13, 1
    %p169 = scmp.ne.s32.totalorder %s164, %s166
    %p170 = scmp.eq.s32.totalorder %s13, 0
    %p171 = por %p169, %p170
    %p172 = scmp.ne.s32.totalorder %s164, %s166
    %p173 = scmp.eq.s32.totalorder %s18, 1
    %p174 = por %p172, %p173
    %p175 = scmp.ne.s32.totalorder %s166, %s167
    %p176 = scmp.eq.s32.totalorder %s18, 0
    %p177 = por %p175, %p176
    %p178 = scmp.ne.s32.totalorder %s166, %s167
    %p179 = scmp.eq.s32.totalorder %s19, 1
    %p180 = por %p178, %p179
    %p182 = scmp.ne.s32.totalorder %s167, %s181
    %p183 = scmp.eq.s32.totalorder %s19, 0
    %p184 = por %p182, %p183
    %s185 = ssub.s32 %s20, %s32
    %s186 = ssub.s32 %s21, %s28
    %s187 = sor.u32 %s185, %s186
    %p188 = scmp.eq.s32.totalorder %s187, 0
    %s190 = sadd.s32 %s189, 1
    %s191 = scalar_select %p188, %s189, %s190
    %p194 = pneg %p188
    %p195 = scmp.eq.s32.totalorder %s13, 1
    %p196 = por %p194, %p195
    %p197 = scmp.ne.s32.totalorder %s189, %s192
    %p198 = scmp.eq.s32.totalorder %s13, 0
    %p199 = por %p197, %p198
    %p200 = scmp.ne.s32.totalorder %s189, %s192
    %p201 = scmp.eq.s32.totalorder %s18, 1
    %p202 = por %p200, %p201
    %p203 = scmp.ne.s32.totalorder %s192, %s193
    %p204 = scmp.eq.s32.totalorder %s18, 0
    %p205 = por %p203, %p204
    %p206 = scmp.ne.s32.totalorder %s192, %s193
    %p207 = scmp.eq.s32.totalorder %s19, 1
    %p208 = por %p206, %p207
    %p210 = scmp.ne.s32.totalorder %s193, %s209
    %p211 = scmp.eq.s32.totalorder %s19, 0
    %p212 = por %p210, %p211
    %p213 = scmp.le.s32.totalorder 1, %s13
    %p214 = scmp.lt.s32.totalorder %s13, 3
    %p215 = pnand %p213, %p214
    %p216 = pneg %p215
    // Predicated region
    $region9: #{tpu_custom_call.1} parent=5 // pred_check
      _
    $region10: #{tpu_custom_call.1} parent=5 // pred_check_branch
      %218 = sbr.rel (%p215) target = $region12
    $region11: #{tpu_custom_call.1} parent=5 // pred_region
      %s219 = ssub.s32 %s13, 1
      // Predicated region
      $region13: #{tpu_custom_call.1} parent=11 // pred_check
        %p220 = pneg %p72
      $region14: #{tpu_custom_call.1} parent=11 // pred_check_branch
        %222 = sbr.rel (%p220) target = $region16
      $region15: #{tpu_custom_call.1} parent=11 // pred_region
        _
      $region16: #{tpu_custom_call.1} parent=11 // pred_fallthru
        _
      // Predicated region
      $region17: #{tpu_custom_call.1} parent=11 // pred_check
        %p223 = pneg %p93
      $region18: #{tpu_custom_call.1} parent=11 // pred_check_branch
        %225 = sbr.rel (%p223) target = $region20
      $region19: #{tpu_custom_call.1} parent=11 // pred_region
        _
      $region20: #{tpu_custom_call.1} parent=11 // pred_fallthru
        _
      // Predicated region
      $region21: #{tpu_custom_call.1} parent=11 // pred_check
        %p226 = pneg %p114
      $region22: #{tpu_custom_call.1} parent=11 // pred_check_branch
        %228 = sbr.rel (%p226) target = $region24
      $region23: #{tpu_custom_call.1} parent=11 // pred_region
        _
      $region24: #{tpu_custom_call.1} parent=11 // pred_fallthru
        _
      // Predicated region
      $region25: #{tpu_custom_call.1} parent=11 // pred_check
        %p229 = pneg %p135
      $region26: #{tpu_custom_call.1} parent=11 // pred_check_branch
        %231 = sbr.rel (%p229) target = $region28
      $region27: #{tpu_custom_call.1} parent=11 // pred_region
        _
      $region28: #{tpu_custom_call.1} parent=11 // pred_fallthru
        _
      // Predicated region
      $region29: #{tpu_custom_call.1} parent=11 // pred_check
        %p232 = pneg %p156
      $region30: #{tpu_custom_call.1} parent=11 // pred_check_branch
        %234 = sbr.rel (%p232) target = $region32
      $region31: #{tpu_custom_call.1} parent=11 // pred_region
        _
      $region32: #{tpu_custom_call.1} parent=11 // pred_fallthru
        _
      // Predicated region
      $region33: #{tpu_custom_call.1} parent=11 // pred_check
        %p235 = pneg %p177
      $region34: #{tpu_custom_call.1} parent=11 // pred_check_branch
        %237 = sbr.rel (%p235) target = $region36
      $region35: #{tpu_custom_call.1} parent=11 // pred_region
        _
      $region36: #{tpu_custom_call.1} parent=11 // pred_fallthru
        _
    $region12: #{tpu_custom_call.1} parent=5 // pred_fallthru
      _
    %p238 = scmp.lt.s32.totalorder %s13, 2
    // Predicated region
    $region37: #{tpu_custom_call.1} parent=5 // pred_check
      %p239 = pneg %p238
    $region38: #{tpu_custom_call.1} parent=5 // pred_check_branch
      %241 = sbr.rel (%p239) target = $region40
    $region39: #{tpu_custom_call.1} parent=5 // pred_region
      // Predicated region
      $region41: #{tpu_custom_call.1} parent=39 // pred_check
        %p242 = pneg %p45
      $region42: #{tpu_custom_call.1} parent=39 // pred_check_branch
        %244 = sbr.rel (%p242) target = $region44
      $region43: #{tpu_custom_call.1} parent=39 // pred_region
        %p245 = scmp.lt.s32.totalorder %s20, 1
        %s246 = scalar_select %p245, %s20, 1
        %s247 = smul.addr %s246, 54
        %s248 = smul.addr %s247, 8
        %s249 = scalar_lea.vmem %s0, %s248
      $region44: #{tpu_custom_call.1} parent=39 // pred_fallthru
        _
    $region40: #{tpu_custom_call.1} parent=5 // pred_fallthru
      _
    %p250 = scmp.le.s32.totalorder 1, %s13
    %p251 = scmp.lt.s32.totalorder %s13, 3
    %p252 = pnand %p250, %p251
    %p253 = pneg %p252
    // Predicated region
    $region45: #{tpu_custom_call.1} parent=5 // pred_check
      _
    $region46: #{tpu_custom_call.1} parent=5 // pred_check_branch
      %255 = sbr.rel (%p252) target = $region48
    $region47: #{tpu_custom_call.1} parent=5 // pred_region
      %s256 = ssub.s32 %s13, 1
      %p257 = scmp.lt.s32.totalorder %s22, 1
      %s258 = scalar_select %p257, %s22, 1
      %s259 = smul.addr %s258, 54
      %s260 = smul.addr %s259, 8
      %s261 = scalar_lea.vmem %s0, %s260
      %p262 = pneg %p51
      %p263 = pneg %p48
      %p264 = pneg %p72
      %p265 = pneg %p69
      %p266 = pneg %p93
      %p267 = pneg %p90
      %p268 = pneg %p114
      %p269 = pneg %p111
      %p270 = pneg %p135
      %p271 = pneg %p132
      %p272 = pneg %p156
      %p273 = pneg %p153
      %p274 = pneg %p177
      %p275 = pneg %p174
      %p276 = pneg %p205
      %p277 = pneg %p202
      %s278 = smul.u32 16, %s23
      %p279 = scmp.lt.s32.totalorder %s22, 1
      %s280 = scalar_select %p279, %s22, 1
      %p281 = scmp.lt.s32.totalorder %s278, 15
      %s282 = scalar_select %p281, %s278, 15
      %s283 = smul.addr %s282, 2
      %s284 = smul.addr %s280, 32
      %s285 = sadd.s32 %s283, %s284
      %s286 = smul.addr %s285, 8
      %s287 = scalar_lea.vmem %s7, %s286
      %p288 = scmp.lt.s32.totalorder %s22, 1
      %s289 = scalar_select %p288, %s22, 1
      %s290 = smul.addr %s289, 54
      %s291 = smul.addr %s290, 8
      %s292 = scalar_lea.vmem %s0, %s291
      %s293 = smul.u32 16, %s23
      %p294 = scmp.lt.s32.totalorder %s22, 1
      %s295 = scalar_select %p294, %s22, 1
      %p296 = scmp.lt.s32.totalorder %s293, 15
      %s297 = scalar_select %p296, %s293, 15
      %s298 = smul.addr %s297, 2
      %s299 = smul.addr %s295, 32
      %s300 = sadd.s32 %s298, %s299
      %s301 = smul.addr %s300, 8
      %s302 = scalar_lea.vmem %s7, %s301
      %s303 = smul.u32 16, %s23
      %s304 = smul.u32 %s23, 16
      %s305 = smul.u32 %s304, 24
      %s306 = scalar_lea.vmem %s292, %s305
      %v307 = vld [vmem:[%s306] sm:$0xff]
      %v308 = vld [vmem:[%s306 + $0x8] sm:$0xff]
      %v309 = vld [vmem:[%s306 + $0x10] sm:$0x3]
      %v310 = vld [vmem:[%s306 + $0x18] sm:$0xff]
      %v311 = vld [vmem:[%s306 + $0x20] sm:$0xff]
      %v312 = vld [vmem:[%s306 + $0x28] sm:$0x3]
      %v313 = vld [vmem:[%s306 + $0x30] sm:$0xff]
      %v314 = vld [vmem:[%s306 + $0x38] sm:$0xff]
      %v315 = vld [vmem:[%s306 + $0x40] sm:$0x3]
      %v316 = vld [vmem:[%s306 + $0x48] sm:$0xff]
      %v317 = vld [vmem:[%s306 + $0x50] sm:$0xff]
      %v318 = vld [vmem:[%s306 + $0x58] sm:$0x3]
      %v319 = vld [vmem:[%s306 + $0x60] sm:$0xff]
      %v320 = vld [vmem:[%s306 + $0x68] sm:$0xff]
      %v321 = vld [vmem:[%s306 + $0x70] sm:$0x3]
      %v322 = vld [vmem:[%s306 + $0x78] sm:$0xff]
      %v323 = vld [vmem:[%s306 + $0x80] sm:$0xff]
      %v324 = vld [vmem:[%s306 + $0x88] sm:$0x3]
      %v325 = vld [vmem:[%s306 + $0x90] sm:$0xff]
      %v326 = vld [vmem:[%s306 + $0x98] sm:$0xff]
      %v327 = vld [vmem:[%s306 + $0xa0] sm:$0x3]
      %v328 = vld [vmem:[%s306 + $0xa8] sm:$0xff]
      %v329 = vld [vmem:[%s306 + $0xb0] sm:$0xff]
      %v330 = vld [vmem:[%s306 + $0xb8] sm:$0x3]
      %v331 = vld [vmem:[%s306 + $0xc0] sm:$0xff]
      %v332 = vld [vmem:[%s306 + $0xc8] sm:$0xff]
      %v333 = vld [vmem:[%s306 + $0xd0] sm:$0x3]
      %v334 = vld [vmem:[%s306 + $0xd8] sm:$0xff]
      %v335 = vld [vmem:[%s306 + $0xe0] sm:$0xff]
      %v336 = vld [vmem:[%s306 + $0xe8] sm:$0x3]
      %v337 = vld [vmem:[%s306 + $0xf0] sm:$0xff]
      %v338 = vld [vmem:[%s306 + $0xf8] sm:$0xff]
      %v339 = vld [vmem:[%s306 + $0x100] sm:$0x3]
      %v340 = vld [vmem:[%s306 + $0x108] sm:$0xff]
      %v341 = vld [vmem:[%s306 + $0x110] sm:$0xff]
      %v342 = vld [vmem:[%s306 + $0x118] sm:$0x3]
      %v343 = vld [vmem:[%s306 + $0x120] sm:$0xff]
      %v344 = vld [vmem:[%s306 + $0x128] sm:$0xff]
      %v345 = vld [vmem:[%s306 + $0x130] sm:$0x3]
      %v346 = vld [vmem:[%s306 + $0x138] sm:$0xff]
      %v347 = vld [vmem:[%s306 + $0x140] sm:$0xff]
      %v348 = vld [vmem:[%s306 + $0x148] sm:$0x3]
      %v349 = vld [vmem:[%s306 + $0x150] sm:$0xff]
      %v350 = vld [vmem:[%s306 + $0x158] sm:$0xff]
      %v351 = vld [vmem:[%s306 + $0x160] sm:$0x3]
      %v352 = vld [vmem:[%s306 + $0x168] sm:$0xff]
      %v353 = vld [vmem:[%s306 + $0x170] sm:$0xff]
      %v354 = vld [vmem:[%s306 + $0x178] sm:$0x3]
      %v355 = vld [vmem:[%s306 + $0x180] sm:$0xff]
      %v356 = vld [vmem:[%s306 + $0x188] sm:$0xff]
      %v357 = vld [vmem:[%s306 + $0x190] sm:$0x3]
      %v358 = vld [vmem:[%s306 + $0x198] sm:$0xff]
      %v359 = vld [vmem:[%s306 + $0x1a0] sm:$0xff]
      %v360 = vld [vmem:[%s306 + $0x1a8] sm:$0x3]
      %v415 = vcombine.high %v307, %v307
      %v417 = vunpack.c.l.s4 1983009808
      %v418 = vunpack.c.0.s8 %v417
      %v419 = vlaneseq
      %v420 = vshrl.u32 %v419, 7
      %v421 = vsub.s32 %v418, %v420
      %v422 = vrot.slane %v307, %v421
      %v424 = vunpack.c.l.s4 1983009808
      %v425 = vunpack.c.0.s8 %v424
      %v426 = vlaneseq
      %v427 = vshrl.u32 %v426, 7
      %v428 = vsub.s32 %v425, %v427
      %v429 = vrot.slane %v415, %v428
      %v430 = vcombine.high %v422, %v422
      %v431 = vcombine.high %v429, %v429
      %v432 = vcombine.high %v308, %v308
      %v434 = vunpack.c.l.s4 1983009808
      %v435 = vunpack.c.0.s8 %v434
      %v436 = vlaneseq
      %v437 = vshrl.u32 %v436, 7
      %v438 = vsub.s32 %v435, %v437
      %v439 = vrot.slane %v308, %v438
      %v441 = vunpack.c.l.s4 1983009808
      %v442 = vunpack.c.0.s8 %v441
      %v443 = vlaneseq
      %v444 = vshrl.u32 %v443, 7
      %v445 = vsub.s32 %v442, %v444
      %v446 = vrot.slane %v432, %v445
      %v447 = vcombine.high %v439, %v439
      %v448 = vcombine.high %v446, %v446
      %v450 = vunpack.c.l.s4 1983009808
      %v451 = vunpack.c.0.s8 %v450
      %v452 = vlaneseq
      %v453 = vshrl.u32 %v452, 7
      %v454 = vsub.s32 %v451, %v453
      %v455 = vrot.slane %v309, %v454
      %v456 = vcombine.high %v310, %v310
      %v458 = vunpack.c.l.s4 1983009808
      %v459 = vunpack.c.0.s8 %v458
      %v460 = vlaneseq
      %v461 = vshrl.u32 %v460, 7
      %v462 = vsub.s32 %v459, %v461
      %v463 = vrot.slane %v310, %v462
      %v465 = vunpack.c.l.s4 1983009808
      %v466 = vunpack.c.0.s8 %v465
      %v467 = vlaneseq
      %v468 = vshrl.u32 %v467, 7
      %v469 = vsub.s32 %v466, %v468
      %v470 = vrot.slane %v456, %v469
      %v471 = vcombine.high %v463, %v463
      %v472 = vcombine.high %v470, %v470
      %v473 = vcombine.high %v311, %v311
      %v475 = vunpack.c.l.s4 1983009808
      %v476 = vunpack.c.0.s8 %v475
      %v477 = vlaneseq
      %v478 = vshrl.u32 %v477, 7
      %v479 = vsub.s32 %v476, %v478
      %v480 = vrot.slane %v311, %v479
      %v482 = vunpack.c.l.s4 1983009808
      %v483 = vunpack.c.0.s8 %v482
      %v484 = vlaneseq
      %v485 = vshrl.u32 %v484, 7
      %v486 = vsub.s32 %v483, %v485
      %v487 = vrot.slane %v473, %v486
      %v488 = vcombine.high %v480, %v480
      %v489 = vcombine.high %v487, %v487
      %v491 = vunpack.c.l.s4 1983009808
      %v492 = vunpack.c.0.s8 %v491
      %v493 = vlaneseq
      %v494 = vshrl.u32 %v493, 7
      %v495 = vsub.s32 %v492, %v494
      %v496 = vrot.slane %v312, %v495
      %v497 = vcombine.high %v313, %v313
      %v499 = vunpack.c.l.s4 1983009808
      %v500 = vunpack.c.0.s8 %v499
      %v501 = vlaneseq
      %v502 = vshrl.u32 %v501, 7
      %v503 = vsub.s32 %v500, %v502
      %v504 = vrot.slane %v313, %v503
      %v506 = vunpack.c.l.s4 1983009808
      %v507 = vunpack.c.0.s8 %v506
      %v508 = vlaneseq
      %v509 = vshrl.u32 %v508, 7
      %v510 = vsub.s32 %v507, %v509
      %v511 = vrot.slane %v497, %v510
      %v512 = vcombine.high %v504, %v504
      %v513 = vcombine.high %v511, %v511
      %v514 = vcombine.high %v314, %v314
      %v516 = vunpack.c.l.s4 1983009808
      %v517 = vunpack.c.0.s8 %v516
      %v518 = vlaneseq
      %v519 = vshrl.u32 %v518, 7
      %v520 = vsub.s32 %v517, %v519
      %v521 = vrot.slane %v314, %v520
      %v523 = vunpack.c.l.s4 1983009808
      %v524 = vunpack.c.0.s8 %v523
      %v525 = vlaneseq
      %v526 = vshrl.u32 %v525, 7
      %v527 = vsub.s32 %v524, %v526
      %v528 = vrot.slane %v514, %v527
      %v529 = vcombine.high %v521, %v521
      %v530 = vcombine.high %v528, %v528
      %v532 = vunpack.c.l.s4 1983009808
      %v533 = vunpack.c.0.s8 %v532
      %v534 = vlaneseq
      %v535 = vshrl.u32 %v534, 7
      %v536 = vsub.s32 %v533, %v535
      %v537 = vrot.slane %v315, %v536
      %v538 = vcombine.high %v316, %v316
      %v540 = vunpack.c.l.s4 1983009808
      %v541 = vunpack.c.0.s8 %v540
      %v542 = vlaneseq
      %v543 = vshrl.u32 %v542, 7
      %v544 = vsub.s32 %v541, %v543
      %v545 = vrot.slane %v316, %v544
      %v547 = vunpack.c.l.s4 1983009808
      %v548 = vunpack.c.0.s8 %v547
      %v549 = vlaneseq
      %v550 = vshrl.u32 %v549, 7
      %v551 = vsub.s32 %v548, %v550
      %v552 = vrot.slane %v538, %v551
      %v553 = vcombine.high %v545, %v545
      %v554 = vcombine.high %v552, %v552
      %v555 = vcombine.high %v317, %v317
      %v557 = vunpack.c.l.s4 1983009808
      %v558 = vunpack.c.0.s8 %v557
      %v559 = vlaneseq
      %v560 = vshrl.u32 %v559, 7
      %v561 = vsub.s32 %v558, %v560
      %v562 = vrot.slane %v317, %v561
      %v564 = vunpack.c.l.s4 1983009808
      %v565 = vunpack.c.0.s8 %v564
      %v566 = vlaneseq
      %v567 = vshrl.u32 %v566, 7
      %v568 = vsub.s32 %v565, %v567
      %v569 = vrot.slane %v555, %v568
      %v570 = vcombine.high %v562, %v562
      %v571 = vcombine.high %v569, %v569
      %v573 = vunpack.c.l.s4 1983009808
      %v574 = vunpack.c.0.s8 %v573
      %v575 = vlaneseq
      %v576 = vshrl.u32 %v575, 7
      %v577 = vsub.s32 %v574, %v576
      %v578 = vrot.slane %v318, %v577
      %v579 = vcombine.high %v319, %v319
      %v581 = vunpack.c.l.s4 1983009808
      %v582 = vunpack.c.0.s8 %v581
      %v583 = vlaneseq
      %v584 = vshrl.u32 %v583, 7
      %v585 = vsub.s32 %v582, %v584
      %v586 = vrot.slane %v319, %v585
      %v588 = vunpack.c.l.s4 1983009808
      %v589 = vunpack.c.0.s8 %v588
      %v590 = vlaneseq
      %v591 = vshrl.u32 %v590, 7
      %v592 = vsub.s32 %v589, %v591
      %v593 = vrot.slane %v579, %v592
      %v594 = vcombine.high %v586, %v586
      %v595 = vcombine.high %v593, %v593
      %v596 = vcombine.high %v320, %v320
      %v598 = vunpack.c.l.s4 1983009808
      %v599 = vunpack.c.0.s8 %v598
      %v600 = vlaneseq
      %v601 = vshrl.u32 %v600, 7
      %v602 = vsub.s32 %v599, %v601
      %v603 = vrot.slane %v320, %v602
      %v605 = vunpack.c.l.s4 1983009808
      %v606 = vunpack.c.0.s8 %v605
      %v607 = vlaneseq
      %v608 = vshrl.u32 %v607, 7
      %v609 = vsub.s32 %v606, %v608
      %v610 = vrot.slane %v596, %v609
      %v611 = vcombine.high %v603, %v603
      %v612 = vcombine.high %v610, %v610
      %v614 = vunpack.c.l.s4 1983009808
      %v615 = vunpack.c.0.s8 %v614
      %v616 = vlaneseq
      %v617 = vshrl.u32 %v616, 7
      %v618 = vsub.s32 %v615, %v617
      %v619 = vrot.slane %v321, %v618
      %v620 = vcombine.high %v322, %v322
      %v622 = vunpack.c.l.s4 1983009808
      %v623 = vunpack.c.0.s8 %v622
      %v624 = vlaneseq
      %v625 = vshrl.u32 %v624, 7
      %v626 = vsub.s32 %v623, %v625
      %v627 = vrot.slane %v322, %v626
      %v629 = vunpack.c.l.s4 1983009808
      %v630 = vunpack.c.0.s8 %v629
      %v631 = vlaneseq
      %v632 = vshrl.u32 %v631, 7
      %v633 = vsub.s32 %v630, %v632
      %v634 = vrot.slane %v620, %v633
      %v635 = vcombine.high %v627, %v627
      %v636 = vcombine.high %v634, %v634
      %v637 = vcombine.high %v323, %v323
      %v639 = vunpack.c.l.s4 1983009808
      %v640 = vunpack.c.0.s8 %v639
      %v641 = vlaneseq
      %v642 = vshrl.u32 %v641, 7
      %v643 = vsub.s32 %v640, %v642
      %v644 = vrot.slane %v323, %v643
      %v646 = vunpack.c.l.s4 1983009808
      %v647 = vunpack.c.0.s8 %v646
      %v648 = vlaneseq
      %v649 = vshrl.u32 %v648, 7
      %v650 = vsub.s32 %v647, %v649
      %v651 = vrot.slane %v637, %v650
      %v652 = vcombine.high %v644, %v644
      %v653 = vcombine.high %v651, %v651
      %v655 = vunpack.c.l.s4 1983009808
      %v656 = vunpack.c.0.s8 %v655
      %v657 = vlaneseq
      %v658 = vshrl.u32 %v657, 7
      %v659 = vsub.s32 %v656, %v658
      %v660 = vrot.slane %v324, %v659
      %v661 = vcombine.high %v325, %v325
      %v663 = vunpack.c.l.s4 1983009808
      %v664 = vunpack.c.0.s8 %v663
      %v665 = vlaneseq
      %v666 = vshrl.u32 %v665, 7
      %v667 = vsub.s32 %v664, %v666
      %v668 = vrot.slane %v325, %v667
      %v670 = vunpack.c.l.s4 1983009808
      %v671 = vunpack.c.0.s8 %v670
      %v672 = vlaneseq
      %v673 = vshrl.u32 %v672, 7
      %v674 = vsub.s32 %v671, %v673
      %v675 = vrot.slane %v661, %v674
      %v676 = vcombine.high %v668, %v668
      %v677 = vcombine.high %v675, %v675
      %v678 = vcombine.high %v326, %v326
      %v680 = vunpack.c.l.s4 1983009808
      %v681 = vunpack.c.0.s8 %v680
      %v682 = vlaneseq
      %v683 = vshrl.u32 %v682, 7
      %v684 = vsub.s32 %v681, %v683
      %v685 = vrot.slane %v326, %v684
      %v687 = vunpack.c.l.s4 1983009808
      %v688 = vunpack.c.0.s8 %v687
      %v689 = vlaneseq
      %v690 = vshrl.u32 %v689, 7
      %v691 = vsub.s32 %v688, %v690
      %v692 = vrot.slane %v678, %v691
      %v693 = vcombine.high %v685, %v685
      %v694 = vcombine.high %v692, %v692
      %v696 = vunpack.c.l.s4 1983009808
      %v697 = vunpack.c.0.s8 %v696
      %v698 = vlaneseq
      %v699 = vshrl.u32 %v698, 7
      %v700 = vsub.s32 %v697, %v699
      %v701 = vrot.slane %v327, %v700
      %v702 = vcombine.high %v328, %v328
      %v704 = vunpack.c.l.s4 1983009808
      %v705 = vunpack.c.0.s8 %v704
      %v706 = vlaneseq
      %v707 = vshrl.u32 %v706, 7
      %v708 = vsub.s32 %v705, %v707
      %v709 = vrot.slane %v328, %v708
      %v711 = vunpack.c.l.s4 1983009808
      %v712 = vunpack.c.0.s8 %v711
      %v713 = vlaneseq
      %v714 = vshrl.u32 %v713, 7
      %v715 = vsub.s32 %v712, %v714
      %v716 = vrot.slane %v702, %v715
      %v717 = vcombine.high %v709, %v709
      %v718 = vcombine.high %v716, %v716
      %v719 = vcombine.high %v329, %v329
      %v721 = vunpack.c.l.s4 1983009808
      %v722 = vunpack.c.0.s8 %v721
      %v723 = vlaneseq
      %v724 = vshrl.u32 %v723, 7
      %v725 = vsub.s32 %v722, %v724
      %v726 = vrot.slane %v329, %v725
      %v728 = vunpack.c.l.s4 1983009808
      %v729 = vunpack.c.0.s8 %v728
      %v730 = vlaneseq
      %v731 = vshrl.u32 %v730, 7
      %v732 = vsub.s32 %v729, %v731
      %v733 = vrot.slane %v719, %v732
      %v734 = vcombine.high %v726, %v726
      %v735 = vcombine.high %v733, %v733
      %v737 = vunpack.c.l.s4 1983009808
      %v738 = vunpack.c.0.s8 %v737
      %v739 = vlaneseq
      %v740 = vshrl.u32 %v739, 7
      %v741 = vsub.s32 %v738, %v740
      %v742 = vrot.slane %v330, %v741
      %v743 = vcombine.high %v331, %v331
      %v745 = vunpack.c.l.s4 1983009808
      %v746 = vunpack.c.0.s8 %v745
      %v747 = vlaneseq
      %v748 = vshrl.u32 %v747, 7
      %v749 = vsub.s32 %v746, %v748
      %v750 = vrot.slane %v331, %v749
      %v752 = vunpack.c.l.s4 1983009808
      %v753 = vunpack.c.0.s8 %v752
      %v754 = vlaneseq
      %v755 = vshrl.u32 %v754, 7
      %v756 = vsub.s32 %v753, %v755
      %v757 = vrot.slane %v743, %v756
      %v758 = vcombine.high %v750, %v750
      %v759 = vcombine.high %v757, %v757
      %v760 = vcombine.high %v332, %v332
      %v762 = vunpack.c.l.s4 1983009808
      %v763 = vunpack.c.0.s8 %v762
      %v764 = vlaneseq
      %v765 = vshrl.u32 %v764, 7
      %v766 = vsub.s32 %v763, %v765
      %v767 = vrot.slane %v332, %v766
      %v769 = vunpack.c.l.s4 1983009808
      %v770 = vunpack.c.0.s8 %v769
      %v771 = vlaneseq
      %v772 = vshrl.u32 %v771, 7
      %v773 = vsub.s32 %v770, %v772
      %v774 = vrot.slane %v760, %v773
      %v775 = vcombine.high %v767, %v767
      %v776 = vcombine.high %v774, %v774
      %v778 = vunpack.c.l.s4 1983009808
      %v779 = vunpack.c.0.s8 %v778
      %v780 = vlaneseq
      %v781 = vshrl.u32 %v780, 7
      %v782 = vsub.s32 %v779, %v781
      %v783 = vrot.slane %v333, %v782
      %v784 = vcombine.high %v334, %v334
      %v786 = vunpack.c.l.s4 1983009808
      %v787 = vunpack.c.0.s8 %v786
      %v788 = vlaneseq
      %v789 = vshrl.u32 %v788, 7
      %v790 = vsub.s32 %v787, %v789
      %v791 = vrot.slane %v334, %v790
      %v793 = vunpack.c.l.s4 1983009808
      %v794 = vunpack.c.0.s8 %v793
      %v795 = vlaneseq
      %v796 = vshrl.u32 %v795, 7
      %v797 = vsub.s32 %v794, %v796
      %v798 = vrot.slane %v784, %v797
      %v799 = vcombine.high %v791, %v791
      %v800 = vcombine.high %v798, %v798
      %v801 = vcombine.high %v335, %v335
      %v803 = vunpack.c.l.s4 1983009808
      %v804 = vunpack.c.0.s8 %v803
      %v805 = vlaneseq
      %v806 = vshrl.u32 %v805, 7
      %v807 = vsub.s32 %v804, %v806
      %v808 = vrot.slane %v335, %v807
      %v810 = vunpack.c.l.s4 1983009808
      %v811 = vunpack.c.0.s8 %v810
      %v812 = vlaneseq
      %v813 = vshrl.u32 %v812, 7
      %v814 = vsub.s32 %v811, %v813
      %v815 = vrot.slane %v801, %v814
      %v816 = vcombine.high %v808, %v808
      %v817 = vcombine.high %v815, %v815
      %v819 = vunpack.c.l.s4 1983009808
      %v820 = vunpack.c.0.s8 %v819
      %v821 = vlaneseq
      %v822 = vshrl.u32 %v821, 7
      %v823 = vsub.s32 %v820, %v822
      %v824 = vrot.slane %v336, %v823
      %v825 = vcombine.high %v337, %v337
      %v827 = vunpack.c.l.s4 1983009808
      %v828 = vunpack.c.0.s8 %v827
      %v829 = vlaneseq
      %v830 = vshrl.u32 %v829, 7
      %v831 = vsub.s32 %v828, %v830
      %v832 = vrot.slane %v337, %v831
      %v834 = vunpack.c.l.s4 1983009808
      %v835 = vunpack.c.0.s8 %v834
      %v836 = vlaneseq
      %v837 = vshrl.u32 %v836, 7
      %v838 = vsub.s32 %v835, %v837
      %v839 = vrot.slane %v825, %v838
      %v840 = vcombine.high %v832, %v832
      %v841 = vcombine.high %v839, %v839
      %v842 = vcombine.high %v338, %v338
      %v844 = vunpack.c.l.s4 1983009808
      %v845 = vunpack.c.0.s8 %v844
      %v846 = vlaneseq
      %v847 = vshrl.u32 %v846, 7
      %v848 = vsub.s32 %v845, %v847
      %v849 = vrot.slane %v338, %v848
      %v851 = vunpack.c.l.s4 1983009808
      %v852 = vunpack.c.0.s8 %v851
      %v853 = vlaneseq
      %v854 = vshrl.u32 %v853, 7
      %v855 = vsub.s32 %v852, %v854
      %v856 = vrot.slane %v842, %v855
      %v857 = vcombine.high %v849, %v849
      %v858 = vcombine.high %v856, %v856
      %v860 = vunpack.c.l.s4 1983009808
      %v861 = vunpack.c.0.s8 %v860
      %v862 = vlaneseq
      %v863 = vshrl.u32 %v862, 7
      %v864 = vsub.s32 %v861, %v863
      %v865 = vrot.slane %v339, %v864
      %v866 = vcombine.high %v340, %v340
      %v868 = vunpack.c.l.s4 1983009808
      %v869 = vunpack.c.0.s8 %v868
      %v870 = vlaneseq
      %v871 = vshrl.u32 %v870, 7
      %v872 = vsub.s32 %v869, %v871
      %v873 = vrot.slane %v340, %v872
      %v875 = vunpack.c.l.s4 1983009808
      %v876 = vunpack.c.0.s8 %v875
      %v877 = vlaneseq
      %v878 = vshrl.u32 %v877, 7
      %v879 = vsub.s32 %v876, %v878
      %v880 = vrot.slane %v866, %v879
      %v881 = vcombine.high %v873, %v873
      %v882 = vcombine.high %v880, %v880
      %v883 = vcombine.high %v341, %v341
      %v885 = vunpack.c.l.s4 1983009808
      %v886 = vunpack.c.0.s8 %v885
      %v887 = vlaneseq
      %v888 = vshrl.u32 %v887, 7
      %v889 = vsub.s32 %v886, %v888
      %v890 = vrot.slane %v341, %v889
      %v892 = vunpack.c.l.s4 1983009808
      %v893 = vunpack.c.0.s8 %v892
      %v894 = vlaneseq
      %v895 = vshrl.u32 %v894, 7
      %v896 = vsub.s32 %v893, %v895
      %v897 = vrot.slane %v883, %v896
      %v898 = vcombine.high %v890, %v890
      %v899 = vcombine.high %v897, %v897
      %v901 = vunpack.c.l.s4 1983009808
      %v902 = vunpack.c.0.s8 %v901
      %v903 = vlaneseq
      %v904 = vshrl.u32 %v903, 7
      %v905 = vsub.s32 %v902, %v904
      %v906 = vrot.slane %v342, %v905
      %v907 = vcombine.high %v343, %v343
      %v909 = vunpack.c.l.s4 1983009808
      %v910 = vunpack.c.0.s8 %v909
      %v911 = vlaneseq
      %v912 = vshrl.u32 %v911, 7
      %v913 = vsub.s32 %v910, %v912
      %v914 = vrot.slane %v343, %v913
      %v916 = vunpack.c.l.s4 1983009808
      %v917 = vunpack.c.0.s8 %v916
      %v918 = vlaneseq
      %v919 = vshrl.u32 %v918, 7
      %v920 = vsub.s32 %v917, %v919
      %v921 = vrot.slane %v907, %v920
      %v922 = vcombine.high %v914, %v914
      %v923 = vcombine.high %v921, %v921
      %v924 = vcombine.high %v344, %v344
      %v926 = vunpack.c.l.s4 1983009808
      %v927 = vunpack.c.0.s8 %v926
      %v928 = vlaneseq
      %v929 = vshrl.u32 %v928, 7
      %v930 = vsub.s32 %v927, %v929
      %v931 = vrot.slane %v344, %v930
      %v933 = vunpack.c.l.s4 1983009808
      %v934 = vunpack.c.0.s8 %v933
      %v935 = vlaneseq
      %v936 = vshrl.u32 %v935, 7
      %v937 = vsub.s32 %v934, %v936
      %v938 = vrot.slane %v924, %v937
      %v939 = vcombine.high %v931, %v931
      %v940 = vcombine.high %v938, %v938
      %v942 = vunpack.c.l.s4 1983009808
      %v943 = vunpack.c.0.s8 %v942
      %v944 = vlaneseq
      %v945 = vshrl.u32 %v944, 7
      %v946 = vsub.s32 %v943, %v945
      %v947 = vrot.slane %v345, %v946
      %v948 = vcombine.high %v346, %v346
      %v950 = vunpack.c.l.s4 1983009808
      %v951 = vunpack.c.0.s8 %v950
      %v952 = vlaneseq
      %v953 = vshrl.u32 %v952, 7
      %v954 = vsub.s32 %v951, %v953
      %v955 = vrot.slane %v346, %v954
      %v957 = vunpack.c.l.s4 1983009808
      %v958 = vunpack.c.0.s8 %v957
      %v959 = vlaneseq
      %v960 = vshrl.u32 %v959, 7
      %v961 = vsub.s32 %v958, %v960
      %v962 = vrot.slane %v948, %v961
      %v963 = vcombine.high %v955, %v955
      %v964 = vcombine.high %v962, %v962
      %v965 = vcombine.high %v347, %v347
      %v967 = vunpack.c.l.s4 1983009808
      %v968 = vunpack.c.0.s8 %v967
      %v969 = vlaneseq
      %v970 = vshrl.u32 %v969, 7
      %v971 = vsub.s32 %v968, %v970
      %v972 = vrot.slane %v347, %v971
      %v974 = vunpack.c.l.s4 1983009808
      %v975 = vunpack.c.0.s8 %v974
      %v976 = vlaneseq
      %v977 = vshrl.u32 %v976, 7
      %v978 = vsub.s32 %v975, %v977
      %v979 = vrot.slane %v965, %v978
      %v980 = vcombine.high %v972, %v972
      %v981 = vcombine.high %v979, %v979
      %v983 = vunpack.c.l.s4 1983009808
      %v984 = vunpack.c.0.s8 %v983
      %v985 = vlaneseq
      %v986 = vshrl.u32 %v985, 7
      %v987 = vsub.s32 %v984, %v986
      %v988 = vrot.slane %v348, %v987
      %v989 = vcombine.high %v349, %v349
      %v991 = vunpack.c.l.s4 1983009808
      %v992 = vunpack.c.0.s8 %v991
      %v993 = vlaneseq
      %v994 = vshrl.u32 %v993, 7
      %v995 = vsub.s32 %v992, %v994
      %v996 = vrot.slane %v349, %v995
      %v998 = vunpack.c.l.s4 1983009808
      %v999 = vunpack.c.0.s8 %v998
      %v1000 = vlaneseq
      %v1001 = vshrl.u32 %v1000, 7
      %v1002 = vsub.s32 %v999, %v1001
      %v1003 = vrot.slane %v989, %v1002
      %v1004 = vcombine.high %v996, %v996
      %v1005 = vcombine.high %v1003, %v1003
      %v1006 = vcombine.high %v350, %v350
      %v1008 = vunpack.c.l.s4 1983009808
      %v1009 = vunpack.c.0.s8 %v1008
      %v1010 = vlaneseq
      %v1011 = vshrl.u32 %v1010, 7
      %v1012 = vsub.s32 %v1009, %v1011
      %v1013 = vrot.slane %v350, %v1012
      %v1015 = vunpack.c.l.s4 1983009808
      %v1016 = vunpack.c.0.s8 %v1015
      %v1017 = vlaneseq
      %v1018 = vshrl.u32 %v1017, 7
      %v1019 = vsub.s32 %v1016, %v1018
      %v1020 = vrot.slane %v1006, %v1019
      %v1021 = vcombine.high %v1013, %v1013
      %v1022 = vcombine.high %v1020, %v1020
      %v1024 = vunpack.c.l.s4 1983009808
      %v1025 = vunpack.c.0.s8 %v1024
      %v1026 = vlaneseq
      %v1027 = vshrl.u32 %v1026, 7
      %v1028 = vsub.s32 %v1025, %v1027
      %v1029 = vrot.slane %v351, %v1028
      %v1030 = vcombine.high %v352, %v352
      %v1032 = vunpack.c.l.s4 1983009808
      %v1033 = vunpack.c.0.s8 %v1032
      %v1034 = vlaneseq
      %v1035 = vshrl.u32 %v1034, 7
      %v1036 = vsub.s32 %v1033, %v1035
      %v1037 = vrot.slane %v352, %v1036
      %v1039 = vunpack.c.l.s4 1983009808
      %v1040 = vunpack.c.0.s8 %v1039
      %v1041 = vlaneseq
      %v1042 = vshrl.u32 %v1041, 7
      %v1043 = vsub.s32 %v1040, %v1042
      %v1044 = vrot.slane %v1030, %v1043
      %v1045 = vcombine.high %v1037, %v1037
      %v1046 = vcombine.high %v1044, %v1044
      %v1047 = vcombine.high %v353, %v353
      %v1049 = vunpack.c.l.s4 1983009808
      %v1050 = vunpack.c.0.s8 %v1049
      %v1051 = vlaneseq
      %v1052 = vshrl.u32 %v1051, 7
      %v1053 = vsub.s32 %v1050, %v1052
      %v1054 = vrot.slane %v353, %v1053
      %v1056 = vunpack.c.l.s4 1983009808
      %v1057 = vunpack.c.0.s8 %v1056
      %v1058 = vlaneseq
      %v1059 = vshrl.u32 %v1058, 7
      %v1060 = vsub.s32 %v1057, %v1059
      %v1061 = vrot.slane %v1047, %v1060
      %v1062 = vcombine.high %v1054, %v1054
      %v1063 = vcombine.high %v1061, %v1061
      %v1065 = vunpack.c.l.s4 1983009808
      %v1066 = vunpack.c.0.s8 %v1065
      %v1067 = vlaneseq
      %v1068 = vshrl.u32 %v1067, 7
      %v1069 = vsub.s32 %v1066, %v1068
      %v1070 = vrot.slane %v354, %v1069
      %v1071 = vcombine.high %v355, %v355
      %v1073 = vunpack.c.l.s4 1983009808
      %v1074 = vunpack.c.0.s8 %v1073
      %v1075 = vlaneseq
      %v1076 = vshrl.u32 %v1075, 7
      %v1077 = vsub.s32 %v1074, %v1076
      %v1078 = vrot.slane %v355, %v1077
      %v1080 = vunpack.c.l.s4 1983009808
      %v1081 = vunpack.c.0.s8 %v1080
      %v1082 = vlaneseq
      %v1083 = vshrl.u32 %v1082, 7
      %v1084 = vsub.s32 %v1081, %v1083
      %v1085 = vrot.slane %v1071, %v1084
      %v1086 = vcombine.high %v1078, %v1078
      %v1087 = vcombine.high %v1085, %v1085
      %v1088 = vcombine.high %v356, %v356
      %v1090 = vunpack.c.l.s4 1983009808
      %v1091 = vunpack.c.0.s8 %v1090
      %v1092 = vlaneseq
      %v1093 = vshrl.u32 %v1092, 7
      %v1094 = vsub.s32 %v1091, %v1093
      %v1095 = vrot.slane %v356, %v1094
      %v1097 = vunpack.c.l.s4 1983009808
      %v1098 = vunpack.c.0.s8 %v1097
      %v1099 = vlaneseq
      %v1100 = vshrl.u32 %v1099, 7
      %v1101 = vsub.s32 %v1098, %v1100
      %v1102 = vrot.slane %v1088, %v1101
      %v1103 = vcombine.high %v1095, %v1095
      %v1104 = vcombine.high %v1102, %v1102
      %v1106 = vunpack.c.l.s4 1983009808
      %v1107 = vunpack.c.0.s8 %v1106
      %v1108 = vlaneseq
      %v1109 = vshrl.u32 %v1108, 7
      %v1110 = vsub.s32 %v1107, %v1109
      %v1111 = vrot.slane %v357, %v1110
      %v1112 = vcombine.high %v358, %v358
      %v1114 = vunpack.c.l.s4 1983009808
      %v1115 = vunpack.c.0.s8 %v1114
      %v1116 = vlaneseq
      %v1117 = vshrl.u32 %v1116, 7
      %v1118 = vsub.s32 %v1115, %v1117
      %v1119 = vrot.slane %v358, %v1118
      %v1121 = vunpack.c.l.s4 1983009808
      %v1122 = vunpack.c.0.s8 %v1121
      %v1123 = vlaneseq
      %v1124 = vshrl.u32 %v1123, 7
      %v1125 = vsub.s32 %v1122, %v1124
      %v1126 = vrot.slane %v1112, %v1125
      %v1127 = vcombine.high %v1119, %v1119
      %v1128 = vcombine.high %v1126, %v1126
      %v1129 = vcombine.high %v359, %v359
      %v1131 = vunpack.c.l.s4 1983009808
      %v1132 = vunpack.c.0.s8 %v1131
      %v1133 = vlaneseq
      %v1134 = vshrl.u32 %v1133, 7
      %v1135 = vsub.s32 %v1132, %v1134
      %v1136 = vrot.slane %v359, %v1135
      %v1138 = vunpack.c.l.s4 1983009808
      %v1139 = vunpack.c.0.s8 %v1138
      %v1140 = vlaneseq
      %v1141 = vshrl.u32 %v1140, 7
      %v1142 = vsub.s32 %v1139, %v1141
      %v1143 = vrot.slane %v1129, %v1142
      %v1144 = vcombine.high %v1136, %v1136
      %v1145 = vcombine.high %v1143, %v1143
      %v1147 = vunpack.c.l.s4 1983009808
      %v1148 = vunpack.c.0.s8 %v1147
      %v1149 = vlaneseq
      %v1150 = vshrl.u32 %v1149, 7
      %v1151 = vsub.s32 %v1148, %v1150
      %v1152 = vrot.slane %v360, %v1151
      %v1153 = vld [vmem:[%s1] sm:$0xff]
      %v1154 = vld [vmem:[%s2] sm:$0x1]
      %v1156 = vlaneseq
      %v1157 = vshrl.u32 %v1156, 7
      %v1158 = vsub.s32 0, %v1157
      %v1159 = vrot.slane %v1154, %v1158
      %v1161 = vcombine.low %v422, %v430
      %v1162 = vcombine.low %v429, %v431
      %v1164 = vunpack.c.l.s4 1983009808
      %v1165 = vunpack.c.0.s8 %v1164
      %v1166 = vlaneseq
      %v1167 = vshrl.u32 %v1166, 7
      %v1168 = vsub.s32 %v1165, %v1167
      %v1169 = vrot.slane %v1161, %v1168
      %v1171 = vunpack.c.l.s4 1983009808
      %v1172 = vunpack.c.0.s8 %v1171
      %v1173 = vlaneseq
      %v1174 = vshrl.u32 %v1173, 7
      %v1175 = vsub.s32 %v1172, %v1174
      %v1176 = vrot.slane %v1162, %v1175
      %v1177 = vcombine.low %v1169, %v1176
      %v1178 = vcombine.low %v439, %v447
      %v1179 = vcombine.low %v446, %v448
      %v1181 = vunpack.c.l.s4 1983009808
      %v1182 = vunpack.c.0.s8 %v1181
      %v1183 = vlaneseq
      %v1184 = vshrl.u32 %v1183, 7
      %v1185 = vsub.s32 %v1182, %v1184
      %v1186 = vrot.slane %v1178, %v1185
      %v1188 = vunpack.c.l.s4 1983009808
      %v1189 = vunpack.c.0.s8 %v1188
      %v1190 = vlaneseq
      %v1191 = vshrl.u32 %v1190, 7
      %v1192 = vsub.s32 %v1189, %v1191
      %v1193 = vrot.slane %v1179, %v1192
      %v1194 = vcombine.low %v1186, %v1193
      %v1195 = vcombine.low %v455, %v463
      %v1196 = vcombine.low %v471, %v470
      %v1198 = vunpack.c.l.s4 1983009808
      %v1199 = vunpack.c.0.s8 %v1198
      %v1200 = vlaneseq
      %v1201 = vshrl.u32 %v1200, 7
      %v1202 = vsub.s32 %v1199, %v1201
      %v1203 = vrot.slane %v1195, %v1202
      %v1205 = vunpack.c.l.s4 1983009808
      %v1206 = vunpack.c.0.s8 %v1205
      %v1207 = vlaneseq
      %v1208 = vshrl.u32 %v1207, 7
      %v1209 = vsub.s32 %v1206, %v1208
      %v1210 = vrot.slane %v1196, %v1209
      %v1211 = vcombine.low %v1203, %v1210
      %v1212 = vcombine.low %v472, %v480
      %v1213 = vcombine.low %v488, %v487
      %v1215 = vunpack.c.l.s4 1983009808
      %v1216 = vunpack.c.0.s8 %v1215
      %v1217 = vlaneseq
      %v1218 = vshrl.u32 %v1217, 7
      %v1219 = vsub.s32 %v1216, %v1218
      %v1220 = vrot.slane %v1212, %v1219
      %v1222 = vunpack.c.l.s4 1983009808
      %v1223 = vunpack.c.0.s8 %v1222
      %v1224 = vlaneseq
      %v1225 = vshrl.u32 %v1224, 7
      %v1226 = vsub.s32 %v1223, %v1225
      %v1227 = vrot.slane %v1213, %v1226
      %v1228 = vcombine.low %v1220, %v1227
      %v1229 = vcombine.low %v489, %v496
      %v1230 = vcombine.low %v504, %v512
      %v1232 = vunpack.c.l.s4 1983009808
      %v1233 = vunpack.c.0.s8 %v1232
      %v1234 = vlaneseq
      %v1235 = vshrl.u32 %v1234, 7
      %v1236 = vsub.s32 %v1233, %v1235
      %v1237 = vrot.slane %v1229, %v1236
      %v1239 = vunpack.c.l.s4 1983009808
      %v1240 = vunpack.c.0.s8 %v1239
      %v1241 = vlaneseq
      %v1242 = vshrl.u32 %v1241, 7
      %v1243 = vsub.s32 %v1240, %v1242
      %v1244 = vrot.slane %v1230, %v1243
      %v1245 = vcombine.low %v1237, %v1244
      %v1246 = vcombine.low %v511, %v513
      %v1247 = vcombine.low %v521, %v529
      %v1249 = vunpack.c.l.s4 1983009808
      %v1250 = vunpack.c.0.s8 %v1249
      %v1251 = vlaneseq
      %v1252 = vshrl.u32 %v1251, 7
      %v1253 = vsub.s32 %v1250, %v1252
      %v1254 = vrot.slane %v1246, %v1253
      %v1256 = vunpack.c.l.s4 1983009808
      %v1257 = vunpack.c.0.s8 %v1256
      %v1258 = vlaneseq
      %v1259 = vshrl.u32 %v1258, 7
      %v1260 = vsub.s32 %v1257, %v1259
      %v1261 = vrot.slane %v1247, %v1260
      %v1262 = vcombine.low %v1254, %v1261
      %v1263 = vcombine.low %v528, %v530
      %v1264 = vcombine.low %v537, %v545
      %v1266 = vunpack.c.l.s4 1983009808
      %v1267 = vunpack.c.0.s8 %v1266
      %v1268 = vlaneseq
      %v1269 = vshrl.u32 %v1268, 7
      %v1270 = vsub.s32 %v1267, %v1269
      %v1271 = vrot.slane %v1263, %v1270
      %v1273 = vunpack.c.l.s4 1983009808
      %v1274 = vunpack.c.0.s8 %v1273
      %v1275 = vlaneseq
      %v1276 = vshrl.u32 %v1275, 7
      %v1277 = vsub.s32 %v1274, %v1276
      %v1278 = vrot.slane %v1264, %v1277
      %v1279 = vcombine.low %v1271, %v1278
      %v1280 = vcombine.low %v553, %v552
      %v1281 = vcombine.low %v554, %v562
      %v1283 = vunpack.c.l.s4 1983009808
      %v1284 = vunpack.c.0.s8 %v1283
      %v1285 = vlaneseq
      %v1286 = vshrl.u32 %v1285, 7
      %v1287 = vsub.s32 %v1284, %v1286
      %v1288 = vrot.slane %v1280, %v1287
      %v1290 = vunpack.c.l.s4 1983009808
      %v1291 = vunpack.c.0.s8 %v1290
      %v1292 = vlaneseq
      %v1293 = vshrl.u32 %v1292, 7
      %v1294 = vsub.s32 %v1291, %v1293
      %v1295 = vrot.slane %v1281, %v1294
      %v1296 = vcombine.low %v1288, %v1295
      %v1297 = vcombine.low %v570, %v569
      %v1298 = vcombine.low %v571, %v578
      %v1300 = vunpack.c.l.s4 1983009808
      %v1301 = vunpack.c.0.s8 %v1300
      %v1302 = vlaneseq
      %v1303 = vshrl.u32 %v1302, 7
      %v1304 = vsub.s32 %v1301, %v1303
      %v1305 = vrot.slane %v1297, %v1304
      %v1307 = vunpack.c.l.s4 1983009808
      %v1308 = vunpack.c.0.s8 %v1307
      %v1309 = vlaneseq
      %v1310 = vshrl.u32 %v1309, 7
      %v1311 = vsub.s32 %v1308, %v1310
      %v1312 = vrot.slane %v1298, %v1311
      %v1313 = vcombine.low %v1305, %v1312
      %v1314 = vcombine.low %v586, %v594
      %v1315 = vcombine.low %v593, %v595
      %v1317 = vunpack.c.l.s4 1983009808
      %v1318 = vunpack.c.0.s8 %v1317
      %v1319 = vlaneseq
      %v1320 = vshrl.u32 %v1319, 7
      %v1321 = vsub.s32 %v1318, %v1320
      %v1322 = vrot.slane %v1314, %v1321
      %v1324 = vunpack.c.l.s4 1983009808
      %v1325 = vunpack.c.0.s8 %v1324
      %v1326 = vlaneseq
      %v1327 = vshrl.u32 %v1326, 7
      %v1328 = vsub.s32 %v1325, %v1327
      %v1329 = vrot.slane %v1315, %v1328
      %v1330 = vcombine.low %v1322, %v1329
      %v1331 = vcombine.low %v603, %v611
      %v1332 = vcombine.low %v610, %v612
      %v1334 = vunpack.c.l.s4 1983009808
      %v1335 = vunpack.c.0.s8 %v1334
      %v1336 = vlaneseq
      %v1337 = vshrl.u32 %v1336, 7
      %v1338 = vsub.s32 %v1335, %v1337
      %v1339 = vrot.slane %v1331, %v1338
      %v1341 = vunpack.c.l.s4 1983009808
      %v1342 = vunpack.c.0.s8 %v1341
      %v1343 = vlaneseq
      %v1344 = vshrl.u32 %v1343, 7
      %v1345 = vsub.s32 %v1342, %v1344
      %v1346 = vrot.slane %v1332, %v1345
      %v1347 = vcombine.low %v1339, %v1346
      %v1348 = vcombine.low %v619, %v627
      %v1349 = vcombine.low %v635, %v634
      %v1351 = vunpack.c.l.s4 1983009808
      %v1352 = vunpack.c.0.s8 %v1351
      %v1353 = vlaneseq
      %v1354 = vshrl.u32 %v1353, 7
      %v1355 = vsub.s32 %v1352, %v1354
      %v1356 = vrot.slane %v1348, %v1355
      %v1358 = vunpack.c.l.s4 1983009808
      %v1359 = vunpack.c.0.s8 %v1358
      %v1360 = vlaneseq
      %v1361 = vshrl.u32 %v1360, 7
      %v1362 = vsub.s32 %v1359, %v1361
      %v1363 = vrot.slane %v1349, %v1362
      %v1364 = vcombine.low %v1356, %v1363
      %v1365 = vcombine.low %v636, %v644
      %v1366 = vcombine.low %v652, %v651
      %v1368 = vunpack.c.l.s4 1983009808
      %v1369 = vunpack.c.0.s8 %v1368
      %v1370 = vlaneseq
      %v1371 = vshrl.u32 %v1370, 7
      %v1372 = vsub.s32 %v1369, %v1371
      %v1373 = vrot.slane %v1365, %v1372
      %v1375 = vunpack.c.l.s4 1983009808
      %v1376 = vunpack.c.0.s8 %v1375
      %v1377 = vlaneseq
      %v1378 = vshrl.u32 %v1377, 7
      %v1379 = vsub.s32 %v1376, %v1378
      %v1380 = vrot.slane %v1366, %v1379
      %v1381 = vcombine.low %v1373, %v1380
      %v1382 = vcombine.low %v653, %v660
      %v1383 = vcombine.low %v668, %v676
      %v1385 = vunpack.c.l.s4 1983009808
      %v1386 = vunpack.c.0.s8 %v1385
      %v1387 = vlaneseq
      %v1388 = vshrl.u32 %v1387, 7
      %v1389 = vsub.s32 %v1386, %v1388
      %v1390 = vrot.slane %v1382, %v1389
      %v1392 = vunpack.c.l.s4 1983009808
      %v1393 = vunpack.c.0.s8 %v1392
      %v1394 = vlaneseq
      %v1395 = vshrl.u32 %v1394, 7
      %v1396 = vsub.s32 %v1393, %v1395
      %v1397 = vrot.slane %v1383, %v1396
      %v1398 = vcombine.low %v1390, %v1397
      %v1399 = vcombine.low %v675, %v677
      %v1400 = vcombine.low %v685, %v693
      %v1402 = vunpack.c.l.s4 1983009808
      %v1403 = vunpack.c.0.s8 %v1402
      %v1404 = vlaneseq
      %v1405 = vshrl.u32 %v1404, 7
      %v1406 = vsub.s32 %v1403, %v1405
      %v1407 = vrot.slane %v1399, %v1406
      %v1409 = vunpack.c.l.s4 1983009808
      %v1410 = vunpack.c.0.s8 %v1409
      %v1411 = vlaneseq
      %v1412 = vshrl.u32 %v1411, 7
      %v1413 = vsub.s32 %v1410, %v1412
      %v1414 = vrot.slane %v1400, %v1413
      %v1415 = vcombine.low %v1407, %v1414
      %v1416 = vcombine.low %v692, %v694
      %v1417 = vcombine.low %v701, %v709
      %v1419 = vunpack.c.l.s4 1983009808
      %v1420 = vunpack.c.0.s8 %v1419
      %v1421 = vlaneseq
      %v1422 = vshrl.u32 %v1421, 7
      %v1423 = vsub.s32 %v1420, %v1422
      %v1424 = vrot.slane %v1416, %v1423
      %v1426 = vunpack.c.l.s4 1983009808
      %v1427 = vunpack.c.0.s8 %v1426
      %v1428 = vlaneseq
      %v1429 = vshrl.u32 %v1428, 7
      %v1430 = vsub.s32 %v1427, %v1429
      %v1431 = vrot.slane %v1417, %v1430
      %v1432 = vcombine.low %v1424, %v1431
      %v1433 = vcombine.low %v717, %v716
      %v1434 = vcombine.low %v718, %v726
      %v1436 = vunpack.c.l.s4 1983009808
      %v1437 = vunpack.c.0.s8 %v1436
      %v1438 = vlaneseq
      %v1439 = vshrl.u32 %v1438, 7
      %v1440 = vsub.s32 %v1437, %v1439
      %v1441 = vrot.slane %v1433, %v1440
      %v1443 = vunpack.c.l.s4 1983009808
      %v1444 = vunpack.c.0.s8 %v1443
      %v1445 = vlaneseq
      %v1446 = vshrl.u32 %v1445, 7
      %v1447 = vsub.s32 %v1444, %v1446
      %v1448 = vrot.slane %v1434, %v1447
      %v1449 = vcombine.low %v1441, %v1448
      %v1450 = vcombine.low %v734, %v733
      %v1451 = vcombine.low %v735, %v742
      %v1453 = vunpack.c.l.s4 1983009808
      %v1454 = vunpack.c.0.s8 %v1453
      %v1455 = vlaneseq
      %v1456 = vshrl.u32 %v1455, 7
      %v1457 = vsub.s32 %v1454, %v1456
      %v1458 = vrot.slane %v1450, %v1457
      %v1460 = vunpack.c.l.s4 1983009808
      %v1461 = vunpack.c.0.s8 %v1460
      %v1462 = vlaneseq
      %v1463 = vshrl.u32 %v1462, 7
      %v1464 = vsub.s32 %v1461, %v1463
      %v1465 = vrot.slane %v1451, %v1464
      %v1466 = vcombine.low %v1458, %v1465
      %v1467 = vcombine.low %v750, %v758
      %v1468 = vcombine.low %v757, %v759
      %v1470 = vunpack.c.l.s4 1983009808
      %v1471 = vunpack.c.0.s8 %v1470
      %v1472 = vlaneseq
      %v1473 = vshrl.u32 %v1472, 7
      %v1474 = vsub.s32 %v1471, %v1473
      %v1475 = vrot.slane %v1467, %v1474
      %v1477 = vunpack.c.l.s4 1983009808
      %v1478 = vunpack.c.0.s8 %v1477
      %v1479 = vlaneseq
      %v1480 = vshrl.u32 %v1479, 7
      %v1481 = vsub.s32 %v1478, %v1480
      %v1482 = vrot.slane %v1468, %v1481
      %v1483 = vcombine.low %v1475, %v1482
      %v1484 = vcombine.low %v767, %v775
      %v1485 = vcombine.low %v774, %v776
      %v1487 = vunpack.c.l.s4 1983009808
      %v1488 = vunpack.c.0.s8 %v1487
      %v1489 = vlaneseq
      %v1490 = vshrl.u32 %v1489, 7
      %v1491 = vsub.s32 %v1488, %v1490
      %v1492 = vrot.slane %v1484, %v1491
      %v1494 = vunpack.c.l.s4 1983009808
      %v1495 = vunpack.c.0.s8 %v1494
      %v1496 = vlaneseq
      %v1497 = vshrl.u32 %v1496, 7
      %v1498 = vsub.s32 %v1495, %v1497
      %v1499 = vrot.slane %v1485, %v1498
      %v1500 = vcombine.low %v1492, %v1499
      %v1501 = vcombine.low %v783, %v791
      %v1502 = vcombine.low %v799, %v798
      %v1504 = vunpack.c.l.s4 1983009808
      %v1505 = vunpack.c.0.s8 %v1504
      %v1506 = vlaneseq
      %v1507 = vshrl.u32 %v1506, 7
      %v1508 = vsub.s32 %v1505, %v1507
      %v1509 = vrot.slane %v1501, %v1508
      %v1511 = vunpack.c.l.s4 1983009808
      %v1512 = vunpack.c.0.s8 %v1511
      %v1513 = vlaneseq
      %v1514 = vshrl.u32 %v1513, 7
      %v1515 = vsub.s32 %v1512, %v1514
      %v1516 = vrot.slane %v1502, %v1515
      %v1517 = vcombine.low %v1509, %v1516
      %v1518 = vcombine.low %v800, %v808
      %v1519 = vcombine.low %v816, %v815
      %v1521 = vunpack.c.l.s4 1983009808
      %v1522 = vunpack.c.0.s8 %v1521
      %v1523 = vlaneseq
      %v1524 = vshrl.u32 %v1523, 7
      %v1525 = vsub.s32 %v1522, %v1524
      %v1526 = vrot.slane %v1518, %v1525
      %v1528 = vunpack.c.l.s4 1983009808
      %v1529 = vunpack.c.0.s8 %v1528
      %v1530 = vlaneseq
      %v1531 = vshrl.u32 %v1530, 7
      %v1532 = vsub.s32 %v1529, %v1531
      %v1533 = vrot.slane %v1519, %v1532
      %v1534 = vcombine.low %v1526, %v1533
      %v1535 = vcombine.low %v817, %v824
      %v1536 = vcombine.low %v832, %v840
      %v1538 = vunpack.c.l.s4 1983009808
      %v1539 = vunpack.c.0.s8 %v1538
      %v1540 = vlaneseq
      %v1541 = vshrl.u32 %v1540, 7
      %v1542 = vsub.s32 %v1539, %v1541
      %v1543 = vrot.slane %v1535, %v1542
      %v1545 = vunpack.c.l.s4 1983009808
      %v1546 = vunpack.c.0.s8 %v1545
      %v1547 = vlaneseq
      %v1548 = vshrl.u32 %v1547, 7
      %v1549 = vsub.s32 %v1546, %v1548
      %v1550 = vrot.slane %v1536, %v1549
      %v1551 = vcombine.low %v1543, %v1550
      %v1552 = vcombine.low %v839, %v841
      %v1553 = vcombine.low %v849, %v857
      %v1555 = vunpack.c.l.s4 1983009808
      %v1556 = vunpack.c.0.s8 %v1555
      %v1557 = vlaneseq
      %v1558 = vshrl.u32 %v1557, 7
      %v1559 = vsub.s32 %v1556, %v1558
      %v1560 = vrot.slane %v1552, %v1559
      %v1562 = vunpack.c.l.s4 1983009808
      %v1563 = vunpack.c.0.s8 %v1562
      %v1564 = vlaneseq
      %v1565 = vshrl.u32 %v1564, 7
      %v1566 = vsub.s32 %v1563, %v1565
      %v1567 = vrot.slane %v1553, %v1566
      %v1568 = vcombine.low %v1560, %v1567
      %v1569 = vcombine.low %v856, %v858
      %v1570 = vcombine.low %v865, %v873
      %v1572 = vunpack.c.l.s4 1983009808
      %v1573 = vunpack.c.0.s8 %v1572
      %v1574 = vlaneseq
      %v1575 = vshrl.u32 %v1574, 7
      %v1576 = vsub.s32 %v1573, %v1575
      %v1577 = vrot.slane %v1569, %v1576
      %v1579 = vunpack.c.l.s4 1983009808
      %v1580 = vunpack.c.0.s8 %v1579
      %v1581 = vlaneseq
      %v1582 = vshrl.u32 %v1581, 7
      %v1583 = vsub.s32 %v1580, %v1582
      %v1584 = vrot.slane %v1570, %v1583
      %v1585 = vcombine.low %v1577, %v1584
      %v1586 = vcombine.low %v881, %v880
      %v1587 = vcombine.low %v882, %v890
      %v1589 = vunpack.c.l.s4 1983009808
      %v1590 = vunpack.c.0.s8 %v1589
      %v1591 = vlaneseq
      %v1592 = vshrl.u32 %v1591, 7
      %v1593 = vsub.s32 %v1590, %v1592
      %v1594 = vrot.slane %v1586, %v1593
      %v1596 = vunpack.c.l.s4 1983009808
      %v1597 = vunpack.c.0.s8 %v1596
      %v1598 = vlaneseq
      %v1599 = vshrl.u32 %v1598, 7
      %v1600 = vsub.s32 %v1597, %v1599
      %v1601 = vrot.slane %v1587, %v1600
      %v1602 = vcombine.low %v1594, %v1601
      %v1603 = vcombine.low %v898, %v897
      %v1604 = vcombine.low %v899, %v906
      %v1606 = vunpack.c.l.s4 1983009808
      %v1607 = vunpack.c.0.s8 %v1606
      %v1608 = vlaneseq
      %v1609 = vshrl.u32 %v1608, 7
      %v1610 = vsub.s32 %v1607, %v1609
      %v1611 = vrot.slane %v1603, %v1610
      %v1613 = vunpack.c.l.s4 1983009808
      %v1614 = vunpack.c.0.s8 %v1613
      %v1615 = vlaneseq
      %v1616 = vshrl.u32 %v1615, 7
      %v1617 = vsub.s32 %v1614, %v1616
      %v1618 = vrot.slane %v1604, %v1617
      %v1619 = vcombine.low %v1611, %v1618
      %v1620 = vcombine.low %v914, %v922
      %v1621 = vcombine.low %v921, %v923
      %v1623 = vunpack.c.l.s4 1983009808
      %v1624 = vunpack.c.0.s8 %v1623
      %v1625 = vlaneseq
      %v1626 = vshrl.u32 %v1625, 7
      %v1627 = vsub.s32 %v1624, %v1626
      %v1628 = vrot.slane %v1620, %v1627
      %v1630 = vunpack.c.l.s4 1983009808
      %v1631 = vunpack.c.0.s8 %v1630
      %v1632 = vlaneseq
      %v1633 = vshrl.u32 %v1632, 7
      %v1634 = vsub.s32 %v1631, %v1633
      %v1635 = vrot.slane %v1621, %v1634
      %v1636 = vcombine.low %v1628, %v1635
      %v1637 = vcombine.low %v931, %v939
      %v1638 = vcombine.low %v938, %v940
      %v1640 = vunpack.c.l.s4 1983009808
      %v1641 = vunpack.c.0.s8 %v1640
      %v1642 = vlaneseq
      %v1643 = vshrl.u32 %v1642, 7
      %v1644 = vsub.s32 %v1641, %v1643
      %v1645 = vrot.slane %v1637, %v1644
      %v1647 = vunpack.c.l.s4 1983009808
      %v1648 = vunpack.c.0.s8 %v1647
      %v1649 = vlaneseq
      %v1650 = vshrl.u32 %v1649, 7
      %v1651 = vsub.s32 %v1648, %v1650
      %v1652 = vrot.slane %v1638, %v1651
      %v1653 = vcombine.low %v1645, %v1652
      %v1654 = vcombine.low %v947, %v955
      %v1655 = vcombine.low %v963, %v962
      %v1657 = vunpack.c.l.s4 1983009808
      %v1658 = vunpack.c.0.s8 %v1657
      %v1659 = vlaneseq
      %v1660 = vshrl.u32 %v1659, 7
      %v1661 = vsub.s32 %v1658, %v1660
      %v1662 = vrot.slane %v1654, %v1661
      %v1664 = vunpack.c.l.s4 1983009808
      %v1665 = vunpack.c.0.s8 %v1664
      %v1666 = vlaneseq
      %v1667 = vshrl.u32 %v1666, 7
      %v1668 = vsub.s32 %v1665, %v1667
      %v1669 = vrot.slane %v1655, %v1668
      %v1670 = vcombine.low %v1662, %v1669
      %v1671 = vcombine.low %v964, %v972
      %v1672 = vcombine.low %v980, %v979
      %v1674 = vunpack.c.l.s4 1983009808
      %v1675 = vunpack.c.0.s8 %v1674
      %v1676 = vlaneseq
      %v1677 = vshrl.u32 %v1676, 7
      %v1678 = vsub.s32 %v1675, %v1677
      %v1679 = vrot.slane %v1671, %v1678
      %v1681 = vunpack.c.l.s4 1983009808
      %v1682 = vunpack.c.0.s8 %v1681
      %v1683 = vlaneseq
      %v1684 = vshrl.u32 %v1683, 7
      %v1685 = vsub.s32 %v1682, %v1684
      %v1686 = vrot.slane %v1672, %v1685
      %v1687 = vcombine.low %v1679, %v1686
      %v1688 = vcombine.low %v981, %v988
      %v1689 = vcombine.low %v996, %v1004
      %v1691 = vunpack.c.l.s4 1983009808
      %v1692 = vunpack.c.0.s8 %v1691
      %v1693 = vlaneseq
      %v1694 = vshrl.u32 %v1693, 7
      %v1695 = vsub.s32 %v1692, %v1694
      %v1696 = vrot.slane %v1688, %v1695
      %v1698 = vunpack.c.l.s4 1983009808
      %v1699 = vunpack.c.0.s8 %v1698
      %v1700 = vlaneseq
      %v1701 = vshrl.u32 %v1700, 7
      %v1702 = vsub.s32 %v1699, %v1701
      %v1703 = vrot.slane %v1689, %v1702
      %v1704 = vcombine.low %v1696, %v1703
      %v1705 = vcombine.low %v1003, %v1005
      %v1706 = vcombine.low %v1013, %v1021
      %v1708 = vunpack.c.l.s4 1983009808
      %v1709 = vunpack.c.0.s8 %v1708
      %v1710 = vlaneseq
      %v1711 = vshrl.u32 %v1710, 7
      %v1712 = vsub.s32 %v1709, %v1711
      %v1713 = vrot.slane %v1705, %v1712
      %v1715 = vunpack.c.l.s4 1983009808
      %v1716 = vunpack.c.0.s8 %v1715
      %v1717 = vlaneseq
      %v1718 = vshrl.u32 %v1717, 7
      %v1719 = vsub.s32 %v1716, %v1718
      %v1720 = vrot.slane %v1706, %v1719
      %v1721 = vcombine.low %v1713, %v1720
      %v1722 = vcombine.low %v1020, %v1022
      %v1723 = vcombine.low %v1029, %v1037
      %v1725 = vunpack.c.l.s4 1983009808
      %v1726 = vunpack.c.0.s8 %v1725
      %v1727 = vlaneseq
      %v1728 = vshrl.u32 %v1727, 7
      %v1729 = vsub.s32 %v1726, %v1728
      %v1730 = vrot.slane %v1722, %v1729
      %v1732 = vunpack.c.l.s4 1983009808
      %v1733 = vunpack.c.0.s8 %v1732
      %v1734 = vlaneseq
      %v1735 = vshrl.u32 %v1734, 7
      %v1736 = vsub.s32 %v1733, %v1735
      %v1737 = vrot.slane %v1723, %v1736
      %v1738 = vcombine.low %v1730, %v1737
      %v1739 = vcombine.low %v1045, %v1044
      %v1740 = vcombine.low %v1046, %v1054
      %v1742 = vunpack.c.l.s4 1983009808
      %v1743 = vunpack.c.0.s8 %v1742
      %v1744 = vlaneseq
      %v1745 = vshrl.u32 %v1744, 7
      %v1746 = vsub.s32 %v1743, %v1745
      %v1747 = vrot.slane %v1739, %v1746
      %v1749 = vunpack.c.l.s4 1983009808
      %v1750 = vunpack.c.0.s8 %v1749
      %v1751 = vlaneseq
      %v1752 = vshrl.u32 %v1751, 7
      %v1753 = vsub.s32 %v1750, %v1752
      %v1754 = vrot.slane %v1740, %v1753
      %v1755 = vcombine.low %v1747, %v1754
      %v1756 = vcombine.low %v1062, %v1061
      %v1757 = vcombine.low %v1063, %v1070
      %v1759 = vunpack.c.l.s4 1983009808
      %v1760 = vunpack.c.0.s8 %v1759
      %v1761 = vlaneseq
      %v1762 = vshrl.u32 %v1761, 7
      %v1763 = vsub.s32 %v1760, %v1762
      %v1764 = vrot.slane %v1756, %v1763
      %v1766 = vunpack.c.l.s4 1983009808
      %v1767 = vunpack.c.0.s8 %v1766
      %v1768 = vlaneseq
      %v1769 = vshrl.u32 %v1768, 7
      %v1770 = vsub.s32 %v1767, %v1769
      %v1771 = vrot.slane %v1757, %v1770
      %v1772 = vcombine.low %v1764, %v1771
      %v1773 = vcombine.low %v1078, %v1086
      %v1774 = vcombine.low %v1085, %v1087
      %v1776 = vunpack.c.l.s4 1983009808
      %v1777 = vunpack.c.0.s8 %v1776
      %v1778 = vlaneseq
      %v1779 = vshrl.u32 %v1778, 7
      %v1780 = vsub.s32 %v1777, %v1779
      %v1781 = vrot.slane %v1773, %v1780
      %v1783 = vunpack.c.l.s4 1983009808
      %v1784 = vunpack.c.0.s8 %v1783
      %v1785 = vlaneseq
      %v1786 = vshrl.u32 %v1785, 7
      %v1787 = vsub.s32 %v1784, %v1786
      %v1788 = vrot.slane %v1774, %v1787
      %v1789 = vcombine.low %v1781, %v1788
      %v1790 = vcombine.low %v1095, %v1103
      %v1791 = vcombine.low %v1102, %v1104
      %v1793 = vunpack.c.l.s4 1983009808
      %v1794 = vunpack.c.0.s8 %v1793
      %v1795 = vlaneseq
      %v1796 = vshrl.u32 %v1795, 7
      %v1797 = vsub.s32 %v1794, %v1796
      %v1798 = vrot.slane %v1790, %v1797
      %v1800 = vunpack.c.l.s4 1983009808
      %v1801 = vunpack.c.0.s8 %v1800
      %v1802 = vlaneseq
      %v1803 = vshrl.u32 %v1802, 7
      %v1804 = vsub.s32 %v1801, %v1803
      %v1805 = vrot.slane %v1791, %v1804
      %v1806 = vcombine.low %v1798, %v1805
      %v1807 = vcombine.low %v1111, %v1119
      %v1808 = vcombine.low %v1127, %v1126
      %v1810 = vunpack.c.l.s4 1983009808
      %v1811 = vunpack.c.0.s8 %v1810
      %v1812 = vlaneseq
      %v1813 = vshrl.u32 %v1812, 7
      %v1814 = vsub.s32 %v1811, %v1813
      %v1815 = vrot.slane %v1807, %v1814
      %v1817 = vunpack.c.l.s4 1983009808
      %v1818 = vunpack.c.0.s8 %v1817
      %v1819 = vlaneseq
      %v1820 = vshrl.u32 %v1819, 7
      %v1821 = vsub.s32 %v1818, %v1820
      %v1822 = vrot.slane %v1808, %v1821
      %v1823 = vcombine.low %v1815, %v1822
      %v1824 = vcombine.low %v1128, %v1136
      %v1825 = vcombine.low %v1144, %v1143
      %v1827 = vunpack.c.l.s4 1983009808
      %v1828 = vunpack.c.0.s8 %v1827
      %v1829 = vlaneseq
      %v1830 = vshrl.u32 %v1829, 7
      %v1831 = vsub.s32 %v1828, %v1830
      %v1832 = vrot.slane %v1824, %v1831
      %v1834 = vunpack.c.l.s4 1983009808
      %v1835 = vunpack.c.0.s8 %v1834
      %v1836 = vlaneseq
      %v1837 = vshrl.u32 %v1836, 7
      %v1838 = vsub.s32 %v1835, %v1837
      %v1839 = vrot.slane %v1825, %v1838
      %v1840 = vcombine.low %v1832, %v1839
      %v1841 = vcombine.low %v1145, %v1152
      %v1843 = vunpack.c.l.s4 1983009808
      %v1844 = vunpack.c.0.s8 %v1843
      %v1845 = vlaneseq
      %v1846 = vshrl.u32 %v1845, 7
      %v1847 = vsub.s32 %v1844, %v1846
      %v1848 = vrot.slane %v1841, %v1847
      %vm1849 = vcmask 64512
      %v1850 = vsel %vm1849, %v1177, 0
      %v1852 = vsel %vm1849, %v1194, 0
      %v1854 = vsel %vm1849, %v1211, 0
      %v1856 = vsel %vm1849, %v1228, 0
      %v1858 = vsel %vm1849, %v1245, 0
      %v1860 = vsel %vm1849, %v1262, 0
      %v1862 = vsel %vm1849, %v1279, 0
      %v1864 = vsel %vm1849, %v1296, 0
      %v1866 = vsel %vm1849, %v1313, 0
      %v1868 = vsel %vm1849, %v1330, 0
      %v1870 = vsel %vm1849, %v1347, 0
      %v1872 = vsel %vm1849, %v1364, 0
      %v1874 = vsel %vm1849, %v1381, 0
      %v1876 = vsel %vm1849, %v1398, 0
      %v1878 = vsel %vm1849, %v1415, 0
      %v1880 = vsel %vm1849, %v1432, 0
      %v1882 = vsel %vm1849, %v1449, 0
      %v1884 = vsel %vm1849, %v1466, 0
      %v1886 = vsel %vm1849, %v1483, 0
      %v1888 = vsel %vm1849, %v1500, 0
      %v1890 = vsel %vm1849, %v1517, 0
      %v1892 = vsel %vm1849, %v1534, 0
      %v1894 = vsel %vm1849, %v1551, 0
      %v1896 = vsel %vm1849, %v1568, 0
      %v1898 = vsel %vm1849, %v1585, 0
      %v1900 = vsel %vm1849, %v1602, 0
      %v1902 = vsel %vm1849, %v1619, 0
      %v1904 = vsel %vm1849, %v1636, 0
      %v1906 = vsel %vm1849, %v1653, 0
      %v1908 = vsel %vm1849, %v1670, 0
      %v1910 = vsel %vm1849, %v1687, 0
      %v1912 = vsel %vm1849, %v1704, 0
      %v1914 = vsel %vm1849, %v1721, 0
      %v1916 = vsel %vm1849, %v1738, 0
      %v1918 = vsel %vm1849, %v1755, 0
      %v1920 = vsel %vm1849, %v1772, 0
      %v1922 = vsel %vm1849, %v1789, 0
      %v1924 = vsel %vm1849, %v1806, 0
      %v1926 = vsel %vm1849, %v1823, 0
      %v1928 = vsel %vm1849, %v1840, 0
      %v1930 = vsel %vm1849, %v1848, 0
      %1932 = vmatprep.subr.mxu0 0.0
      %1933 = vmatpush1.msra.mxu0 0.0
      %1934 = vmatprep.subr.mxu0 0.0
      %1935 = vmatpush1.msra.mxu0 0.0
      %1936 = vmatprep.subr.mxu0 0.0
      %1937 = vmatpush1.msra.mxu0 0.0
      %1938 = vmatprep.subr.mxu0 0.0
      %1939 = vmatpush1.msra.mxu0 0.0
      %1940 = vmatprep.subr.mxu0 0.0
      %1941 = vmatpush1.msra.mxu0 0.0
      %1942 = vmatprep.subr.mxu0 0.0
      %1943 = vmatpush1.msra.mxu0 0.0
      %1944 = vmatprep.subr.mxu0 0.0
      %1945 = vmatpush1.msra.mxu0 0.0
      %1946 = vmatprep.subr.mxu0 0.0
      %1947 = vmatpush1.msra.mxu0 0.0
      %1948 = vmatprep.subr.mxu0 0.0
      %1949 = vmatpush1.msra.mxu0 0.0
      %1950 = vmatprep.subr.mxu0 0.0
      %1951 = vmatpush1.msra.mxu0 0.0
      %1952 = vmatprep.subr.mxu0 0.0
      %1953 = vmatpush1.msra.mxu0 0.0
      %1954 = vmatprep.subr.mxu0 0.0
      %1955 = vmatpush1.msra.mxu0 0.0
      %1956 = vmatprep.subr.mxu0 0.0
      %1957 = vmatpush1.msra.mxu0 0.0
      %1958 = vmatprep.subr.mxu0 0.0
      %1959 = vmatpush1.msra.mxu0 0.0
      %1960 = vmatprep.subr.mxu0 0.0
      %1961 = vmatpush1.msra.mxu0 0.0
      %1962 = vmatprep.subr.mxu0 0.0
      %1963 = vmatpush1.msra.mxu0 %v1153
      %1964 = vmatprep.subr.mxu0 0.0
      %1965 = vmatpush2.msra.mxu0 0.0
      %1966 = vmatprep.subr.mxu0 0.0
      %1967 = vmatpush2.msra.mxu0 0.0
      %1968 = vmatprep.subr.mxu0 0.0
      %1969 = vmatpush2.msra.mxu0 0.0
      %1970 = vmatprep.subr.mxu0 0.0
      %1971 = vmatpush2.msra.mxu0 0.0
      %1972 = vmatprep.subr.mxu0 0.0
      %1973 = vmatpush2.msra.mxu0 0.0
      %1974 = vmatprep.subr.mxu0 0.0
      %1975 = vmatpush2.msra.mxu0 0.0
      %1976 = vmatprep.subr.mxu0 0.0
      %1977 = vmatpush2.msra.mxu0 0.0
      %1978 = vmatprep.subr.mxu0 0.0
      %1979 = vmatpush2.msra.mxu0 0.0
      %1980 = vmatprep.subr.mxu0 0.0
      %1981 = vmatpush2.msra.mxu0 0.0
      %1982 = vmatprep.subr.mxu0 0.0
      %1983 = vmatpush2.msra.mxu0 0.0
      %1984 = vmatprep.subr.mxu0 0.0
      %1985 = vmatpush2.msra.mxu0 0.0
      %1986 = vmatprep.subr.mxu0 0.0
      %1987 = vmatpush2.msra.mxu0 0.0
      %1988 = vmatprep.subr.mxu0 0.0
      %1989 = vmatpush2.msra.mxu0 0.0
      %1990 = vmatprep.subr.mxu0 0.0
      %1991 = vmatpush2.msra.mxu0 0.0
      %1992 = vmatprep.subr.mxu0 0.0
      %1993 = vmatpush2.msra.mxu0 0.0
      %1994 = vmatprep.subr.mxu0 0.0
      %1995 = vmatpush2.msra.mxu0 0.0
      %1996 = vmatprep.mubr.f32.mxu0 0.0
      %1997 = vmatmul.mubr.f32.gmra.mxu0 %v1850
      %v1998 = vpop.f32.mrf.mxu0
      %v1999 = vadd.f32 %v1159, %v1998
      %v2000 = vpop.f32.mrf.mxu0
      %2001 = vmatprep.mubr.f32.mxu0 0.0
      %2002 = vmatmul.mubr.f32.gmra.mxu0 %v1852
      %v2003 = vpop.f32.mrf.mxu0
      %v2004 = vadd.f32 %v1159, %v2003
      %v2005 = vpop.f32.mrf.mxu0
      %2006 = vmatprep.mubr.f32.mxu0 0.0
      %2007 = vmatmul.mubr.f32.gmra.mxu0 %v1854
      %v2008 = vpop.f32.mrf.mxu0
      %v2009 = vadd.f32 %v1159, %v2008
      %v2010 = vpop.f32.mrf.mxu0
      %2011 = vmatprep.mubr.f32.mxu0 0.0
      %2012 = vmatmul.mubr.f32.gmra.mxu0 %v1856
      %v2013 = vpop.f32.mrf.mxu0
      %v2014 = vadd.f32 %v1159, %v2013
      %v2015 = vpop.f32.mrf.mxu0
      %2016 = vmatprep.mubr.f32.mxu0 0.0
      %2017 = vmatmul.mubr.f32.gmra.mxu0 %v1858
      %v2018 = vpop.f32.mrf.mxu0
      %v2019 = vadd.f32 %v1159, %v2018
      %v2020 = vpop.f32.mrf.mxu0
      %2021 = vmatprep.mubr.f32.mxu0 0.0
      %2022 = vmatmul.mubr.f32.gmra.mxu0 %v1860
      %v2023 = vpop.f32.mrf.mxu0
      %v2024 = vadd.f32 %v1159, %v2023
      %v2025 = vpop.f32.mrf.mxu0
      %2026 = vmatprep.mubr.f32.mxu0 0.0
      %2027 = vmatmul.mubr.f32.gmra.mxu0 %v1862
      %v2028 = vpop.f32.mrf.mxu0
      %v2029 = vadd.f32 %v1159, %v2028
      %v2030 = vpop.f32.mrf.mxu0
      %2031 = vmatprep.mubr.f32.mxu0 0.0
      %2032 = vmatmul.mubr.f32.gmra.mxu0 %v1864
      %v2033 = vpop.f32.mrf.mxu0
      %v2034 = vadd.f32 %v1159, %v2033
      %v2035 = vpop.f32.mrf.mxu0
      %2036 = vmatprep.mubr.f32.mxu0 0.0
      %2037 = vmatmul.mubr.f32.gmra.mxu0 %v1866
      %v2038 = vpop.f32.mrf.mxu0
      %v2039 = vadd.f32 %v1159, %v2038
      %v2040 = vpop.f32.mrf.mxu0
      %2041 = vmatprep.mubr.f32.mxu0 0.0
      %2042 = vmatmul.mubr.f32.gmra.mxu0 %v1868
      %v2043 = vpop.f32.mrf.mxu0
      %v2044 = vadd.f32 %v1159, %v2043
      %v2045 = vpop.f32.mrf.mxu0
      %2046 = vmatprep.mubr.f32.mxu0 0.0
      %2047 = vmatmul.mubr.f32.gmra.mxu0 %v1870
      %v2048 = vpop.f32.mrf.mxu0
      %v2049 = vadd.f32 %v1159, %v2048
      %v2050 = vpop.f32.mrf.mxu0
      %2051 = vmatprep.mubr.f32.mxu0 0.0
      %2052 = vmatmul.mubr.f32.gmra.mxu0 %v1872
      %v2053 = vpop.f32.mrf.mxu0
      %v2054 = vadd.f32 %v1159, %v2053
      %v2055 = vpop.f32.mrf.mxu0
      %2056 = vmatprep.mubr.f32.mxu0 0.0
      %2057 = vmatmul.mubr.f32.gmra.mxu0 %v1874
      %v2058 = vpop.f32.mrf.mxu0
      %v2059 = vadd.f32 %v1159, %v2058
      %v2060 = vpop.f32.mrf.mxu0
      %2061 = vmatprep.mubr.f32.mxu0 0.0
      %2062 = vmatmul.mubr.f32.gmra.mxu0 %v1876
      %v2063 = vpop.f32.mrf.mxu0
      %v2064 = vadd.f32 %v1159, %v2063
      %v2065 = vpop.f32.mrf.mxu0
      %2066 = vmatprep.mubr.f32.mxu0 0.0
      %2067 = vmatmul.mubr.f32.gmra.mxu0 %v1878
      %v2068 = vpop.f32.mrf.mxu0
      %v2069 = vadd.f32 %v1159, %v2068
      %v2070 = vpop.f32.mrf.mxu0
      %2071 = vmatprep.mubr.f32.mxu0 0.0
      %2072 = vmatmul.mubr.f32.gmra.mxu0 %v1880
      %v2073 = vpop.f32.mrf.mxu0
      %v2074 = vadd.f32 %v1159, %v2073
      %v2075 = vpop.f32.mrf.mxu0
      %2076 = vmatprep.mubr.f32.mxu0 0.0
      %2077 = vmatmul.mubr.f32.gmra.mxu0 %v1882
      %v2078 = vpop.f32.mrf.mxu0
      %v2079 = vadd.f32 %v1159, %v2078
      %v2080 = vpop.f32.mrf.mxu0
      %2081 = vmatprep.mubr.f32.mxu0 0.0
      %2082 = vmatmul.mubr.f32.gmra.mxu0 %v1884
      %v2083 = vpop.f32.mrf.mxu0
      %v2084 = vadd.f32 %v1159, %v2083
      %v2085 = vpop.f32.mrf.mxu0
      %2086 = vmatprep.mubr.f32.mxu0 0.0
      %2087 = vmatmul.mubr.f32.gmra.mxu0 %v1886
      %v2088 = vpop.f32.mrf.mxu0
      %v2089 = vadd.f32 %v1159, %v2088
      %v2090 = vpop.f32.mrf.mxu0
      %2091 = vmatprep.mubr.f32.mxu0 0.0
      %2092 = vmatmul.mubr.f32.gmra.mxu0 %v1888
      %v2093 = vpop.f32.mrf.mxu0
      %v2094 = vadd.f32 %v1159, %v2093
      %v2095 = vpop.f32.mrf.mxu0
      %2096 = vmatprep.mubr.f32.mxu0 0.0
      %2097 = vmatmul.mubr.f32.gmra.mxu0 %v1890
      %v2098 = vpop.f32.mrf.mxu0
      %v2099 = vadd.f32 %v1159, %v2098
      %v2100 = vpop.f32.mrf.mxu0
      %2101 = vmatprep.mubr.f32.mxu0 0.0
      %2102 = vmatmul.mubr.f32.gmra.mxu0 %v1892
      %v2103 = vpop.f32.mrf.mxu0
      %v2104 = vadd.f32 %v1159, %v2103
      %v2105 = vpop.f32.mrf.mxu0
      %2106 = vmatprep.mubr.f32.mxu0 0.0
      %2107 = vmatmul.mubr.f32.gmra.mxu0 %v1894
      %v2108 = vpop.f32.mrf.mxu0
      %v2109 = vadd.f32 %v1159, %v2108
      %v2110 = vpop.f32.mrf.mxu0
      %2111 = vmatprep.mubr.f32.mxu0 0.0
      %2112 = vmatmul.mubr.f32.gmra.mxu0 %v1896
      %v2113 = vpop.f32.mrf.mxu0
      %v2114 = vadd.f32 %v1159, %v2113
      %v2115 = vpop.f32.mrf.mxu0
      %2116 = vmatprep.mubr.f32.mxu0 0.0
      %2117 = vmatmul.mubr.f32.gmra.mxu0 %v1898
      %v2118 = vpop.f32.mrf.mxu0
      %v2119 = vadd.f32 %v1159, %v2118
      %v2120 = vpop.f32.mrf.mxu0
      %2121 = vmatprep.mubr.f32.mxu0 0.0
      %2122 = vmatmul.mubr.f32.gmra.mxu0 %v1900
      %v2123 = vpop.f32.mrf.mxu0
      %v2124 = vadd.f32 %v1159, %v2123
      %v2125 = vpop.f32.mrf.mxu0
      %2126 = vmatprep.mubr.f32.mxu0 0.0
      %2127 = vmatmul.mubr.f32.gmra.mxu0 %v1902
      %v2128 = vpop.f32.mrf.mxu0
      %v2129 = vadd.f32 %v1159, %v2128
      %v2130 = vpop.f32.mrf.mxu0
      %2131 = vmatprep.mubr.f32.mxu0 0.0
      %2132 = vmatmul.mubr.f32.gmra.mxu0 %v1904
      %v2133 = vpop.f32.mrf.mxu0
      %v2134 = vadd.f32 %v1159, %v2133
      %v2135 = vpop.f32.mrf.mxu0
      %2136 = vmatprep.mubr.f32.mxu0 0.0
      %2137 = vmatmul.mubr.f32.gmra.mxu0 %v1906
      %v2138 = vpop.f32.mrf.mxu0
      %v2139 = vadd.f32 %v1159, %v2138
      %v2140 = vpop.f32.mrf.mxu0
      %2141 = vmatprep.mubr.f32.mxu0 0.0
      %2142 = vmatmul.mubr.f32.gmra.mxu0 %v1908
      %v2143 = vpop.f32.mrf.mxu0
      %v2144 = vadd.f32 %v1159, %v2143
      %v2145 = vpop.f32.mrf.mxu0
      %2146 = vmatprep.mubr.f32.mxu0 0.0
      %2147 = vmatmul.mubr.f32.gmra.mxu0 %v1910
      %v2148 = vpop.f32.mrf.mxu0
      %v2149 = vadd.f32 %v1159, %v2148
      %v2150 = vpop.f32.mrf.mxu0
      %2151 = vmatprep.mubr.f32.mxu0 0.0
      %2152 = vmatmul.mubr.f32.gmra.mxu0 %v1912
      %v2153 = vpop.f32.mrf.mxu0
      %v2154 = vadd.f32 %v1159, %v2153
      %v2155 = vpop.f32.mrf.mxu0
      %2156 = vmatprep.mubr.f32.mxu0 0.0
      %2157 = vmatmul.mubr.f32.gmra.mxu0 %v1914
      %v2158 = vpop.f32.mrf.mxu0
      %v2159 = vadd.f32 %v1159, %v2158
      %v2160 = vpop.f32.mrf.mxu0
      %2161 = vmatprep.mubr.f32.mxu0 0.0
      %2162 = vmatmul.mubr.f32.gmra.mxu0 %v1916
      %v2163 = vpop.f32.mrf.mxu0
      %v2164 = vadd.f32 %v1159, %v2163
      %v2165 = vpop.f32.mrf.mxu0
      %2166 = vmatprep.mubr.f32.mxu0 0.0
      %2167 = vmatmul.mubr.f32.gmra.mxu0 %v1918
      %v2168 = vpop.f32.mrf.mxu0
      %v2169 = vadd.f32 %v1159, %v2168
      %v2170 = vpop.f32.mrf.mxu0
      %2171 = vmatprep.mubr.f32.mxu0 0.0
      %2172 = vmatmul.mubr.f32.gmra.mxu0 %v1920
      %v2173 = vpop.f32.mrf.mxu0
      %v2174 = vadd.f32 %v1159, %v2173
      %v2175 = vpop.f32.mrf.mxu0
      %2176 = vmatprep.mubr.f32.mxu0 0.0
      %2177 = vmatmul.mubr.f32.gmra.mxu0 %v1922
      %v2178 = vpop.f32.mrf.mxu0
      %v2179 = vadd.f32 %v1159, %v2178
      %v2180 = vpop.f32.mrf.mxu0
      %2181 = vmatprep.mubr.f32.mxu0 0.0
      %2182 = vmatmul.mubr.f32.gmra.mxu0 %v1924
      %v2183 = vpop.f32.mrf.mxu0
      %v2184 = vadd.f32 %v1159, %v2183
      %v2185 = vpop.f32.mrf.mxu0
      %2186 = vmatprep.mubr.f32.mxu0 0.0
      %2187 = vmatmul.mubr.f32.gmra.mxu0 %v1926
      %v2188 = vpop.f32.mrf.mxu0
      %v2189 = vadd.f32 %v1159, %v2188
      %v2190 = vpop.f32.mrf.mxu0
      %2191 = vmatprep.mubr.f32.mxu0 0.0
      %2192 = vmatmul.mubr.f32.gmra.mxu0 %v1928
      %v2193 = vpop.f32.mrf.mxu0
      %v2194 = vadd.f32 %v1159, %v2193
      %v2195 = vpop.f32.mrf.mxu0
      %2196 = vmatprep.mubr.f32.mxu0 0.0
      %2197 = vmatmul.mubr.f32.gmra.mxu0 %v1930
      %v2198 = vpop.f32.mrf.mxu0
      %v2199 = vadd.f32 %v1159, %v2198
      %v2200 = vpop.f32.mrf.mxu0
      %2201 = vdwg.mxu0
      %v2202 = vmax.f32 %v1999, 0.0
      %v2203 = vmax.f32 %v2004, 0.0
      %v2204 = vmax.f32 %v2009, 0.0
      %v2205 = vmax.f32 %v2014, 0.0
      %v2206 = vmax.f32 %v2019, 0.0
      %v2207 = vmax.f32 %v2024, 0.0
      %v2208 = vmax.f32 %v2029, 0.0
      %v2209 = vmax.f32 %v2034, 0.0
      %v2210 = vmax.f32 %v2039, 0.0
      %v2211 = vmax.f32 %v2044, 0.0
      %v2212 = vmax.f32 %v2049, 0.0
      %v2213 = vmax.f32 %v2054, 0.0
      %v2214 = vmax.f32 %v2059, 0.0
      %v2215 = vmax.f32 %v2064, 0.0
      %v2216 = vmax.f32 %v2069, 0.0
      %v2217 = vmax.f32 %v2074, 0.0
      %v2218 = vmax.f32 %v2079, 0.0
      %v2219 = vmax.f32 %v2084, 0.0
      %v2220 = vmax.f32 %v2089, 0.0
      %v2221 = vmax.f32 %v2094, 0.0
      %v2222 = vmax.f32 %v2099, 0.0
      %v2223 = vmax.f32 %v2104, 0.0
      %v2224 = vmax.f32 %v2109, 0.0
      %v2225 = vmax.f32 %v2114, 0.0
      %v2226 = vmax.f32 %v2119, 0.0
      %v2227 = vmax.f32 %v2124, 0.0
      %v2228 = vmax.f32 %v2129, 0.0
      %v2229 = vmax.f32 %v2134, 0.0
      %v2230 = vmax.f32 %v2139, 0.0
      %v2231 = vmax.f32 %v2144, 0.0
      %v2232 = vmax.f32 %v2149, 0.0
      %v2233 = vmax.f32 %v2154, 0.0
      %v2234 = vmax.f32 %v2159, 0.0
      %v2235 = vmax.f32 %v2164, 0.0
      %v2236 = vmax.f32 %v2169, 0.0
      %v2237 = vmax.f32 %v2174, 0.0
      %v2238 = vmax.f32 %v2179, 0.0
      %v2239 = vmax.f32 %v2184, 0.0
      %v2240 = vmax.f32 %v2189, 0.0
      %v2241 = vmax.f32 %v2194, 0.0
      %v2242 = vmax.f32 %v2199, 0.0
      %v2243 = vmin.f32 %v2202, 6.0
      %v2244 = vmin.f32 %v2203, 6.0
      %v2245 = vmin.f32 %v2204, 6.0
      %v2246 = vmin.f32 %v2205, 6.0
      %v2247 = vmin.f32 %v2206, 6.0
      %v2248 = vmin.f32 %v2207, 6.0
      %v2249 = vmin.f32 %v2208, 6.0
      %v2250 = vmin.f32 %v2209, 6.0
      %v2251 = vmin.f32 %v2210, 6.0
      %v2252 = vmin.f32 %v2211, 6.0
      %v2253 = vmin.f32 %v2212, 6.0
      %v2254 = vmin.f32 %v2213, 6.0
      %v2255 = vmin.f32 %v2214, 6.0
      %v2256 = vmin.f32 %v2215, 6.0
      %v2257 = vmin.f32 %v2216, 6.0
      %v2258 = vmin.f32 %v2217, 6.0
      %v2259 = vmin.f32 %v2218, 6.0
      %v2260 = vmin.f32 %v2219, 6.0
      %v2261 = vmin.f32 %v2220, 6.0
      %v2262 = vmin.f32 %v2221, 6.0
      %v2263 = vmin.f32 %v2222, 6.0
      %v2264 = vmin.f32 %v2223, 6.0
      %v2265 = vmin.f32 %v2224, 6.0
      %v2266 = vmin.f32 %v2225, 6.0
      %v2267 = vmin.f32 %v2226, 6.0
      %v2268 = vmin.f32 %v2227, 6.0
      %v2269 = vmin.f32 %v2228, 6.0
      %v2270 = vmin.f32 %v2229, 6.0
      %v2271 = vmin.f32 %v2230, 6.0
      %v2272 = vmin.f32 %v2231, 6.0
      %v2273 = vmin.f32 %v2232, 6.0
      %v2274 = vmin.f32 %v2233, 6.0
      %v2275 = vmin.f32 %v2234, 6.0
      %v2276 = vmin.f32 %v2235, 6.0
      %v2277 = vmin.f32 %v2236, 6.0
      %v2278 = vmin.f32 %v2237, 6.0
      %v2279 = vmin.f32 %v2238, 6.0
      %v2280 = vmin.f32 %v2239, 6.0
      %v2281 = vmin.f32 %v2240, 6.0
      %v2282 = vmin.f32 %v2241, 6.0
      %v2283 = vmin.f32 %v2242, 6.0
      %v2325 = vcombine.high %v2243, %v2243
      %v2327 = vunpack.c.l.s4 1983009808
      %v2328 = vunpack.c.0.s8 %v2327
      %v2329 = vlaneseq
      %v2330 = vshrl.u32 %v2329, 7
      %v2331 = vsub.s32 %v2328, %v2330
      %v2332 = vrot.slane %v2243, %v2331
      %v2334 = vunpack.c.l.s4 1983009808
      %v2335 = vunpack.c.0.s8 %v2334
      %v2336 = vlaneseq
      %v2337 = vshrl.u32 %v2336, 7
      %v2338 = vsub.s32 %v2335, %v2337
      %v2339 = vrot.slane %v2325, %v2338
      %v2340 = vcombine.high %v2332, %v2332
      %v2341 = vcombine.high %v2339, %v2339
      %v2342 = vcombine.high %v2244, %v2244
      %v2344 = vunpack.c.l.s4 1983009808
      %v2345 = vunpack.c.0.s8 %v2344
      %v2346 = vlaneseq
      %v2347 = vshrl.u32 %v2346, 7
      %v2348 = vsub.s32 %v2345, %v2347
      %v2349 = vrot.slane %v2244, %v2348
      %v2351 = vunpack.c.l.s4 1983009808
      %v2352 = vunpack.c.0.s8 %v2351
      %v2353 = vlaneseq
      %v2354 = vshrl.u32 %v2353, 7
      %v2355 = vsub.s32 %v2352, %v2354
      %v2356 = vrot.slane %v2342, %v2355
      %v2357 = vcombine.high %v2349, %v2349
      %v2358 = vcombine.high %v2356, %v2356
      %v2359 = vcombine.high %v2245, %v2245
      %v2361 = vunpack.c.l.s4 1983009808
      %v2362 = vunpack.c.0.s8 %v2361
      %v2363 = vlaneseq
      %v2364 = vshrl.u32 %v2363, 7
      %v2365 = vsub.s32 %v2362, %v2364
      %v2366 = vrot.slane %v2245, %v2365
      %v2368 = vunpack.c.l.s4 1983009808
      %v2369 = vunpack.c.0.s8 %v2368
      %v2370 = vlaneseq
      %v2371 = vshrl.u32 %v2370, 7
      %v2372 = vsub.s32 %v2369, %v2371
      %v2373 = vrot.slane %v2359, %v2372
      %v2374 = vcombine.high %v2366, %v2366
      %v2375 = vcombine.high %v2373, %v2373
      %v2376 = vcombine.high %v2246, %v2246
      %v2378 = vunpack.c.l.s4 1983009808
      %v2379 = vunpack.c.0.s8 %v2378
      %v2380 = vlaneseq
      %v2381 = vshrl.u32 %v2380, 7
      %v2382 = vsub.s32 %v2379, %v2381
      %v2383 = vrot.slane %v2246, %v2382
      %v2385 = vunpack.c.l.s4 1983009808
      %v2386 = vunpack.c.0.s8 %v2385
      %v2387 = vlaneseq
      %v2388 = vshrl.u32 %v2387, 7
      %v2389 = vsub.s32 %v2386, %v2388
      %v2390 = vrot.slane %v2376, %v2389
      %v2391 = vcombine.high %v2383, %v2383
      %v2392 = vcombine.high %v2390, %v2390
      %v2393 = vcombine.high %v2247, %v2247
      %v2395 = vunpack.c.l.s4 1983009808
      %v2396 = vunpack.c.0.s8 %v2395
      %v2397 = vlaneseq
      %v2398 = vshrl.u32 %v2397, 7
      %v2399 = vsub.s32 %v2396, %v2398
      %v2400 = vrot.slane %v2247, %v2399
      %v2402 = vunpack.c.l.s4 1983009808
      %v2403 = vunpack.c.0.s8 %v2402
      %v2404 = vlaneseq
      %v2405 = vshrl.u32 %v2404, 7
      %v2406 = vsub.s32 %v2403, %v2405
      %v2407 = vrot.slane %v2393, %v2406
      %v2408 = vcombine.high %v2400, %v2400
      %v2409 = vcombine.high %v2407, %v2407
      %v2410 = vcombine.high %v2248, %v2248
      %v2412 = vunpack.c.l.s4 1983009808
      %v2413 = vunpack.c.0.s8 %v2412
      %v2414 = vlaneseq
      %v2415 = vshrl.u32 %v2414, 7
      %v2416 = vsub.s32 %v2413, %v2415
      %v2417 = vrot.slane %v2248, %v2416
      %v2419 = vunpack.c.l.s4 1983009808
      %v2420 = vunpack.c.0.s8 %v2419
      %v2421 = vlaneseq
      %v2422 = vshrl.u32 %v2421, 7
      %v2423 = vsub.s32 %v2420, %v2422
      %v2424 = vrot.slane %v2410, %v2423
      %v2425 = vcombine.high %v2417, %v2417
      %v2426 = vcombine.high %v2424, %v2424
      %v2427 = vcombine.high %v2249, %v2249
      %v2429 = vunpack.c.l.s4 1983009808
      %v2430 = vunpack.c.0.s8 %v2429
      %v2431 = vlaneseq
      %v2432 = vshrl.u32 %v2431, 7
      %v2433 = vsub.s32 %v2430, %v2432
      %v2434 = vrot.slane %v2249, %v2433
      %v2436 = vunpack.c.l.s4 1983009808
      %v2437 = vunpack.c.0.s8 %v2436
      %v2438 = vlaneseq
      %v2439 = vshrl.u32 %v2438, 7
      %v2440 = vsub.s32 %v2437, %v2439
      %v2441 = vrot.slane %v2427, %v2440
      %v2442 = vcombine.high %v2434, %v2434
      %v2443 = vcombine.high %v2441, %v2441
      %v2444 = vcombine.high %v2250, %v2250
      %v2446 = vunpack.c.l.s4 1983009808
      %v2447 = vunpack.c.0.s8 %v2446
      %v2448 = vlaneseq
      %v2449 = vshrl.u32 %v2448, 7
      %v2450 = vsub.s32 %v2447, %v2449
      %v2451 = vrot.slane %v2250, %v2450
      %v2453 = vunpack.c.l.s4 1983009808
      %v2454 = vunpack.c.0.s8 %v2453
      %v2455 = vlaneseq
      %v2456 = vshrl.u32 %v2455, 7
      %v2457 = vsub.s32 %v2454, %v2456
      %v2458 = vrot.slane %v2444, %v2457
      %v2459 = vcombine.high %v2451, %v2451
      %v2460 = vcombine.high %v2458, %v2458
      %v2461 = vcombine.high %v2251, %v2251
      %v2463 = vunpack.c.l.s4 1983009808
      %v2464 = vunpack.c.0.s8 %v2463
      %v2465 = vlaneseq
      %v2466 = vshrl.u32 %v2465, 7
      %v2467 = vsub.s32 %v2464, %v2466
      %v2468 = vrot.slane %v2251, %v2467
      %v2470 = vunpack.c.l.s4 1983009808
      %v2471 = vunpack.c.0.s8 %v2470
      %v2472 = vlaneseq
      %v2473 = vshrl.u32 %v2472, 7
      %v2474 = vsub.s32 %v2471, %v2473
      %v2475 = vrot.slane %v2461, %v2474
      %v2476 = vcombine.high %v2468, %v2468
      %v2477 = vcombine.high %v2475, %v2475
      %v2478 = vcombine.high %v2252, %v2252
      %v2480 = vunpack.c.l.s4 1983009808
      %v2481 = vunpack.c.0.s8 %v2480
      %v2482 = vlaneseq
      %v2483 = vshrl.u32 %v2482, 7
      %v2484 = vsub.s32 %v2481, %v2483
      %v2485 = vrot.slane %v2252, %v2484
      %v2487 = vunpack.c.l.s4 1983009808
      %v2488 = vunpack.c.0.s8 %v2487
      %v2489 = vlaneseq
      %v2490 = vshrl.u32 %v2489, 7
      %v2491 = vsub.s32 %v2488, %v2490
      %v2492 = vrot.slane %v2478, %v2491
      %v2493 = vcombine.high %v2485, %v2485
      %v2494 = vcombine.high %v2492, %v2492
      %v2495 = vcombine.high %v2253, %v2253
      %v2497 = vunpack.c.l.s4 1983009808
      %v2498 = vunpack.c.0.s8 %v2497
      %v2499 = vlaneseq
      %v2500 = vshrl.u32 %v2499, 7
      %v2501 = vsub.s32 %v2498, %v2500
      %v2502 = vrot.slane %v2253, %v2501
      %v2504 = vunpack.c.l.s4 1983009808
      %v2505 = vunpack.c.0.s8 %v2504
      %v2506 = vlaneseq
      %v2507 = vshrl.u32 %v2506, 7
      %v2508 = vsub.s32 %v2505, %v2507
      %v2509 = vrot.slane %v2495, %v2508
      %v2510 = vcombine.high %v2502, %v2502
      %v2511 = vcombine.high %v2509, %v2509
      %v2512 = vcombine.high %v2254, %v2254
      %v2514 = vunpack.c.l.s4 1983009808
      %v2515 = vunpack.c.0.s8 %v2514
      %v2516 = vlaneseq
      %v2517 = vshrl.u32 %v2516, 7
      %v2518 = vsub.s32 %v2515, %v2517
      %v2519 = vrot.slane %v2254, %v2518
      %v2521 = vunpack.c.l.s4 1983009808
      %v2522 = vunpack.c.0.s8 %v2521
      %v2523 = vlaneseq
      %v2524 = vshrl.u32 %v2523, 7
      %v2525 = vsub.s32 %v2522, %v2524
      %v2526 = vrot.slane %v2512, %v2525
      %v2527 = vcombine.high %v2519, %v2519
      %v2528 = vcombine.high %v2526, %v2526
      %v2529 = vcombine.high %v2255, %v2255
      %v2531 = vunpack.c.l.s4 1983009808
      %v2532 = vunpack.c.0.s8 %v2531
      %v2533 = vlaneseq
      %v2534 = vshrl.u32 %v2533, 7
      %v2535 = vsub.s32 %v2532, %v2534
      %v2536 = vrot.slane %v2255, %v2535
      %v2538 = vunpack.c.l.s4 1983009808
      %v2539 = vunpack.c.0.s8 %v2538
      %v2540 = vlaneseq
      %v2541 = vshrl.u32 %v2540, 7
      %v2542 = vsub.s32 %v2539, %v2541
      %v2543 = vrot.slane %v2529, %v2542
      %v2544 = vcombine.high %v2536, %v2536
      %v2545 = vcombine.high %v2543, %v2543
      %v2546 = vcombine.high %v2256, %v2256
      %v2548 = vunpack.c.l.s4 1983009808
      %v2549 = vunpack.c.0.s8 %v2548
      %v2550 = vlaneseq
      %v2551 = vshrl.u32 %v2550, 7
      %v2552 = vsub.s32 %v2549, %v2551
      %v2553 = vrot.slane %v2256, %v2552
      %v2555 = vunpack.c.l.s4 1983009808
      %v2556 = vunpack.c.0.s8 %v2555
      %v2557 = vlaneseq
      %v2558 = vshrl.u32 %v2557, 7
      %v2559 = vsub.s32 %v2556, %v2558
      %v2560 = vrot.slane %v2546, %v2559
      %v2561 = vcombine.high %v2553, %v2553
      %v2562 = vcombine.high %v2560, %v2560
      %v2563 = vcombine.high %v2257, %v2257
      %v2565 = vunpack.c.l.s4 1983009808
      %v2566 = vunpack.c.0.s8 %v2565
      %v2567 = vlaneseq
      %v2568 = vshrl.u32 %v2567, 7
      %v2569 = vsub.s32 %v2566, %v2568
      %v2570 = vrot.slane %v2257, %v2569
      %v2572 = vunpack.c.l.s4 1983009808
      %v2573 = vunpack.c.0.s8 %v2572
      %v2574 = vlaneseq
      %v2575 = vshrl.u32 %v2574, 7
      %v2576 = vsub.s32 %v2573, %v2575
      %v2577 = vrot.slane %v2563, %v2576
      %v2578 = vcombine.high %v2570, %v2570
      %v2579 = vcombine.high %v2577, %v2577
      %v2580 = vcombine.high %v2258, %v2258
      %v2582 = vunpack.c.l.s4 1983009808
      %v2583 = vunpack.c.0.s8 %v2582
      %v2584 = vlaneseq
      %v2585 = vshrl.u32 %v2584, 7
      %v2586 = vsub.s32 %v2583, %v2585
      %v2587 = vrot.slane %v2258, %v2586
      %v2589 = vunpack.c.l.s4 1983009808
      %v2590 = vunpack.c.0.s8 %v2589
      %v2591 = vlaneseq
      %v2592 = vshrl.u32 %v2591, 7
      %v2593 = vsub.s32 %v2590, %v2592
      %v2594 = vrot.slane %v2580, %v2593
      %v2595 = vcombine.high %v2587, %v2587
      %v2596 = vcombine.high %v2594, %v2594
      %v2597 = vcombine.high %v2259, %v2259
      %v2599 = vunpack.c.l.s4 1983009808
      %v2600 = vunpack.c.0.s8 %v2599
      %v2601 = vlaneseq
      %v2602 = vshrl.u32 %v2601, 7
      %v2603 = vsub.s32 %v2600, %v2602
      %v2604 = vrot.slane %v2259, %v2603
      %v2606 = vunpack.c.l.s4 1983009808
      %v2607 = vunpack.c.0.s8 %v2606
      %v2608 = vlaneseq
      %v2609 = vshrl.u32 %v2608, 7
      %v2610 = vsub.s32 %v2607, %v2609
      %v2611 = vrot.slane %v2597, %v2610
      %v2612 = vcombine.high %v2604, %v2604
      %v2613 = vcombine.high %v2611, %v2611
      %v2614 = vcombine.high %v2260, %v2260
      %v2616 = vunpack.c.l.s4 1983009808
      %v2617 = vunpack.c.0.s8 %v2616
      %v2618 = vlaneseq
      %v2619 = vshrl.u32 %v2618, 7
      %v2620 = vsub.s32 %v2617, %v2619
      %v2621 = vrot.slane %v2260, %v2620
      %v2623 = vunpack.c.l.s4 1983009808
      %v2624 = vunpack.c.0.s8 %v2623
      %v2625 = vlaneseq
      %v2626 = vshrl.u32 %v2625, 7
      %v2627 = vsub.s32 %v2624, %v2626
      %v2628 = vrot.slane %v2614, %v2627
      %v2629 = vcombine.high %v2621, %v2621
      %v2630 = vcombine.high %v2628, %v2628
      %v2631 = vcombine.high %v2261, %v2261
      %v2633 = vunpack.c.l.s4 1983009808
      %v2634 = vunpack.c.0.s8 %v2633
      %v2635 = vlaneseq
      %v2636 = vshrl.u32 %v2635, 7
      %v2637 = vsub.s32 %v2634, %v2636
      %v2638 = vrot.slane %v2261, %v2637
      %v2640 = vunpack.c.l.s4 1983009808
      %v2641 = vunpack.c.0.s8 %v2640
      %v2642 = vlaneseq
      %v2643 = vshrl.u32 %v2642, 7
      %v2644 = vsub.s32 %v2641, %v2643
      %v2645 = vrot.slane %v2631, %v2644
      %v2646 = vcombine.high %v2638, %v2638
      %v2647 = vcombine.high %v2645, %v2645
      %v2648 = vcombine.high %v2262, %v2262
      %v2650 = vunpack.c.l.s4 1983009808
      %v2651 = vunpack.c.0.s8 %v2650
      %v2652 = vlaneseq
      %v2653 = vshrl.u32 %v2652, 7
      %v2654 = vsub.s32 %v2651, %v2653
      %v2655 = vrot.slane %v2262, %v2654
      %v2657 = vunpack.c.l.s4 1983009808
      %v2658 = vunpack.c.0.s8 %v2657
      %v2659 = vlaneseq
      %v2660 = vshrl.u32 %v2659, 7
      %v2661 = vsub.s32 %v2658, %v2660
      %v2662 = vrot.slane %v2648, %v2661
      %v2663 = vcombine.high %v2655, %v2655
      %v2664 = vcombine.high %v2662, %v2662
      %v2665 = vcombine.high %v2263, %v2263
      %v2667 = vunpack.c.l.s4 1983009808
      %v2668 = vunpack.c.0.s8 %v2667
      %v2669 = vlaneseq
      %v2670 = vshrl.u32 %v2669, 7
      %v2671 = vsub.s32 %v2668, %v2670
      %v2672 = vrot.slane %v2263, %v2671
      %v2674 = vunpack.c.l.s4 1983009808
      %v2675 = vunpack.c.0.s8 %v2674
      %v2676 = vlaneseq
      %v2677 = vshrl.u32 %v2676, 7
      %v2678 = vsub.s32 %v2675, %v2677
      %v2679 = vrot.slane %v2665, %v2678
      %v2680 = vcombine.high %v2672, %v2672
      %v2681 = vcombine.high %v2679, %v2679
      %v2682 = vcombine.high %v2264, %v2264
      %v2684 = vunpack.c.l.s4 1983009808
      %v2685 = vunpack.c.0.s8 %v2684
      %v2686 = vlaneseq
      %v2687 = vshrl.u32 %v2686, 7
      %v2688 = vsub.s32 %v2685, %v2687
      %v2689 = vrot.slane %v2264, %v2688
      %v2691 = vunpack.c.l.s4 1983009808
      %v2692 = vunpack.c.0.s8 %v2691
      %v2693 = vlaneseq
      %v2694 = vshrl.u32 %v2693, 7
      %v2695 = vsub.s32 %v2692, %v2694
      %v2696 = vrot.slane %v2682, %v2695
      %v2697 = vcombine.high %v2689, %v2689
      %v2698 = vcombine.high %v2696, %v2696
      %v2699 = vcombine.high %v2265, %v2265
      %v2701 = vunpack.c.l.s4 1983009808
      %v2702 = vunpack.c.0.s8 %v2701
      %v2703 = vlaneseq
      %v2704 = vshrl.u32 %v2703, 7
      %v2705 = vsub.s32 %v2702, %v2704
      %v2706 = vrot.slane %v2265, %v2705
      %v2708 = vunpack.c.l.s4 1983009808
      %v2709 = vunpack.c.0.s8 %v2708
      %v2710 = vlaneseq
      %v2711 = vshrl.u32 %v2710, 7
      %v2712 = vsub.s32 %v2709, %v2711
      %v2713 = vrot.slane %v2699, %v2712
      %v2714 = vcombine.high %v2706, %v2706
      %v2715 = vcombine.high %v2713, %v2713
      %v2716 = vcombine.high %v2266, %v2266
      %v2718 = vunpack.c.l.s4 1983009808
      %v2719 = vunpack.c.0.s8 %v2718
      %v2720 = vlaneseq
      %v2721 = vshrl.u32 %v2720, 7
      %v2722 = vsub.s32 %v2719, %v2721
      %v2723 = vrot.slane %v2266, %v2722
      %v2725 = vunpack.c.l.s4 1983009808
      %v2726 = vunpack.c.0.s8 %v2725
      %v2727 = vlaneseq
      %v2728 = vshrl.u32 %v2727, 7
      %v2729 = vsub.s32 %v2726, %v2728
      %v2730 = vrot.slane %v2716, %v2729
      %v2731 = vcombine.high %v2723, %v2723
      %v2732 = vcombine.high %v2730, %v2730
      %v2733 = vcombine.high %v2267, %v2267
      %v2735 = vunpack.c.l.s4 1983009808
      %v2736 = vunpack.c.0.s8 %v2735
      %v2737 = vlaneseq
      %v2738 = vshrl.u32 %v2737, 7
      %v2739 = vsub.s32 %v2736, %v2738
      %v2740 = vrot.slane %v2267, %v2739
      %v2742 = vunpack.c.l.s4 1983009808
      %v2743 = vunpack.c.0.s8 %v2742
      %v2744 = vlaneseq
      %v2745 = vshrl.u32 %v2744, 7
      %v2746 = vsub.s32 %v2743, %v2745
      %v2747 = vrot.slane %v2733, %v2746
      %v2748 = vcombine.high %v2740, %v2740
      %v2749 = vcombine.high %v2747, %v2747
      %v2750 = vcombine.high %v2268, %v2268
      %v2752 = vunpack.c.l.s4 1983009808
      %v2753 = vunpack.c.0.s8 %v2752
      %v2754 = vlaneseq
      %v2755 = vshrl.u32 %v2754, 7
      %v2756 = vsub.s32 %v2753, %v2755
      %v2757 = vrot.slane %v2268, %v2756
      %v2759 = vunpack.c.l.s4 1983009808
      %v2760 = vunpack.c.0.s8 %v2759
      %v2761 = vlaneseq
      %v2762 = vshrl.u32 %v2761, 7
      %v2763 = vsub.s32 %v2760, %v2762
      %v2764 = vrot.slane %v2750, %v2763
      %v2765 = vcombine.high %v2757, %v2757
      %v2766 = vcombine.high %v2764, %v2764
      %v2767 = vcombine.high %v2269, %v2269
      %v2769 = vunpack.c.l.s4 1983009808
      %v2770 = vunpack.c.0.s8 %v2769
      %v2771 = vlaneseq
      %v2772 = vshrl.u32 %v2771, 7
      %v2773 = vsub.s32 %v2770, %v2772
      %v2774 = vrot.slane %v2269, %v2773
      %v2776 = vunpack.c.l.s4 1983009808
      %v2777 = vunpack.c.0.s8 %v2776
      %v2778 = vlaneseq
      %v2779 = vshrl.u32 %v2778, 7
      %v2780 = vsub.s32 %v2777, %v2779
      %v2781 = vrot.slane %v2767, %v2780
      %v2782 = vcombine.high %v2774, %v2774
      %v2783 = vcombine.high %v2781, %v2781
      %v2784 = vcombine.high %v2270, %v2270
      %v2786 = vunpack.c.l.s4 1983009808
      %v2787 = vunpack.c.0.s8 %v2786
      %v2788 = vlaneseq
      %v2789 = vshrl.u32 %v2788, 7
      %v2790 = vsub.s32 %v2787, %v2789
      %v2791 = vrot.slane %v2270, %v2790
      %v2793 = vunpack.c.l.s4 1983009808
      %v2794 = vunpack.c.0.s8 %v2793
      %v2795 = vlaneseq
      %v2796 = vshrl.u32 %v2795, 7
      %v2797 = vsub.s32 %v2794, %v2796
      %v2798 = vrot.slane %v2784, %v2797
      %v2799 = vcombine.high %v2791, %v2791
      %v2800 = vcombine.high %v2798, %v2798
      %v2801 = vcombine.high %v2271, %v2271
      %v2803 = vunpack.c.l.s4 1983009808
      %v2804 = vunpack.c.0.s8 %v2803
      %v2805 = vlaneseq
      %v2806 = vshrl.u32 %v2805, 7
      %v2807 = vsub.s32 %v2804, %v2806
      %v2808 = vrot.slane %v2271, %v2807
      %v2810 = vunpack.c.l.s4 1983009808
      %v2811 = vunpack.c.0.s8 %v2810
      %v2812 = vlaneseq
      %v2813 = vshrl.u32 %v2812, 7
      %v2814 = vsub.s32 %v2811, %v2813
      %v2815 = vrot.slane %v2801, %v2814
      %v2816 = vcombine.high %v2808, %v2808
      %v2817 = vcombine.high %v2815, %v2815
      %v2818 = vcombine.high %v2272, %v2272
      %v2820 = vunpack.c.l.s4 1983009808
      %v2821 = vunpack.c.0.s8 %v2820
      %v2822 = vlaneseq
      %v2823 = vshrl.u32 %v2822, 7
      %v2824 = vsub.s32 %v2821, %v2823
      %v2825 = vrot.slane %v2272, %v2824
      %v2827 = vunpack.c.l.s4 1983009808
      %v2828 = vunpack.c.0.s8 %v2827
      %v2829 = vlaneseq
      %v2830 = vshrl.u32 %v2829, 7
      %v2831 = vsub.s32 %v2828, %v2830
      %v2832 = vrot.slane %v2818, %v2831
      %v2833 = vcombine.high %v2825, %v2825
      %v2834 = vcombine.high %v2832, %v2832
      %v2835 = vcombine.high %v2273, %v2273
      %v2837 = vunpack.c.l.s4 1983009808
      %v2838 = vunpack.c.0.s8 %v2837
      %v2839 = vlaneseq
      %v2840 = vshrl.u32 %v2839, 7
      %v2841 = vsub.s32 %v2838, %v2840
      %v2842 = vrot.slane %v2273, %v2841
      %v2844 = vunpack.c.l.s4 1983009808
      %v2845 = vunpack.c.0.s8 %v2844
      %v2846 = vlaneseq
      %v2847 = vshrl.u32 %v2846, 7
      %v2848 = vsub.s32 %v2845, %v2847
      %v2849 = vrot.slane %v2835, %v2848
      %v2850 = vcombine.high %v2842, %v2842
      %v2851 = vcombine.high %v2849, %v2849
      %v2852 = vcombine.high %v2274, %v2274
      %v2854 = vunpack.c.l.s4 1983009808
      %v2855 = vunpack.c.0.s8 %v2854
      %v2856 = vlaneseq
      %v2857 = vshrl.u32 %v2856, 7
      %v2858 = vsub.s32 %v2855, %v2857
      %v2859 = vrot.slane %v2274, %v2858
      %v2861 = vunpack.c.l.s4 1983009808
      %v2862 = vunpack.c.0.s8 %v2861
      %v2863 = vlaneseq
      %v2864 = vshrl.u32 %v2863, 7
      %v2865 = vsub.s32 %v2862, %v2864
      %v2866 = vrot.slane %v2852, %v2865
      %v2867 = vcombine.high %v2859, %v2859
      %v2868 = vcombine.high %v2866, %v2866
      %v2869 = vcombine.high %v2275, %v2275
      %v2871 = vunpack.c.l.s4 1983009808
      %v2872 = vunpack.c.0.s8 %v2871
      %v2873 = vlaneseq
      %v2874 = vshrl.u32 %v2873, 7
      %v2875 = vsub.s32 %v2872, %v2874
      %v2876 = vrot.slane %v2275, %v2875
      %v2878 = vunpack.c.l.s4 1983009808
      %v2879 = vunpack.c.0.s8 %v2878
      %v2880 = vlaneseq
      %v2881 = vshrl.u32 %v2880, 7
      %v2882 = vsub.s32 %v2879, %v2881
      %v2883 = vrot.slane %v2869, %v2882
      %v2884 = vcombine.high %v2876, %v2876
      %v2885 = vcombine.high %v2883, %v2883
      %v2886 = vcombine.high %v2276, %v2276
      %v2888 = vunpack.c.l.s4 1983009808
      %v2889 = vunpack.c.0.s8 %v2888
      %v2890 = vlaneseq
      %v2891 = vshrl.u32 %v2890, 7
      %v2892 = vsub.s32 %v2889, %v2891
      %v2893 = vrot.slane %v2276, %v2892
      %v2895 = vunpack.c.l.s4 1983009808
      %v2896 = vunpack.c.0.s8 %v2895
      %v2897 = vlaneseq
      %v2898 = vshrl.u32 %v2897, 7
      %v2899 = vsub.s32 %v2896, %v2898
      %v2900 = vrot.slane %v2886, %v2899
      %v2901 = vcombine.high %v2893, %v2893
      %v2902 = vcombine.high %v2900, %v2900
      %v2903 = vcombine.high %v2277, %v2277
      %v2905 = vunpack.c.l.s4 1983009808
      %v2906 = vunpack.c.0.s8 %v2905
      %v2907 = vlaneseq
      %v2908 = vshrl.u32 %v2907, 7
      %v2909 = vsub.s32 %v2906, %v2908
      %v2910 = vrot.slane %v2277, %v2909
      %v2912 = vunpack.c.l.s4 1983009808
      %v2913 = vunpack.c.0.s8 %v2912
      %v2914 = vlaneseq
      %v2915 = vshrl.u32 %v2914, 7
      %v2916 = vsub.s32 %v2913, %v2915
      %v2917 = vrot.slane %v2903, %v2916
      %v2918 = vcombine.high %v2910, %v2910
      %v2919 = vcombine.high %v2917, %v2917
      %v2920 = vcombine.high %v2278, %v2278
      %v2922 = vunpack.c.l.s4 1983009808
      %v2923 = vunpack.c.0.s8 %v2922
      %v2924 = vlaneseq
      %v2925 = vshrl.u32 %v2924, 7
      %v2926 = vsub.s32 %v2923, %v2925
      %v2927 = vrot.slane %v2278, %v2926
      %v2929 = vunpack.c.l.s4 1983009808
      %v2930 = vunpack.c.0.s8 %v2929
      %v2931 = vlaneseq
      %v2932 = vshrl.u32 %v2931, 7
      %v2933 = vsub.s32 %v2930, %v2932
      %v2934 = vrot.slane %v2920, %v2933
      %v2935 = vcombine.high %v2927, %v2927
      %v2936 = vcombine.high %v2934, %v2934
      %v2937 = vcombine.high %v2279, %v2279
      %v2939 = vunpack.c.l.s4 1983009808
      %v2940 = vunpack.c.0.s8 %v2939
      %v2941 = vlaneseq
      %v2942 = vshrl.u32 %v2941, 7
      %v2943 = vsub.s32 %v2940, %v2942
      %v2944 = vrot.slane %v2279, %v2943
      %v2946 = vunpack.c.l.s4 1983009808
      %v2947 = vunpack.c.0.s8 %v2946
      %v2948 = vlaneseq
      %v2949 = vshrl.u32 %v2948, 7
      %v2950 = vsub.s32 %v2947, %v2949
      %v2951 = vrot.slane %v2937, %v2950
      %v2952 = vcombine.high %v2944, %v2944
      %v2953 = vcombine.high %v2951, %v2951
      %v2954 = vcombine.high %v2280, %v2280
      %v2956 = vunpack.c.l.s4 1983009808
      %v2957 = vunpack.c.0.s8 %v2956
      %v2958 = vlaneseq
      %v2959 = vshrl.u32 %v2958, 7
      %v2960 = vsub.s32 %v2957, %v2959
      %v2961 = vrot.slane %v2280, %v2960
      %v2963 = vunpack.c.l.s4 1983009808
      %v2964 = vunpack.c.0.s8 %v2963
      %v2965 = vlaneseq
      %v2966 = vshrl.u32 %v2965, 7
      %v2967 = vsub.s32 %v2964, %v2966
      %v2968 = vrot.slane %v2954, %v2967
      %v2969 = vcombine.high %v2961, %v2961
      %v2970 = vcombine.high %v2968, %v2968
      %v2971 = vcombine.high %v2281, %v2281
      %v2973 = vunpack.c.l.s4 1983009808
      %v2974 = vunpack.c.0.s8 %v2973
      %v2975 = vlaneseq
      %v2976 = vshrl.u32 %v2975, 7
      %v2977 = vsub.s32 %v2974, %v2976
      %v2978 = vrot.slane %v2281, %v2977
      %v2980 = vunpack.c.l.s4 1983009808
      %v2981 = vunpack.c.0.s8 %v2980
      %v2982 = vlaneseq
      %v2983 = vshrl.u32 %v2982, 7
      %v2984 = vsub.s32 %v2981, %v2983
      %v2985 = vrot.slane %v2971, %v2984
      %v2986 = vcombine.high %v2978, %v2978
      %v2987 = vcombine.high %v2985, %v2985
      %v2988 = vcombine.high %v2282, %v2282
      %v2990 = vunpack.c.l.s4 1983009808
      %v2991 = vunpack.c.0.s8 %v2990
      %v2992 = vlaneseq
      %v2993 = vshrl.u32 %v2992, 7
      %v2994 = vsub.s32 %v2991, %v2993
      %v2995 = vrot.slane %v2282, %v2994
      %v2997 = vunpack.c.l.s4 1983009808
      %v2998 = vunpack.c.0.s8 %v2997
      %v2999 = vlaneseq
      %v3000 = vshrl.u32 %v2999, 7
      %v3001 = vsub.s32 %v2998, %v3000
      %v3002 = vrot.slane %v2988, %v3001
      %v3003 = vcombine.high %v2995, %v2995
      %v3004 = vcombine.high %v3002, %v3002
      %v3006 = vunpack.c.l.s4 1983009808
      %v3007 = vunpack.c.0.s8 %v3006
      %v3008 = vlaneseq
      %v3009 = vshrl.u32 %v3008, 7
      %v3010 = vsub.s32 %v3007, %v3009
      %v3011 = vrot.slane %v2283, %v3010
      %v3012 = vcombine.high %v3011, %v3011
      %v3013 = vcombine.low %v2332, %v2340
      %v3014 = vcombine.low %v2339, %v2341
      %v3016 = vunpack.c.l.s4 1983009808
      %v3017 = vunpack.c.0.s8 %v3016
      %v3018 = vlaneseq
      %v3019 = vshrl.u32 %v3018, 7
      %v3020 = vsub.s32 %v3017, %v3019
      %v3021 = vrot.slane %v3013, %v3020
      %v3023 = vunpack.c.l.s4 1983009808
      %v3024 = vunpack.c.0.s8 %v3023
      %v3025 = vlaneseq
      %v3026 = vshrl.u32 %v3025, 7
      %v3027 = vsub.s32 %v3024, %v3026
      %v3028 = vrot.slane %v3014, %v3027
      %v3029 = vcombine.low %v3021, %v3028
      %v3030 = vcombine.low %v2349, %v2357
      %v3031 = vcombine.low %v2356, %v2358
      %v3033 = vunpack.c.l.s4 1983009808
      %v3034 = vunpack.c.0.s8 %v3033
      %v3035 = vlaneseq
      %v3036 = vshrl.u32 %v3035, 7
      %v3037 = vsub.s32 %v3034, %v3036
      %v3038 = vrot.slane %v3030, %v3037
      %v3040 = vunpack.c.l.s4 1983009808
      %v3041 = vunpack.c.0.s8 %v3040
      %v3042 = vlaneseq
      %v3043 = vshrl.u32 %v3042, 7
      %v3044 = vsub.s32 %v3041, %v3043
      %v3045 = vrot.slane %v3031, %v3044
      %v3046 = vcombine.low %v3038, %v3045
      %v3048 = vunpack.c.l.s4 1983009808
      %v3049 = vunpack.c.0.s8 %v3048
      %v3050 = vlaneseq
      %v3051 = vshrl.u32 %v3050, 7
      %v3052 = vsub.s32 %v3049, %v3051
      %v3053 = vrot.slane %v2366, %v3052
      %v3054 = vcombine.low %v2374, %v2373
      %v3055 = vcombine.low %v2375, %v2383
      %v3057 = vunpack.c.l.s4 1983009808
      %v3058 = vunpack.c.0.s8 %v3057
      %v3059 = vlaneseq
      %v3060 = vshrl.u32 %v3059, 7
      %v3061 = vsub.s32 %v3058, %v3060
      %v3062 = vrot.slane %v3054, %v3061
      %v3064 = vunpack.c.l.s4 1983009808
      %v3065 = vunpack.c.0.s8 %v3064
      %v3066 = vlaneseq
      %v3067 = vshrl.u32 %v3066, 7
      %v3068 = vsub.s32 %v3065, %v3067
      %v3069 = vrot.slane %v3055, %v3068
      %v3070 = vcombine.low %v3062, %v3069
      %v3071 = vcombine.low %v2391, %v2390
      %v3072 = vcombine.low %v2392, %v2400
      %v3074 = vunpack.c.l.s4 1983009808
      %v3075 = vunpack.c.0.s8 %v3074
      %v3076 = vlaneseq
      %v3077 = vshrl.u32 %v3076, 7
      %v3078 = vsub.s32 %v3075, %v3077
      %v3079 = vrot.slane %v3071, %v3078
      %v3081 = vunpack.c.l.s4 1983009808
      %v3082 = vunpack.c.0.s8 %v3081
      %v3083 = vlaneseq
      %v3084 = vshrl.u32 %v3083, 7
      %v3085 = vsub.s32 %v3082, %v3084
      %v3086 = vrot.slane %v3072, %v3085
      %v3087 = vcombine.low %v3079, %v3086
      %v3089 = vunpack.c.l.s4 1983009808
      %v3090 = vunpack.c.0.s8 %v3089
      %v3091 = vlaneseq
      %v3092 = vshrl.u32 %v3091, 7
      %v3093 = vsub.s32 %v3090, %v3092
      %v3094 = vrot.slane %v2408, %v3093
      %v3095 = vcombine.low %v2407, %v2409
      %v3096 = vcombine.low %v2417, %v2425
      %v3098 = vunpack.c.l.s4 1983009808
      %v3099 = vunpack.c.0.s8 %v3098
      %v3100 = vlaneseq
      %v3101 = vshrl.u32 %v3100, 7
      %v3102 = vsub.s32 %v3099, %v3101
      %v3103 = vrot.slane %v3095, %v3102
      %v3105 = vunpack.c.l.s4 1983009808
      %v3106 = vunpack.c.0.s8 %v3105
      %v3107 = vlaneseq
      %v3108 = vshrl.u32 %v3107, 7
      %v3109 = vsub.s32 %v3106, %v3108
      %v3110 = vrot.slane %v3096, %v3109
      %v3111 = vcombine.low %v3103, %v3110
      %v3112 = vcombine.low %v2424, %v2426
      %v3113 = vcombine.low %v2434, %v2442
      %v3115 = vunpack.c.l.s4 1983009808
      %v3116 = vunpack.c.0.s8 %v3115
      %v3117 = vlaneseq
      %v3118 = vshrl.u32 %v3117, 7
      %v3119 = vsub.s32 %v3116, %v3118
      %v3120 = vrot.slane %v3112, %v3119
      %v3122 = vunpack.c.l.s4 1983009808
      %v3123 = vunpack.c.0.s8 %v3122
      %v3124 = vlaneseq
      %v3125 = vshrl.u32 %v3124, 7
      %v3126 = vsub.s32 %v3123, %v3125
      %v3127 = vrot.slane %v3113, %v3126
      %v3128 = vcombine.low %v3120, %v3127
      %v3130 = vunpack.c.l.s4 1983009808
      %v3131 = vunpack.c.0.s8 %v3130
      %v3132 = vlaneseq
      %v3133 = vshrl.u32 %v3132, 7
      %v3134 = vsub.s32 %v3131, %v3133
      %v3135 = vrot.slane %v2441, %v3134
      %v3136 = vcombine.low %v2443, %v2451
      %v3137 = vcombine.low %v2459, %v2458
      %v3139 = vunpack.c.l.s4 1983009808
      %v3140 = vunpack.c.0.s8 %v3139
      %v3141 = vlaneseq
      %v3142 = vshrl.u32 %v3141, 7
      %v3143 = vsub.s32 %v3140, %v3142
      %v3144 = vrot.slane %v3136, %v3143
      %v3146 = vunpack.c.l.s4 1983009808
      %v3147 = vunpack.c.0.s8 %v3146
      %v3148 = vlaneseq
      %v3149 = vshrl.u32 %v3148, 7
      %v3150 = vsub.s32 %v3147, %v3149
      %v3151 = vrot.slane %v3137, %v3150
      %v3152 = vcombine.low %v3144, %v3151
      %v3153 = vcombine.low %v2460, %v2468
      %v3154 = vcombine.low %v2476, %v2475
      %v3156 = vunpack.c.l.s4 1983009808
      %v3157 = vunpack.c.0.s8 %v3156
      %v3158 = vlaneseq
      %v3159 = vshrl.u32 %v3158, 7
      %v3160 = vsub.s32 %v3157, %v3159
      %v3161 = vrot.slane %v3153, %v3160
      %v3163 = vunpack.c.l.s4 1983009808
      %v3164 = vunpack.c.0.s8 %v3163
      %v3165 = vlaneseq
      %v3166 = vshrl.u32 %v3165, 7
      %v3167 = vsub.s32 %v3164, %v3166
      %v3168 = vrot.slane %v3154, %v3167
      %v3169 = vcombine.low %v3161, %v3168
      %v3171 = vunpack.c.l.s4 1983009808
      %v3172 = vunpack.c.0.s8 %v3171
      %v3173 = vlaneseq
      %v3174 = vshrl.u32 %v3173, 7
      %v3175 = vsub.s32 %v3172, %v3174
      %v3176 = vrot.slane %v2477, %v3175
      %v3177 = vcombine.low %v2485, %v2493
      %v3178 = vcombine.low %v2492, %v2494
      %v3180 = vunpack.c.l.s4 1983009808
      %v3181 = vunpack.c.0.s8 %v3180
      %v3182 = vlaneseq
      %v3183 = vshrl.u32 %v3182, 7
      %v3184 = vsub.s32 %v3181, %v3183
      %v3185 = vrot.slane %v3177, %v3184
      %v3187 = vunpack.c.l.s4 1983009808
      %v3188 = vunpack.c.0.s8 %v3187
      %v3189 = vlaneseq
      %v3190 = vshrl.u32 %v3189, 7
      %v3191 = vsub.s32 %v3188, %v3190
      %v3192 = vrot.slane %v3178, %v3191
      %v3193 = vcombine.low %v3185, %v3192
      %v3194 = vcombine.low %v2502, %v2510
      %v3195 = vcombine.low %v2509, %v2511
      %v3197 = vunpack.c.l.s4 1983009808
      %v3198 = vunpack.c.0.s8 %v3197
      %v3199 = vlaneseq
      %v3200 = vshrl.u32 %v3199, 7
      %v3201 = vsub.s32 %v3198, %v3200
      %v3202 = vrot.slane %v3194, %v3201
      %v3204 = vunpack.c.l.s4 1983009808
      %v3205 = vunpack.c.0.s8 %v3204
      %v3206 = vlaneseq
      %v3207 = vshrl.u32 %v3206, 7
      %v3208 = vsub.s32 %v3205, %v3207
      %v3209 = vrot.slane %v3195, %v3208
      %v3210 = vcombine.low %v3202, %v3209
      %v3212 = vunpack.c.l.s4 1983009808
      %v3213 = vunpack.c.0.s8 %v3212
      %v3214 = vlaneseq
      %v3215 = vshrl.u32 %v3214, 7
      %v3216 = vsub.s32 %v3213, %v3215
      %v3217 = vrot.slane %v2519, %v3216
      %v3218 = vcombine.low %v2527, %v2526
      %v3219 = vcombine.low %v2528, %v2536
      %v3221 = vunpack.c.l.s4 1983009808
      %v3222 = vunpack.c.0.s8 %v3221
      %v3223 = vlaneseq
      %v3224 = vshrl.u32 %v3223, 7
      %v3225 = vsub.s32 %v3222, %v3224
      %v3226 = vrot.slane %v3218, %v3225
      %v3228 = vunpack.c.l.s4 1983009808
      %v3229 = vunpack.c.0.s8 %v3228
      %v3230 = vlaneseq
      %v3231 = vshrl.u32 %v3230, 7
      %v3232 = vsub.s32 %v3229, %v3231
      %v3233 = vrot.slane %v3219, %v3232
      %v3234 = vcombine.low %v3226, %v3233
      %v3235 = vcombine.low %v2544, %v2543
      %v3236 = vcombine.low %v2545, %v2553
      %v3238 = vunpack.c.l.s4 1983009808
      %v3239 = vunpack.c.0.s8 %v3238
      %v3240 = vlaneseq
      %v3241 = vshrl.u32 %v3240, 7
      %v3242 = vsub.s32 %v3239, %v3241
      %v3243 = vrot.slane %v3235, %v3242
      %v3245 = vunpack.c.l.s4 1983009808
      %v3246 = vunpack.c.0.s8 %v3245
      %v3247 = vlaneseq
      %v3248 = vshrl.u32 %v3247, 7
      %v3249 = vsub.s32 %v3246, %v3248
      %v3250 = vrot.slane %v3236, %v3249
      %v3251 = vcombine.low %v3243, %v3250
      %v3253 = vunpack.c.l.s4 1983009808
      %v3254 = vunpack.c.0.s8 %v3253
      %v3255 = vlaneseq
      %v3256 = vshrl.u32 %v3255, 7
      %v3257 = vsub.s32 %v3254, %v3256
      %v3258 = vrot.slane %v2561, %v3257
      %v3259 = vcombine.low %v2560, %v2562
      %v3260 = vcombine.low %v2570, %v2578
      %v3262 = vunpack.c.l.s4 1983009808
      %v3263 = vunpack.c.0.s8 %v3262
      %v3264 = vlaneseq
      %v3265 = vshrl.u32 %v3264, 7
      %v3266 = vsub.s32 %v3263, %v3265
      %v3267 = vrot.slane %v3259, %v3266
      %v3269 = vunpack.c.l.s4 1983009808
      %v3270 = vunpack.c.0.s8 %v3269
      %v3271 = vlaneseq
      %v3272 = vshrl.u32 %v3271, 7
      %v3273 = vsub.s32 %v3270, %v3272
      %v3274 = vrot.slane %v3260, %v3273
      %v3275 = vcombine.low %v3267, %v3274
      %v3276 = vcombine.low %v2577, %v2579
      %v3277 = vcombine.low %v2587, %v2595
      %v3279 = vunpack.c.l.s4 1983009808
      %v3280 = vunpack.c.0.s8 %v3279
      %v3281 = vlaneseq
      %v3282 = vshrl.u32 %v3281, 7
      %v3283 = vsub.s32 %v3280, %v3282
      %v3284 = vrot.slane %v3276, %v3283
      %v3286 = vunpack.c.l.s4 1983009808
      %v3287 = vunpack.c.0.s8 %v3286
      %v3288 = vlaneseq
      %v3289 = vshrl.u32 %v3288, 7
      %v3290 = vsub.s32 %v3287, %v3289
      %v3291 = vrot.slane %v3277, %v3290
      %v3292 = vcombine.low %v3284, %v3291
      %v3294 = vunpack.c.l.s4 1983009808
      %v3295 = vunpack.c.0.s8 %v3294
      %v3296 = vlaneseq
      %v3297 = vshrl.u32 %v3296, 7
      %v3298 = vsub.s32 %v3295, %v3297
      %v3299 = vrot.slane %v2594, %v3298
      %v3300 = vcombine.low %v2596, %v2604
      %v3301 = vcombine.low %v2612, %v2611
      %v3303 = vunpack.c.l.s4 1983009808
      %v3304 = vunpack.c.0.s8 %v3303
      %v3305 = vlaneseq
      %v3306 = vshrl.u32 %v3305, 7
      %v3307 = vsub.s32 %v3304, %v3306
      %v3308 = vrot.slane %v3300, %v3307
      %v3310 = vunpack.c.l.s4 1983009808
      %v3311 = vunpack.c.0.s8 %v3310
      %v3312 = vlaneseq
      %v3313 = vshrl.u32 %v3312, 7
      %v3314 = vsub.s32 %v3311, %v3313
      %v3315 = vrot.slane %v3301, %v3314
      %v3316 = vcombine.low %v3308, %v3315
      %v3317 = vcombine.low %v2613, %v2621
      %v3318 = vcombine.low %v2629, %v2628
      %v3320 = vunpack.c.l.s4 1983009808
      %v3321 = vunpack.c.0.s8 %v3320
      %v3322 = vlaneseq
      %v3323 = vshrl.u32 %v3322, 7
      %v3324 = vsub.s32 %v3321, %v3323
      %v3325 = vrot.slane %v3317, %v3324
      %v3327 = vunpack.c.l.s4 1983009808
      %v3328 = vunpack.c.0.s8 %v3327
      %v3329 = vlaneseq
      %v3330 = vshrl.u32 %v3329, 7
      %v3331 = vsub.s32 %v3328, %v3330
      %v3332 = vrot.slane %v3318, %v3331
      %v3333 = vcombine.low %v3325, %v3332
      %v3335 = vunpack.c.l.s4 1983009808
      %v3336 = vunpack.c.0.s8 %v3335
      %v3337 = vlaneseq
      %v3338 = vshrl.u32 %v3337, 7
      %v3339 = vsub.s32 %v3336, %v3338
      %v3340 = vrot.slane %v2630, %v3339
      %v3341 = vcombine.low %v2638, %v2646
      %v3342 = vcombine.low %v2645, %v2647
      %v3344 = vunpack.c.l.s4 1983009808
      %v3345 = vunpack.c.0.s8 %v3344
      %v3346 = vlaneseq
      %v3347 = vshrl.u32 %v3346, 7
      %v3348 = vsub.s32 %v3345, %v3347
      %v3349 = vrot.slane %v3341, %v3348
      %v3351 = vunpack.c.l.s4 1983009808
      %v3352 = vunpack.c.0.s8 %v3351
      %v3353 = vlaneseq
      %v3354 = vshrl.u32 %v3353, 7
      %v3355 = vsub.s32 %v3352, %v3354
      %v3356 = vrot.slane %v3342, %v3355
      %v3357 = vcombine.low %v3349, %v3356
      %v3358 = vcombine.low %v2655, %v2663
      %v3359 = vcombine.low %v2662, %v2664
      %v3361 = vunpack.c.l.s4 1983009808
      %v3362 = vunpack.c.0.s8 %v3361
      %v3363 = vlaneseq
      %v3364 = vshrl.u32 %v3363, 7
      %v3365 = vsub.s32 %v3362, %v3364
      %v3366 = vrot.slane %v3358, %v3365
      %v3368 = vunpack.c.l.s4 1983009808
      %v3369 = vunpack.c.0.s8 %v3368
      %v3370 = vlaneseq
      %v3371 = vshrl.u32 %v3370, 7
      %v3372 = vsub.s32 %v3369, %v3371
      %v3373 = vrot.slane %v3359, %v3372
      %v3374 = vcombine.low %v3366, %v3373
      %v3376 = vunpack.c.l.s4 1983009808
      %v3377 = vunpack.c.0.s8 %v3376
      %v3378 = vlaneseq
      %v3379 = vshrl.u32 %v3378, 7
      %v3380 = vsub.s32 %v3377, %v3379
      %v3381 = vrot.slane %v2672, %v3380
      %v3382 = vcombine.low %v2680, %v2679
      %v3383 = vcombine.low %v2681, %v2689
      %v3385 = vunpack.c.l.s4 1983009808
      %v3386 = vunpack.c.0.s8 %v3385
      %v3387 = vlaneseq
      %v3388 = vshrl.u32 %v3387, 7
      %v3389 = vsub.s32 %v3386, %v3388
      %v3390 = vrot.slane %v3382, %v3389
      %v3392 = vunpack.c.l.s4 1983009808
      %v3393 = vunpack.c.0.s8 %v3392
      %v3394 = vlaneseq
      %v3395 = vshrl.u32 %v3394, 7
      %v3396 = vsub.s32 %v3393, %v3395
      %v3397 = vrot.slane %v3383, %v3396
      %v3398 = vcombine.low %v3390, %v3397
      %v3399 = vcombine.low %v2697, %v2696
      %v3400 = vcombine.low %v2698, %v2706
      %v3402 = vunpack.c.l.s4 1983009808
      %v3403 = vunpack.c.0.s8 %v3402
      %v3404 = vlaneseq
      %v3405 = vshrl.u32 %v3404, 7
      %v3406 = vsub.s32 %v3403, %v3405
      %v3407 = vrot.slane %v3399, %v3406
      %v3409 = vunpack.c.l.s4 1983009808
      %v3410 = vunpack.c.0.s8 %v3409
      %v3411 = vlaneseq
      %v3412 = vshrl.u32 %v3411, 7
      %v3413 = vsub.s32 %v3410, %v3412
      %v3414 = vrot.slane %v3400, %v3413
      %v3415 = vcombine.low %v3407, %v3414
      %v3417 = vunpack.c.l.s4 1983009808
      %v3418 = vunpack.c.0.s8 %v3417
      %v3419 = vlaneseq
      %v3420 = vshrl.u32 %v3419, 7
      %v3421 = vsub.s32 %v3418, %v3420
      %v3422 = vrot.slane %v2714, %v3421
      %v3423 = vcombine.low %v2713, %v2715
      %v3424 = vcombine.low %v2723, %v2731
      %v3426 = vunpack.c.l.s4 1983009808
      %v3427 = vunpack.c.0.s8 %v3426
      %v3428 = vlaneseq
      %v3429 = vshrl.u32 %v3428, 7
      %v3430 = vsub.s32 %v3427, %v3429
      %v3431 = vrot.slane %v3423, %v3430
      %v3433 = vunpack.c.l.s4 1983009808
      %v3434 = vunpack.c.0.s8 %v3433
      %v3435 = vlaneseq
      %v3436 = vshrl.u32 %v3435, 7
      %v3437 = vsub.s32 %v3434, %v3436
      %v3438 = vrot.slane %v3424, %v3437
      %v3439 = vcombine.low %v3431, %v3438
      %v3440 = vcombine.low %v2730, %v2732
      %v3441 = vcombine.low %v2740, %v2748
      %v3443 = vunpack.c.l.s4 1983009808
      %v3444 = vunpack.c.0.s8 %v3443
      %v3445 = vlaneseq
      %v3446 = vshrl.u32 %v3445, 7
      %v3447 = vsub.s32 %v3444, %v3446
      %v3448 = vrot.slane %v3440, %v3447
      %v3450 = vunpack.c.l.s4 1983009808
      %v3451 = vunpack.c.0.s8 %v3450
      %v3452 = vlaneseq
      %v3453 = vshrl.u32 %v3452, 7
      %v3454 = vsub.s32 %v3451, %v3453
      %v3455 = vrot.slane %v3441, %v3454
      %v3456 = vcombine.low %v3448, %v3455
      %v3458 = vunpack.c.l.s4 1983009808
      %v3459 = vunpack.c.0.s8 %v3458
      %v3460 = vlaneseq
      %v3461 = vshrl.u32 %v3460, 7
      %v3462 = vsub.s32 %v3459, %v3461
      %v3463 = vrot.slane %v2747, %v3462
      %v3464 = vcombine.low %v2749, %v2757
      %v3465 = vcombine.low %v2765, %v2764
      %v3467 = vunpack.c.l.s4 1983009808
      %v3468 = vunpack.c.0.s8 %v3467
      %v3469 = vlaneseq
      %v3470 = vshrl.u32 %v3469, 7
      %v3471 = vsub.s32 %v3468, %v3470
      %v3472 = vrot.slane %v3464, %v3471
      %v3474 = vunpack.c.l.s4 1983009808
      %v3475 = vunpack.c.0.s8 %v3474
      %v3476 = vlaneseq
      %v3477 = vshrl.u32 %v3476, 7
      %v3478 = vsub.s32 %v3475, %v3477
      %v3479 = vrot.slane %v3465, %v3478
      %v3480 = vcombine.low %v3472, %v3479
      %v3481 = vcombine.low %v2766, %v2774
      %v3482 = vcombine.low %v2782, %v2781
      %v3484 = vunpack.c.l.s4 1983009808
      %v3485 = vunpack.c.0.s8 %v3484
      %v3486 = vlaneseq
      %v3487 = vshrl.u32 %v3486, 7
      %v3488 = vsub.s32 %v3485, %v3487
      %v3489 = vrot.slane %v3481, %v3488
      %v3491 = vunpack.c.l.s4 1983009808
      %v3492 = vunpack.c.0.s8 %v3491
      %v3493 = vlaneseq
      %v3494 = vshrl.u32 %v3493, 7
      %v3495 = vsub.s32 %v3492, %v3494
      %v3496 = vrot.slane %v3482, %v3495
      %v3497 = vcombine.low %v3489, %v3496
      %v3499 = vunpack.c.l.s4 1983009808
      %v3500 = vunpack.c.0.s8 %v3499
      %v3501 = vlaneseq
      %v3502 = vshrl.u32 %v3501, 7
      %v3503 = vsub.s32 %v3500, %v3502
      %v3504 = vrot.slane %v2783, %v3503
      %v3505 = vcombine.low %v2791, %v2799
      %v3506 = vcombine.low %v2798, %v2800
      %v3508 = vunpack.c.l.s4 1983009808
      %v3509 = vunpack.c.0.s8 %v3508
      %v3510 = vlaneseq
      %v3511 = vshrl.u32 %v3510, 7
      %v3512 = vsub.s32 %v3509, %v3511
      %v3513 = vrot.slane %v3505, %v3512
      %v3515 = vunpack.c.l.s4 1983009808
      %v3516 = vunpack.c.0.s8 %v3515
      %v3517 = vlaneseq
      %v3518 = vshrl.u32 %v3517, 7
      %v3519 = vsub.s32 %v3516, %v3518
      %v3520 = vrot.slane %v3506, %v3519
      %v3521 = vcombine.low %v3513, %v3520
      %v3522 = vcombine.low %v2808, %v2816
      %v3523 = vcombine.low %v2815, %v2817
      %v3525 = vunpack.c.l.s4 1983009808
      %v3526 = vunpack.c.0.s8 %v3525
      %v3527 = vlaneseq
      %v3528 = vshrl.u32 %v3527, 7
      %v3529 = vsub.s32 %v3526, %v3528
      %v3530 = vrot.slane %v3522, %v3529
      %v3532 = vunpack.c.l.s4 1983009808
      %v3533 = vunpack.c.0.s8 %v3532
      %v3534 = vlaneseq
      %v3535 = vshrl.u32 %v3534, 7
      %v3536 = vsub.s32 %v3533, %v3535
      %v3537 = vrot.slane %v3523, %v3536
      %v3538 = vcombine.low %v3530, %v3537
      %v3540 = vunpack.c.l.s4 1983009808
      %v3541 = vunpack.c.0.s8 %v3540
      %v3542 = vlaneseq
      %v3543 = vshrl.u32 %v3542, 7
      %v3544 = vsub.s32 %v3541, %v3543
      %v3545 = vrot.slane %v2825, %v3544
      %v3546 = vcombine.low %v2833, %v2832
      %v3547 = vcombine.low %v2834, %v2842
      %v3549 = vunpack.c.l.s4 1983009808
      %v3550 = vunpack.c.0.s8 %v3549
      %v3551 = vlaneseq
      %v3552 = vshrl.u32 %v3551, 7
      %v3553 = vsub.s32 %v3550, %v3552
      %v3554 = vrot.slane %v3546, %v3553
      %v3556 = vunpack.c.l.s4 1983009808
      %v3557 = vunpack.c.0.s8 %v3556
      %v3558 = vlaneseq
      %v3559 = vshrl.u32 %v3558, 7
      %v3560 = vsub.s32 %v3557, %v3559
      %v3561 = vrot.slane %v3547, %v3560
      %v3562 = vcombine.low %v3554, %v3561
      %v3563 = vcombine.low %v2850, %v2849
      %v3564 = vcombine.low %v2851, %v2859
      %v3566 = vunpack.c.l.s4 1983009808
      %v3567 = vunpack.c.0.s8 %v3566
      %v3568 = vlaneseq
      %v3569 = vshrl.u32 %v3568, 7
      %v3570 = vsub.s32 %v3567, %v3569
      %v3571 = vrot.slane %v3563, %v3570
      %v3573 = vunpack.c.l.s4 1983009808
      %v3574 = vunpack.c.0.s8 %v3573
      %v3575 = vlaneseq
      %v3576 = vshrl.u32 %v3575, 7
      %v3577 = vsub.s32 %v3574, %v3576
      %v3578 = vrot.slane %v3564, %v3577
      %v3579 = vcombine.low %v3571, %v3578
      %v3581 = vunpack.c.l.s4 1983009808
      %v3582 = vunpack.c.0.s8 %v3581
      %v3583 = vlaneseq
      %v3584 = vshrl.u32 %v3583, 7
      %v3585 = vsub.s32 %v3582, %v3584
      %v3586 = vrot.slane %v2867, %v3585
      %v3587 = vcombine.low %v2866, %v2868
      %v3588 = vcombine.low %v2876, %v2884
      %v3590 = vunpack.c.l.s4 1983009808
      %v3591 = vunpack.c.0.s8 %v3590
      %v3592 = vlaneseq
      %v3593 = vshrl.u32 %v3592, 7
      %v3594 = vsub.s32 %v3591, %v3593
      %v3595 = vrot.slane %v3587, %v3594
      %v3597 = vunpack.c.l.s4 1983009808
      %v3598 = vunpack.c.0.s8 %v3597
      %v3599 = vlaneseq
      %v3600 = vshrl.u32 %v3599, 7
      %v3601 = vsub.s32 %v3598, %v3600
      %v3602 = vrot.slane %v3588, %v3601
      %v3603 = vcombine.low %v3595, %v3602
      %v3604 = vcombine.low %v2883, %v2885
      %v3605 = vcombine.low %v2893, %v2901
      %v3607 = vunpack.c.l.s4 1983009808
      %v3608 = vunpack.c.0.s8 %v3607
      %v3609 = vlaneseq
      %v3610 = vshrl.u32 %v3609, 7
      %v3611 = vsub.s32 %v3608, %v3610
      %v3612 = vrot.slane %v3604, %v3611
      %v3614 = vunpack.c.l.s4 1983009808
      %v3615 = vunpack.c.0.s8 %v3614
      %v3616 = vlaneseq
      %v3617 = vshrl.u32 %v3616, 7
      %v3618 = vsub.s32 %v3615, %v3617
      %v3619 = vrot.slane %v3605, %v3618
      %v3620 = vcombine.low %v3612, %v3619
      %v3622 = vunpack.c.l.s4 1983009808
      %v3623 = vunpack.c.0.s8 %v3622
      %v3624 = vlaneseq
      %v3625 = vshrl.u32 %v3624, 7
      %v3626 = vsub.s32 %v3623, %v3625
      %v3627 = vrot.slane %v2900, %v3626
      %v3628 = vcombine.low %v2902, %v2910
      %v3629 = vcombine.low %v2918, %v2917
      %v3631 = vunpack.c.l.s4 1983009808
      %v3632 = vunpack.c.0.s8 %v3631
      %v3633 = vlaneseq
      %v3634 = vshrl.u32 %v3633, 7
      %v3635 = vsub.s32 %v3632, %v3634
      %v3636 = vrot.slane %v3628, %v3635
      %v3638 = vunpack.c.l.s4 1983009808
      %v3639 = vunpack.c.0.s8 %v3638
      %v3640 = vlaneseq
      %v3641 = vshrl.u32 %v3640, 7
      %v3642 = vsub.s32 %v3639, %v3641
      %v3643 = vrot.slane %v3629, %v3642
      %v3644 = vcombine.low %v3636, %v3643
      %v3645 = vcombine.low %v2919, %v2927
      %v3646 = vcombine.low %v2935, %v2934
      %v3648 = vunpack.c.l.s4 1983009808
      %v3649 = vunpack.c.0.s8 %v3648
      %v3650 = vlaneseq
      %v3651 = vshrl.u32 %v3650, 7
      %v3652 = vsub.s32 %v3649, %v3651
      %v3653 = vrot.slane %v3645, %v3652
      %v3655 = vunpack.c.l.s4 1983009808
      %v3656 = vunpack.c.0.s8 %v3655
      %v3657 = vlaneseq
      %v3658 = vshrl.u32 %v3657, 7
      %v3659 = vsub.s32 %v3656, %v3658
      %v3660 = vrot.slane %v3646, %v3659
      %v3661 = vcombine.low %v3653, %v3660
      %v3663 = vunpack.c.l.s4 1983009808
      %v3664 = vunpack.c.0.s8 %v3663
      %v3665 = vlaneseq
      %v3666 = vshrl.u32 %v3665, 7
      %v3667 = vsub.s32 %v3664, %v3666
      %v3668 = vrot.slane %v2936, %v3667
      %v3669 = vcombine.low %v2944, %v2952
      %v3670 = vcombine.low %v2951, %v2953
      %v3672 = vunpack.c.l.s4 1983009808
      %v3673 = vunpack.c.0.s8 %v3672
      %v3674 = vlaneseq
      %v3675 = vshrl.u32 %v3674, 7
      %v3676 = vsub.s32 %v3673, %v3675
      %v3677 = vrot.slane %v3669, %v3676
      %v3679 = vunpack.c.l.s4 1983009808
      %v3680 = vunpack.c.0.s8 %v3679
      %v3681 = vlaneseq
      %v3682 = vshrl.u32 %v3681, 7
      %v3683 = vsub.s32 %v3680, %v3682
      %v3684 = vrot.slane %v3670, %v3683
      %v3685 = vcombine.low %v3677, %v3684
      %v3686 = vcombine.low %v2961, %v2969
      %v3687 = vcombine.low %v2968, %v2970
      %v3689 = vunpack.c.l.s4 1983009808
      %v3690 = vunpack.c.0.s8 %v3689
      %v3691 = vlaneseq
      %v3692 = vshrl.u32 %v3691, 7
      %v3693 = vsub.s32 %v3690, %v3692
      %v3694 = vrot.slane %v3686, %v3693
      %v3696 = vunpack.c.l.s4 1983009808
      %v3697 = vunpack.c.0.s8 %v3696
      %v3698 = vlaneseq
      %v3699 = vshrl.u32 %v3698, 7
      %v3700 = vsub.s32 %v3697, %v3699
      %v3701 = vrot.slane %v3687, %v3700
      %v3702 = vcombine.low %v3694, %v3701
      %v3704 = vunpack.c.l.s4 1983009808
      %v3705 = vunpack.c.0.s8 %v3704
      %v3706 = vlaneseq
      %v3707 = vshrl.u32 %v3706, 7
      %v3708 = vsub.s32 %v3705, %v3707
      %v3709 = vrot.slane %v2978, %v3708
      %v3710 = vcombine.low %v2986, %v2985
      %v3711 = vcombine.low %v2987, %v2995
      %v3713 = vunpack.c.l.s4 1983009808
      %v3714 = vunpack.c.0.s8 %v3713
      %v3715 = vlaneseq
      %v3716 = vshrl.u32 %v3715, 7
      %v3717 = vsub.s32 %v3714, %v3716
      %v3718 = vrot.slane %v3710, %v3717
      %v3720 = vunpack.c.l.s4 1983009808
      %v3721 = vunpack.c.0.s8 %v3720
      %v3722 = vlaneseq
      %v3723 = vshrl.u32 %v3722, 7
      %v3724 = vsub.s32 %v3721, %v3723
      %v3725 = vrot.slane %v3711, %v3724
      %v3726 = vcombine.low %v3718, %v3725
      %v3727 = vcombine.low %v3003, %v3002
      %v3728 = vcombine.low %v3004, %v3011
      %v3730 = vunpack.c.l.s4 1983009808
      %v3731 = vunpack.c.0.s8 %v3730
      %v3732 = vlaneseq
      %v3733 = vshrl.u32 %v3732, 7
      %v3734 = vsub.s32 %v3731, %v3733
      %v3735 = vrot.slane %v3727, %v3734
      %v3737 = vunpack.c.l.s4 1983009808
      %v3738 = vunpack.c.0.s8 %v3737
      %v3739 = vlaneseq
      %v3740 = vshrl.u32 %v3739, 7
      %v3741 = vsub.s32 %v3738, %v3740
      %v3742 = vrot.slane %v3728, %v3741
      %v3743 = vcombine.low %v3735, %v3742
      %v3745 = vunpack.c.l.s4 1983009808
      %v3746 = vunpack.c.0.s8 %v3745
      %v3747 = vlaneseq
      %v3748 = vshrl.u32 %v3747, 7
      %v3749 = vsub.s32 %v3746, %v3748
      %v3750 = vrot.slane %v3012, %v3749
      %vm3805 = vcmask 261120
      %3806 = vst.msk [vmem:[#allocation2] sm:$0xff] %vm3805, %v3029
      %3807 = vst.msk [vmem:[#allocation2 + $0x8] sm:$0xff] %vm3805, %v3046
      %vm3808 = vcmask 254976
      %3809 = vst.msk [vmem:[#allocation2 + $0x10] sm:$0x3] %vm3808, %v3053
      %3810 = vst.msk [vmem:[#allocation2 + $0x18] sm:$0xff] %vm3805, %v3070
      %3811 = vst.msk [vmem:[#allocation2 + $0x20] sm:$0xff] %vm3805, %v3087
      %3812 = vst.msk [vmem:[#allocation2 + $0x28] sm:$0x3] %vm3808, %v3094
      %3813 = vst.msk [vmem:[#allocation2 + $0x30] sm:$0xff] %vm3805, %v3111
      %3814 = vst.msk [vmem:[#allocation2 + $0x38] sm:$0xff] %vm3805, %v3128
      %3815 = vst.msk [vmem:[#allocation2 + $0x40] sm:$0x3] %vm3808, %v3135
      %3816 = vst.msk [vmem:[#allocation2 + $0x48] sm:$0xff] %vm3805, %v3152
      %3817 = vst.msk [vmem:[#allocation2 + $0x50] sm:$0xff] %vm3805, %v3169
      %3818 = vst.msk [vmem:[#allocation2 + $0x58] sm:$0x3] %vm3808, %v3176
      %3819 = vst.msk [vmem:[#allocation2 + $0x60] sm:$0xff] %vm3805, %v3193
      %3820 = vst.msk [vmem:[#allocation2 + $0x68] sm:$0xff] %vm3805, %v3210
      %3821 = vst.msk [vmem:[#allocation2 + $0x70] sm:$0x3] %vm3808, %v3217
      %3822 = vst.msk [vmem:[#allocation2 + $0x78] sm:$0xff] %vm3805, %v3234
      %3823 = vst.msk [vmem:[#allocation2 + $0x80] sm:$0xff] %vm3805, %v3251
      %3824 = vst.msk [vmem:[#allocation2 + $0x88] sm:$0x3] %vm3808, %v3258
      %3825 = vst.msk [vmem:[#allocation2 + $0x90] sm:$0xff] %vm3805, %v3275
      %3826 = vst.msk [vmem:[#allocation2 + $0x98] sm:$0xff] %vm3805, %v3292
      %3827 = vst.msk [vmem:[#allocation2 + $0xa0] sm:$0x3] %vm3808, %v3299
      %3828 = vst.msk [vmem:[#allocation2 + $0xa8] sm:$0xff] %vm3805, %v3316
      %3829 = vst.msk [vmem:[#allocation2 + $0xb0] sm:$0xff] %vm3805, %v3333
      %3830 = vst.msk [vmem:[#allocation2 + $0xb8] sm:$0x3] %vm3808, %v3340
      %3831 = vst.msk [vmem:[#allocation2 + $0xc0] sm:$0xff] %vm3805, %v3357
      %3832 = vst.msk [vmem:[#allocation2 + $0xc8] sm:$0xff] %vm3805, %v3374
      %3833 = vst.msk [vmem:[#allocation2 + $0xd0] sm:$0x3] %vm3808, %v3381
      %3834 = vst.msk [vmem:[#allocation2 + $0xd8] sm:$0xff] %vm3805, %v3398
      %3835 = vst.msk [vmem:[#allocation2 + $0xe0] sm:$0xff] %vm3805, %v3415
      %3836 = vst.msk [vmem:[#allocation2 + $0xe8] sm:$0x3] %vm3808, %v3422
      %3837 = vst.msk [vmem:[#allocation2 + $0xf0] sm:$0xff] %vm3805, %v3439
      %3838 = vst.msk [vmem:[#allocation2 + $0xf8] sm:$0xff] %vm3805, %v3456
      %3839 = vst.msk [vmem:[#allocation2 + $0x100] sm:$0x3] %vm3808, %v3463
      %3840 = vst.msk [vmem:[#allocation2 + $0x108] sm:$0xff] %vm3805, %v3480
      %3841 = vst.msk [vmem:[#allocation2 + $0x110] sm:$0xff] %vm3805, %v3497
      %3842 = vst.msk [vmem:[#allocation2 + $0x118] sm:$0x3] %vm3808, %v3504
      %3843 = vst.msk [vmem:[#allocation2 + $0x120] sm:$0xff] %vm3805, %v3521
      %3844 = vst.msk [vmem:[#allocation2 + $0x128] sm:$0xff] %vm3805, %v3538
      %3845 = vst.msk [vmem:[#allocation2 + $0x130] sm:$0x3] %vm3808, %v3545
      %3846 = vst.msk [vmem:[#allocation2 + $0x138] sm:$0xff] %vm3805, %v3562
      %3847 = vst.msk [vmem:[#allocation2 + $0x140] sm:$0xff] %vm3805, %v3579
      %3848 = vst.msk [vmem:[#allocation2 + $0x148] sm:$0x3] %vm3808, %v3586
      %3849 = vst.msk [vmem:[#allocation2 + $0x150] sm:$0xff] %vm3805, %v3603
      %3850 = vst.msk [vmem:[#allocation2 + $0x158] sm:$0xff] %vm3805, %v3620
      %3851 = vst.msk [vmem:[#allocation2 + $0x160] sm:$0x3] %vm3808, %v3627
      %3852 = vst.msk [vmem:[#allocation2 + $0x168] sm:$0xff] %vm3805, %v3644
      %3853 = vst.msk [vmem:[#allocation2 + $0x170] sm:$0xff] %vm3805, %v3661
      %3854 = vst.msk [vmem:[#allocation2 + $0x178] sm:$0x3] %vm3808, %v3668
      %3855 = vst.msk [vmem:[#allocation2 + $0x180] sm:$0xff] %vm3805, %v3685
      %3856 = vst.msk [vmem:[#allocation2 + $0x188] sm:$0xff] %vm3805, %v3702
      %3857 = vst.msk [vmem:[#allocation2 + $0x190] sm:$0x3] %vm3808, %v3709
      %3858 = vst.msk [vmem:[#allocation2 + $0x198] sm:$0xff] %vm3805, %v3726
      %3859 = vst.msk [vmem:[#allocation2 + $0x1a0] sm:$0xff] %vm3805, %v3743
      %3860 = vst.msk [vmem:[#allocation2 + $0x1a8] sm:$0x3] %vm3808, %v3750
      %vm3861 = vcmask 253952
      %3862 = vst.msk [vmem:[#allocation2] sm:$0x1] %vm3861, 0.0
      %3863 = vst.msk [vmem:[#allocation2 + $0x18] sm:$0x1] %vm3861, 0.0
      %3864 = vst.msk [vmem:[#allocation2 + $0x30] sm:$0x1] %vm3861, 0.0
      %3865 = vst.msk [vmem:[#allocation2 + $0x48] sm:$0x1] %vm3861, 0.0
      %3866 = vst.msk [vmem:[#allocation2 + $0x60] sm:$0x1] %vm3861, 0.0
      %3867 = vst.msk [vmem:[#allocation2 + $0x78] sm:$0x1] %vm3861, 0.0
      %3868 = vst.msk [vmem:[#allocation2 + $0x90] sm:$0x1] %vm3861, 0.0
      %3869 = vst.msk [vmem:[#allocation2 + $0xa8] sm:$0x1] %vm3861, 0.0
      %3870 = vst.msk [vmem:[#allocation2 + $0xc0] sm:$0x1] %vm3861, 0.0
      %3871 = vst.msk [vmem:[#allocation2 + $0xd8] sm:$0x1] %vm3861, 0.0
      %3872 = vst.msk [vmem:[#allocation2 + $0xf0] sm:$0x1] %vm3861, 0.0
      %3873 = vst.msk [vmem:[#allocation2 + $0x108] sm:$0x1] %vm3861, 0.0
      %3874 = vst.msk [vmem:[#allocation2 + $0x120] sm:$0x1] %vm3861, 0.0
      %3875 = vst.msk [vmem:[#allocation2 + $0x138] sm:$0x1] %vm3861, 0.0
      %3876 = vst.msk [vmem:[#allocation2 + $0x150] sm:$0x1] %vm3861, 0.0
      %3877 = vst.msk [vmem:[#allocation2 + $0x168] sm:$0x1] %vm3861, 0.0
      %3878 = vst.msk [vmem:[#allocation2 + $0x180] sm:$0x1] %vm3861, 0.0
      %3879 = vst.msk [vmem:[#allocation2 + $0x198] sm:$0x1] %vm3861, 0.0
      %3880 = vst.msk [vmem:[#allocation2 + $0x11] sm:$0x1] %vm3861, 0.0
      %3881 = vst.msk [vmem:[#allocation2 + $0x29] sm:$0x1] %vm3861, 0.0
      %3882 = vst.msk [vmem:[#allocation2 + $0x41] sm:$0x1] %vm3861, 0.0
      %3883 = vst.msk [vmem:[#allocation2 + $0x59] sm:$0x1] %vm3861, 0.0
      %3884 = vst.msk [vmem:[#allocation2 + $0x71] sm:$0x1] %vm3861, 0.0
      %3885 = vst.msk [vmem:[#allocation2 + $0x89] sm:$0x1] %vm3861, 0.0
      %3886 = vst.msk [vmem:[#allocation2 + $0xa1] sm:$0x1] %vm3861, 0.0
      %3887 = vst.msk [vmem:[#allocation2 + $0xb9] sm:$0x1] %vm3861, 0.0
      %3888 = vst.msk [vmem:[#allocation2 + $0xd1] sm:$0x1] %vm3861, 0.0
      %3889 = vst.msk [vmem:[#allocation2 + $0xe9] sm:$0x1] %vm3861, 0.0
      %3890 = vst.msk [vmem:[#allocation2 + $0x101] sm:$0x1] %vm3861, 0.0
      %3891 = vst.msk [vmem:[#allocation2 + $0x119] sm:$0x1] %vm3861, 0.0
      %3892 = vst.msk [vmem:[#allocation2 + $0x131] sm:$0x1] %vm3861, 0.0
      %3893 = vst.msk [vmem:[#allocation2 + $0x149] sm:$0x1] %vm3861, 0.0
      %3894 = vst.msk [vmem:[#allocation2 + $0x161] sm:$0x1] %vm3861, 0.0
      %3895 = vst.msk [vmem:[#allocation2 + $0x179] sm:$0x1] %vm3861, 0.0
      %3896 = vst.msk [vmem:[#allocation2 + $0x191] sm:$0x1] %vm3861, 0.0
      %3897 = vst.msk [vmem:[#allocation2 + $0x1a9] sm:$0x1] %vm3861, 0.0
      %p3898 = scmp.eq.s32.totalorder %s23, 0
      // Predicated region
      $region49: #{tpu_custom_call.1} parent=47 // pred_check
        %p3899 = pneg %p3898
      $region50: #{tpu_custom_call.1} parent=47 // pred_check_branch
        %3901 = sbr.rel (%p3899) target = $region52
      $region51: #{tpu_custom_call.1} parent=47 // pred_region
        %3902 = vst.msk [vmem:[#allocation2] sm:$0xff] %vm3805, 0.0
        %3903 = vst.msk [vmem:[#allocation2 + $0x8] sm:$0xff] %vm3805, 0.0
        %3904 = vst.msk [vmem:[#allocation2 + $0x10] sm:$0x3] %vm3808, 0.0
        %s3905 = scalar_lea.vmem [#allocation2], 408
        %3906 = vst.msk [vmem:[%s3905] sm:$0xff] %vm3805, 0.0
        %3907 = vst.msk [vmem:[%s3905 + $0x8] sm:$0xff] %vm3805, 0.0
        %3908 = vst.msk [vmem:[%s3905 + $0x10] sm:$0x3] %vm3808, 0.0
      $region52: #{tpu_custom_call.1} parent=47 // pred_fallthru
        _
      %v3909 = vld [vmem:[#allocation2] sm:$0xff]
      %v3910 = vld [vmem:[#allocation2 + $0x8] sm:$0xff]
      %v3911 = vld [vmem:[#allocation2 + $0x10] sm:$0x3]
      %v3912 = vld [vmem:[#allocation2 + $0x18] sm:$0xff]
      %v3913 = vld [vmem:[#allocation2 + $0x20] sm:$0xff]
      %v3914 = vld [vmem:[#allocation2 + $0x28] sm:$0x3]
      %v3915 = vld [vmem:[#allocation2 + $0x30] sm:$0xff]
      %v3916 = vld [vmem:[#allocation2 + $0x38] sm:$0xff]
      %v3917 = vld [vmem:[#allocation2 + $0x40] sm:$0x3]
      %v3918 = vld [vmem:[#allocation2 + $0x48] sm:$0xff]
      %v3919 = vld [vmem:[#allocation2 + $0x50] sm:$0xff]
      %v3920 = vld [vmem:[#allocation2 + $0x58] sm:$0x3]
      %v3921 = vld [vmem:[#allocation2 + $0x60] sm:$0xff]
      %v3922 = vld [vmem:[#allocation2 + $0x68] sm:$0xff]
      %v3923 = vld [vmem:[#allocation2 + $0x70] sm:$0x3]
      %v3924 = vld [vmem:[#allocation2 + $0x78] sm:$0xff]
      %v3925 = vld [vmem:[#allocation2 + $0x80] sm:$0xff]
      %v3926 = vld [vmem:[#allocation2 + $0x88] sm:$0x3]
      %v3927 = vld [vmem:[#allocation2 + $0x90] sm:$0xff]
      %v3928 = vld [vmem:[#allocation2 + $0x98] sm:$0xff]
      %v3929 = vld [vmem:[#allocation2 + $0xa0] sm:$0x3]
      %v3930 = vld [vmem:[#allocation2 + $0xa8] sm:$0xff]
      %v3931 = vld [vmem:[#allocation2 + $0xb0] sm:$0xff]
      %v3932 = vld [vmem:[#allocation2 + $0xb8] sm:$0x3]
      %v3933 = vld [vmem:[#allocation2 + $0xc0] sm:$0xff]
      %v3934 = vld [vmem:[#allocation2 + $0xc8] sm:$0xff]
      %v3935 = vld [vmem:[#allocation2 + $0xd0] sm:$0x3]
      %v3936 = vld [vmem:[#allocation2 + $0xd8] sm:$0xff]
      %v3937 = vld [vmem:[#allocation2 + $0xe0] sm:$0xff]
      %v3938 = vld [vmem:[#allocation2 + $0xe8] sm:$0x3]
      %v3939 = vld [vmem:[#allocation2 + $0xf0] sm:$0xff]
      %v3940 = vld [vmem:[#allocation2 + $0xf8] sm:$0xff]
      %v3941 = vld [vmem:[#allocation2 + $0x100] sm:$0x3]
      %v3942 = vld [vmem:[#allocation2 + $0x108] sm:$0xff]
      %v3943 = vld [vmem:[#allocation2 + $0x110] sm:$0xff]
      %v3944 = vld [vmem:[#allocation2 + $0x118] sm:$0x3]
      %v3945 = vld [vmem:[#allocation2 + $0x120] sm:$0xff]
      %v3946 = vld [vmem:[#allocation2 + $0x128] sm:$0xff]
      %v3947 = vld [vmem:[#allocation2 + $0x130] sm:$0x3]
      %v3948 = vld [vmem:[#allocation2 + $0x138] sm:$0xff]
      %v3949 = vld [vmem:[#allocation2 + $0x140] sm:$0xff]
      %v3950 = vld [vmem:[#allocation2 + $0x148] sm:$0x3]
      %v3951 = vld [vmem:[#allocation2 + $0x150] sm:$0xff]
      %v3952 = vld [vmem:[#allocation2 + $0x158] sm:$0xff]
      %v3953 = vld [vmem:[#allocation2 + $0x160] sm:$0x3]
      %v3954 = vld [vmem:[#allocation2 + $0x168] sm:$0xff]
      %v3955 = vld [vmem:[#allocation2 + $0x170] sm:$0xff]
      %v3956 = vld [vmem:[#allocation2 + $0x178] sm:$0x3]
      %v3957 = vld [vmem:[%s3] sm:$0x1]
      %v3958 = vlaneseq
      %v3959 = vshrl.u32 %v3958, 7
      %v3960 = vsub.s32 0, %v3959
      %v3961 = vrot.slane %v3957, %v3960
      %v3962 = vmul.f32 %v3909, %v3961
      %v3963 = vmul.f32 %v3910, %v3961
      %v3964 = vmul.f32 %v3912, %v3961
      %v3965 = vmul.f32 %v3913, %v3961
      %v3966 = vmul.f32 %v3915, %v3961
      %v3967 = vmul.f32 %v3916, %v3961
      %v3968 = vmul.f32 %v3918, %v3961
      %v3969 = vmul.f32 %v3919, %v3961
      %v3970 = vmul.f32 %v3921, %v3961
      %v3971 = vmul.f32 %v3922, %v3961
      %v3972 = vmul.f32 %v3924, %v3961
      %v3973 = vmul.f32 %v3925, %v3961
      %v3974 = vmul.f32 %v3927, %v3961
      %v3975 = vmul.f32 %v3928, %v3961
      %v3976 = vmul.f32 %v3930, %v3961
      %v3977 = vmul.f32 %v3931, %v3961
      %v3978 = vmul.f32 %v3933, %v3961
      %v3979 = vmul.f32 %v3934, %v3961
      %v3980 = vmul.f32 %v3936, %v3961
      %v3981 = vmul.f32 %v3937, %v3961
      %v3982 = vmul.f32 %v3939, %v3961
      %v3983 = vmul.f32 %v3940, %v3961
      %v3984 = vmul.f32 %v3942, %v3961
      %v3985 = vmul.f32 %v3943, %v3961
      %v3986 = vmul.f32 %v3945, %v3961
      %v3987 = vmul.f32 %v3946, %v3961
      %v3988 = vmul.f32 %v3948, %v3961
      %v3989 = vmul.f32 %v3949, %v3961
      %v3990 = vmul.f32 %v3951, %v3961
      %v3991 = vmul.f32 %v3952, %v3961
      %v3992 = vmul.f32 %v3954, %v3961
      %v3993 = vmul.f32 %v3955, %v3961
      %v3994 = vadd.f32 %v3962, 0.0
      %v3995 = vadd.f32 %v3963, 0.0
      %v3996 = vadd.f32 %v3964, 0.0
      %v3997 = vadd.f32 %v3965, 0.0
      %v3998 = vadd.f32 %v3966, 0.0
      %v3999 = vadd.f32 %v3967, 0.0
      %v4000 = vadd.f32 %v3968, 0.0
      %v4001 = vadd.f32 %v3969, 0.0
      %v4002 = vadd.f32 %v3970, 0.0
      %v4003 = vadd.f32 %v3971, 0.0
      %v4004 = vadd.f32 %v3972, 0.0
      %v4005 = vadd.f32 %v3973, 0.0
      %v4006 = vadd.f32 %v3974, 0.0
      %v4007 = vadd.f32 %v3975, 0.0
      %v4008 = vadd.f32 %v3976, 0.0
      %v4009 = vadd.f32 %v3977, 0.0
      %v4010 = vadd.f32 %v3978, 0.0
      %v4011 = vadd.f32 %v3979, 0.0
      %v4012 = vadd.f32 %v3980, 0.0
      %v4013 = vadd.f32 %v3981, 0.0
      %v4014 = vadd.f32 %v3982, 0.0
      %v4015 = vadd.f32 %v3983, 0.0
      %v4016 = vadd.f32 %v3984, 0.0
      %v4017 = vadd.f32 %v3985, 0.0
      %v4018 = vadd.f32 %v3986, 0.0
      %v4019 = vadd.f32 %v3987, 0.0
      %v4020 = vadd.f32 %v3988, 0.0
      %v4021 = vadd.f32 %v3989, 0.0
      %v4022 = vadd.f32 %v3990, 0.0
      %v4023 = vadd.f32 %v3991, 0.0
      %v4024 = vadd.f32 %v3992, 0.0
      %v4025 = vadd.f32 %v3993, 0.0
      %v4026 = vld [vmem:[%s3 + $0x1] sm:$0x1]
      %v4027 = vlaneseq
      %v4028 = vshrl.u32 %v4027, 7
      %v4029 = vsub.s32 0, %v4028
      %v4030 = vrot.slane %v4026, %v4029
      %v4031 = vmul.f32 %v3909, %v4030
      %v4032 = vmul.f32 %v3910, %v4030
      %v4033 = vmul.f32 %v3911, %v4030
      %v4034 = vmul.f32 %v3912, %v4030
      %v4035 = vmul.f32 %v3913, %v4030
      %v4036 = vmul.f32 %v3914, %v4030
      %v4037 = vmul.f32 %v3915, %v4030
      %v4038 = vmul.f32 %v3916, %v4030
      %v4039 = vmul.f32 %v3917, %v4030
      %v4040 = vmul.f32 %v3918, %v4030
      %v4041 = vmul.f32 %v3919, %v4030
      %v4042 = vmul.f32 %v3920, %v4030
      %v4043 = vmul.f32 %v3921, %v4030
      %v4044 = vmul.f32 %v3922, %v4030
      %v4045 = vmul.f32 %v3923, %v4030
      %v4046 = vmul.f32 %v3924, %v4030
      %v4047 = vmul.f32 %v3925, %v4030
      %v4048 = vmul.f32 %v3926, %v4030
      %v4049 = vmul.f32 %v3927, %v4030
      %v4050 = vmul.f32 %v3928, %v4030
      %v4051 = vmul.f32 %v3929, %v4030
      %v4052 = vmul.f32 %v3930, %v4030
      %v4053 = vmul.f32 %v3931, %v4030
      %v4054 = vmul.f32 %v3932, %v4030
      %v4055 = vmul.f32 %v3933, %v4030
      %v4056 = vmul.f32 %v3934, %v4030
      %v4057 = vmul.f32 %v3935, %v4030
      %v4058 = vmul.f32 %v3936, %v4030
      %v4059 = vmul.f32 %v3937, %v4030
      %v4060 = vmul.f32 %v3938, %v4030
      %v4061 = vmul.f32 %v3939, %v4030
      %v4062 = vmul.f32 %v3940, %v4030
      %v4063 = vmul.f32 %v3941, %v4030
      %v4064 = vmul.f32 %v3942, %v4030
      %v4065 = vmul.f32 %v3943, %v4030
      %v4066 = vmul.f32 %v3944, %v4030
      %v4067 = vmul.f32 %v3945, %v4030
      %v4068 = vmul.f32 %v3946, %v4030
      %v4069 = vmul.f32 %v3947, %v4030
      %v4070 = vmul.f32 %v3948, %v4030
      %v4071 = vmul.f32 %v3949, %v4030
      %v4072 = vmul.f32 %v3950, %v4030
      %v4073 = vmul.f32 %v3951, %v4030
      %v4074 = vmul.f32 %v3952, %v4030
      %v4075 = vmul.f32 %v3953, %v4030
      %v4076 = vmul.f32 %v3954, %v4030
      %v4077 = vmul.f32 %v3955, %v4030
      %v4078 = vmul.f32 %v3956, %v4030
      %vm4127 = vcmask 1046528
      %v4128 = vrot.slane %v4031, 1
      %v4129 = vrot.slane %v4032, 1
      %v4130 = vsel %vm4127, %v4128, %v4129
      %v4131 = vrot.slane %v4033, 1
      %v4132 = vsel %vm4127, %v4129, %v4131
      %v4133 = vrot.slane %v4034, 1
      %v4134 = vrot.slane %v4035, 1
      %v4135 = vsel %vm4127, %v4133, %v4134
      %v4136 = vrot.slane %v4036, 1
      %v4137 = vsel %vm4127, %v4134, %v4136
      %v4138 = vrot.slane %v4037, 1
      %v4139 = vrot.slane %v4038, 1
      %v4140 = vsel %vm4127, %v4138, %v4139
      %v4141 = vrot.slane %v4039, 1
      %v4142 = vsel %vm4127, %v4139, %v4141
      %v4143 = vrot.slane %v4040, 1
      %v4144 = vrot.slane %v4041, 1
      %v4145 = vsel %vm4127, %v4143, %v4144
      %v4146 = vrot.slane %v4042, 1
      %v4147 = vsel %vm4127, %v4144, %v4146
      %v4148 = vrot.slane %v4043, 1
      %v4149 = vrot.slane %v4044, 1
      %v4150 = vsel %vm4127, %v4148, %v4149
      %v4151 = vrot.slane %v4045, 1
      %v4152 = vsel %vm4127, %v4149, %v4151
      %v4153 = vrot.slane %v4046, 1
      %v4154 = vrot.slane %v4047, 1
      %v4155 = vsel %vm4127, %v4153, %v4154
      %v4156 = vrot.slane %v4048, 1
      %v4157 = vsel %vm4127, %v4154, %v4156
      %v4158 = vrot.slane %v4049, 1
      %v4159 = vrot.slane %v4050, 1
      %v4160 = vsel %vm4127, %v4158, %v4159
      %v4161 = vrot.slane %v4051, 1
      %v4162 = vsel %vm4127, %v4159, %v4161
      %v4163 = vrot.slane %v4052, 1
      %v4164 = vrot.slane %v4053, 1
      %v4165 = vsel %vm4127, %v4163, %v4164
      %v4166 = vrot.slane %v4054, 1
      %v4167 = vsel %vm4127, %v4164, %v4166
      %v4168 = vrot.slane %v4055, 1
      %v4169 = vrot.slane %v4056, 1
      %v4170 = vsel %vm4127, %v4168, %v4169
      %v4171 = vrot.slane %v4057, 1
      %v4172 = vsel %vm4127, %v4169, %v4171
      %v4173 = vrot.slane %v4058, 1
      %v4174 = vrot.slane %v4059, 1
      %v4175 = vsel %vm4127, %v4173, %v4174
      %v4176 = vrot.slane %v4060, 1
      %v4177 = vsel %vm4127, %v4174, %v4176
      %v4178 = vrot.slane %v4061, 1
      %v4179 = vrot.slane %v4062, 1
      %v4180 = vsel %vm4127, %v4178, %v4179
      %v4181 = vrot.slane %v4063, 1
      %v4182 = vsel %vm4127, %v4179, %v4181
      %v4183 = vrot.slane %v4064, 1
      %v4184 = vrot.slane %v4065, 1
      %v4185 = vsel %vm4127, %v4183, %v4184
      %v4186 = vrot.slane %v4066, 1
      %v4187 = vsel %vm4127, %v4184, %v4186
      %v4188 = vrot.slane %v4067, 1
      %v4189 = vrot.slane %v4068, 1
      %v4190 = vsel %vm4127, %v4188, %v4189
      %v4191 = vrot.slane %v4069, 1
      %v4192 = vsel %vm4127, %v4189, %v4191
      %v4193 = vrot.slane %v4070, 1
      %v4194 = vrot.slane %v4071, 1
      %v4195 = vsel %vm4127, %v4193, %v4194
      %v4196 = vrot.slane %v4072, 1
      %v4197 = vsel %vm4127, %v4194, %v4196
      %v4198 = vrot.slane %v4073, 1
      %v4199 = vrot.slane %v4074, 1
      %v4200 = vsel %vm4127, %v4198, %v4199
      %v4201 = vrot.slane %v4075, 1
      %v4202 = vsel %vm4127, %v4199, %v4201
      %v4203 = vrot.slane %v4076, 1
      %v4204 = vrot.slane %v4077, 1
      %v4205 = vsel %vm4127, %v4203, %v4204
      %v4206 = vrot.slane %v4078, 1
      %v4207 = vsel %vm4127, %v4204, %v4206
      %v4240 = vadd.f32 %v3994, %v4130
      %v4241 = vadd.f32 %v3995, %v4132
      %v4242 = vadd.f32 %v3996, %v4135
      %v4243 = vadd.f32 %v3997, %v4137
      %v4244 = vadd.f32 %v3998, %v4140
      %v4245 = vadd.f32 %v3999, %v4142
      %v4246 = vadd.f32 %v4000, %v4145
      %v4247 = vadd.f32 %v4001, %v4147
      %v4248 = vadd.f32 %v4002, %v4150
      %v4249 = vadd.f32 %v4003, %v4152
      %v4250 = vadd.f32 %v4004, %v4155
      %v4251 = vadd.f32 %v4005, %v4157
      %v4252 = vadd.f32 %v4006, %v4160
      %v4253 = vadd.f32 %v4007, %v4162
      %v4254 = vadd.f32 %v4008, %v4165
      %v4255 = vadd.f32 %v4009, %v4167
      %v4256 = vadd.f32 %v4010, %v4170
      %v4257 = vadd.f32 %v4011, %v4172
      %v4258 = vadd.f32 %v4012, %v4175
      %v4259 = vadd.f32 %v4013, %v4177
      %v4260 = vadd.f32 %v4014, %v4180
      %v4261 = vadd.f32 %v4015, %v4182
      %v4262 = vadd.f32 %v4016, %v4185
      %v4263 = vadd.f32 %v4017, %v4187
      %v4264 = vadd.f32 %v4018, %v4190
      %v4265 = vadd.f32 %v4019, %v4192
      %v4266 = vadd.f32 %v4020, %v4195
      %v4267 = vadd.f32 %v4021, %v4197
      %v4268 = vadd.f32 %v4022, %v4200
      %v4269 = vadd.f32 %v4023, %v4202
      %v4270 = vadd.f32 %v4024, %v4205
      %v4271 = vadd.f32 %v4025, %v4207
      %v4272 = vld [vmem:[%s3 + $0x2] sm:$0x1]
      %v4273 = vlaneseq
      %v4274 = vshrl.u32 %v4273, 7
      %v4275 = vsub.s32 0, %v4274
      %v4276 = vrot.slane %v4272, %v4275
      %v4277 = vmul.f32 %v3909, %v4276
      %v4278 = vmul.f32 %v3910, %v4276
      %v4279 = vmul.f32 %v3911, %v4276
      %v4280 = vmul.f32 %v3912, %v4276
      %v4281 = vmul.f32 %v3913, %v4276
      %v4282 = vmul.f32 %v3914, %v4276
      %v4283 = vmul.f32 %v3915, %v4276
      %v4284 = vmul.f32 %v3916, %v4276
      %v4285 = vmul.f32 %v3917, %v4276
      %v4286 = vmul.f32 %v3918, %v4276
      %v4287 = vmul.f32 %v3919, %v4276
      %v4288 = vmul.f32 %v3920, %v4276
      %v4289 = vmul.f32 %v3921, %v4276
      %v4290 = vmul.f32 %v3922, %v4276
      %v4291 = vmul.f32 %v3923, %v4276
      %v4292 = vmul.f32 %v3924, %v4276
      %v4293 = vmul.f32 %v3925, %v4276
      %v4294 = vmul.f32 %v3926, %v4276
      %v4295 = vmul.f32 %v3927, %v4276
      %v4296 = vmul.f32 %v3928, %v4276
      %v4297 = vmul.f32 %v3929, %v4276
      %v4298 = vmul.f32 %v3930, %v4276
      %v4299 = vmul.f32 %v3931, %v4276
      %v4300 = vmul.f32 %v3932, %v4276
      %v4301 = vmul.f32 %v3933, %v4276
      %v4302 = vmul.f32 %v3934, %v4276
      %v4303 = vmul.f32 %v3935, %v4276
      %v4304 = vmul.f32 %v3936, %v4276
      %v4305 = vmul.f32 %v3937, %v4276
      %v4306 = vmul.f32 %v3938, %v4276
      %v4307 = vmul.f32 %v3939, %v4276
      %v4308 = vmul.f32 %v3940, %v4276
      %v4309 = vmul.f32 %v3941, %v4276
      %v4310 = vmul.f32 %v3942, %v4276
      %v4311 = vmul.f32 %v3943, %v4276
      %v4312 = vmul.f32 %v3944, %v4276
      %v4313 = vmul.f32 %v3945, %v4276
      %v4314 = vmul.f32 %v3946, %v4276
      %v4315 = vmul.f32 %v3947, %v4276
      %v4316 = vmul.f32 %v3948, %v4276
      %v4317 = vmul.f32 %v3949, %v4276
      %v4318 = vmul.f32 %v3950, %v4276
      %v4319 = vmul.f32 %v3951, %v4276
      %v4320 = vmul.f32 %v3952, %v4276
      %v4321 = vmul.f32 %v3953, %v4276
      %v4322 = vmul.f32 %v3954, %v4276
      %v4323 = vmul.f32 %v3955, %v4276
      %v4324 = vmul.f32 %v3956, %v4276
      %vm4373 = vcmask 1045504
      %v4374 = vrot.slane %v4277, 2
      %v4375 = vrot.slane %v4278, 2
      %v4376 = vsel %vm4373, %v4374, %v4375
      %v4377 = vrot.slane %v4279, 2
      %v4378 = vsel %vm4373, %v4375, %v4377
      %v4379 = vrot.slane %v4280, 2
      %v4380 = vrot.slane %v4281, 2
      %v4381 = vsel %vm4373, %v4379, %v4380
      %v4382 = vrot.slane %v4282, 2
      %v4383 = vsel %vm4373, %v4380, %v4382
      %v4384 = vrot.slane %v4283, 2
      %v4385 = vrot.slane %v4284, 2
      %v4386 = vsel %vm4373, %v4384, %v4385
      %v4387 = vrot.slane %v4285, 2
      %v4388 = vsel %vm4373, %v4385, %v4387
      %v4389 = vrot.slane %v4286, 2
      %v4390 = vrot.slane %v4287, 2
      %v4391 = vsel %vm4373, %v4389, %v4390
      %v4392 = vrot.slane %v4288, 2
      %v4393 = vsel %vm4373, %v4390, %v4392
      %v4394 = vrot.slane %v4289, 2
      %v4395 = vrot.slane %v4290, 2
      %v4396 = vsel %vm4373, %v4394, %v4395
      %v4397 = vrot.slane %v4291, 2
      %v4398 = vsel %vm4373, %v4395, %v4397
      %v4399 = vrot.slane %v4292, 2
      %v4400 = vrot.slane %v4293, 2
      %v4401 = vsel %vm4373, %v4399, %v4400
      %v4402 = vrot.slane %v4294, 2
      %v4403 = vsel %vm4373, %v4400, %v4402
      %v4404 = vrot.slane %v4295, 2
      %v4405 = vrot.slane %v4296, 2
      %v4406 = vsel %vm4373, %v4404, %v4405
      %v4407 = vrot.slane %v4297, 2
      %v4408 = vsel %vm4373, %v4405, %v4407
      %v4409 = vrot.slane %v4298, 2
      %v4410 = vrot.slane %v4299, 2
      %v4411 = vsel %vm4373, %v4409, %v4410
      %v4412 = vrot.slane %v4300, 2
      %v4413 = vsel %vm4373, %v4410, %v4412
      %v4414 = vrot.slane %v4301, 2
      %v4415 = vrot.slane %v4302, 2
      %v4416 = vsel %vm4373, %v4414, %v4415
      %v4417 = vrot.slane %v4303, 2
      %v4418 = vsel %vm4373, %v4415, %v4417
      %v4419 = vrot.slane %v4304, 2
      %v4420 = vrot.slane %v4305, 2
      %v4421 = vsel %vm4373, %v4419, %v4420
      %v4422 = vrot.slane %v4306, 2
      %v4423 = vsel %vm4373, %v4420, %v4422
      %v4424 = vrot.slane %v4307, 2
      %v4425 = vrot.slane %v4308, 2
      %v4426 = vsel %vm4373, %v4424, %v4425
      %v4427 = vrot.slane %v4309, 2
      %v4428 = vsel %vm4373, %v4425, %v4427
      %v4429 = vrot.slane %v4310, 2
      %v4430 = vrot.slane %v4311, 2
      %v4431 = vsel %vm4373, %v4429, %v4430
      %v4432 = vrot.slane %v4312, 2
      %v4433 = vsel %vm4373, %v4430, %v4432
      %v4434 = vrot.slane %v4313, 2
      %v4435 = vrot.slane %v4314, 2
      %v4436 = vsel %vm4373, %v4434, %v4435
      %v4437 = vrot.slane %v4315, 2
      %v4438 = vsel %vm4373, %v4435, %v4437
      %v4439 = vrot.slane %v4316, 2
      %v4440 = vrot.slane %v4317, 2
      %v4441 = vsel %vm4373, %v4439, %v4440
      %v4442 = vrot.slane %v4318, 2
      %v4443 = vsel %vm4373, %v4440, %v4442
      %v4444 = vrot.slane %v4319, 2
      %v4445 = vrot.slane %v4320, 2
      %v4446 = vsel %vm4373, %v4444, %v4445
      %v4447 = vrot.slane %v4321, 2
      %v4448 = vsel %vm4373, %v4445, %v4447
      %v4449 = vrot.slane %v4322, 2
      %v4450 = vrot.slane %v4323, 2
      %v4451 = vsel %vm4373, %v4449, %v4450
      %v4452 = vrot.slane %v4324, 2
      %v4453 = vsel %vm4373, %v4450, %v4452
      %v4486 = vadd.f32 %v4240, %v4376
      %v4487 = vadd.f32 %v4241, %v4378
      %v4488 = vadd.f32 %v4242, %v4381
      %v4489 = vadd.f32 %v4243, %v4383
      %v4490 = vadd.f32 %v4244, %v4386
      %v4491 = vadd.f32 %v4245, %v4388
      %v4492 = vadd.f32 %v4246, %v4391
      %v4493 = vadd.f32 %v4247, %v4393
      %v4494 = vadd.f32 %v4248, %v4396
      %v4495 = vadd.f32 %v4249, %v4398
      %v4496 = vadd.f32 %v4250, %v4401
      %v4497 = vadd.f32 %v4251, %v4403
      %v4498 = vadd.f32 %v4252, %v4406
      %v4499 = vadd.f32 %v4253, %v4408
      %v4500 = vadd.f32 %v4254, %v4411
      %v4501 = vadd.f32 %v4255, %v4413
      %v4502 = vadd.f32 %v4256, %v4416
      %v4503 = vadd.f32 %v4257, %v4418
      %v4504 = vadd.f32 %v4258, %v4421
      %v4505 = vadd.f32 %v4259, %v4423
      %v4506 = vadd.f32 %v4260, %v4426
      %v4507 = vadd.f32 %v4261, %v4428
      %v4508 = vadd.f32 %v4262, %v4431
      %v4509 = vadd.f32 %v4263, %v4433
      %v4510 = vadd.f32 %v4264, %v4436
      %v4511 = vadd.f32 %v4265, %v4438
      %v4512 = vadd.f32 %v4266, %v4441
      %v4513 = vadd.f32 %v4267, %v4443
      %v4514 = vadd.f32 %v4268, %v4446
      %v4515 = vadd.f32 %v4269, %v4448
      %v4516 = vadd.f32 %v4270, %v4451
      %v4517 = vadd.f32 %v4271, %v4453
      %s4518 = scalar_lea.vmem [#allocation2], 24
      %v4519 = vld [vmem:[%s4518] sm:$0xff]
      %v4520 = vld [vmem:[%s4518 + $0x8] sm:$0xff]
      %v4521 = vld [vmem:[%s4518 + $0x10] sm:$0x3]
      %v4522 = vld [vmem:[%s4518 + $0x18] sm:$0xff]
      %v4523 = vld [vmem:[%s4518 + $0x20] sm:$0xff]
      %v4524 = vld [vmem:[%s4518 + $0x28] sm:$0x3]
      %v4525 = vld [vmem:[%s4518 + $0x30] sm:$0xff]
      %v4526 = vld [vmem:[%s4518 + $0x38] sm:$0xff]
      %v4527 = vld [vmem:[%s4518 + $0x40] sm:$0x3]
      %v4528 = vld [vmem:[%s4518 + $0x48] sm:$0xff]
      %v4529 = vld [vmem:[%s4518 + $0x50] sm:$0xff]
      %v4530 = vld [vmem:[%s4518 + $0x58] sm:$0x3]
      %v4531 = vld [vmem:[%s4518 + $0x60] sm:$0xff]
      %v4532 = vld [vmem:[%s4518 + $0x68] sm:$0xff]
      %v4533 = vld [vmem:[%s4518 + $0x70] sm:$0x3]
      %v4534 = vld [vmem:[%s4518 + $0x78] sm:$0xff]
      %v4535 = vld [vmem:[%s4518 + $0x80] sm:$0xff]
      %v4536 = vld [vmem:[%s4518 + $0x88] sm:$0x3]
      %v4537 = vld [vmem:[%s4518 + $0x90] sm:$0xff]
      %v4538 = vld [vmem:[%s4518 + $0x98] sm:$0xff]
      %v4539 = vld [vmem:[%s4518 + $0xa0] sm:$0x3]
      %v4540 = vld [vmem:[%s4518 + $0xa8] sm:$0xff]
      %v4541 = vld [vmem:[%s4518 + $0xb0] sm:$0xff]
      %v4542 = vld [vmem:[%s4518 + $0xb8] sm:$0x3]
      %v4543 = vld [vmem:[%s4518 + $0xc0] sm:$0xff]
      %v4544 = vld [vmem:[%s4518 + $0xc8] sm:$0xff]
      %v4545 = vld [vmem:[%s4518 + $0xd0] sm:$0x3]
      %v4546 = vld [vmem:[%s4518 + $0xd8] sm:$0xff]
      %v4547 = vld [vmem:[%s4518 + $0xe0] sm:$0xff]
      %v4548 = vld [vmem:[%s4518 + $0xe8] sm:$0x3]
      %v4549 = vld [vmem:[%s4518 + $0xf0] sm:$0xff]
      %v4550 = vld [vmem:[%s4518 + $0xf8] sm:$0xff]
      %v4551 = vld [vmem:[%s4518 + $0x100] sm:$0x3]
      %v4552 = vld [vmem:[%s4518 + $0x108] sm:$0xff]
      %v4553 = vld [vmem:[%s4518 + $0x110] sm:$0xff]
      %v4554 = vld [vmem:[%s4518 + $0x118] sm:$0x3]
      %v4555 = vld [vmem:[%s4518 + $0x120] sm:$0xff]
      %v4556 = vld [vmem:[%s4518 + $0x128] sm:$0xff]
      %v4557 = vld [vmem:[%s4518 + $0x130] sm:$0x3]
      %v4558 = vld [vmem:[%s4518 + $0x138] sm:$0xff]
      %v4559 = vld [vmem:[%s4518 + $0x140] sm:$0xff]
      %v4560 = vld [vmem:[%s4518 + $0x148] sm:$0x3]
      %v4561 = vld [vmem:[%s4518 + $0x150] sm:$0xff]
      %v4562 = vld [vmem:[%s4518 + $0x158] sm:$0xff]
      %v4563 = vld [vmem:[%s4518 + $0x160] sm:$0x3]
      %v4564 = vld [vmem:[%s4518 + $0x168] sm:$0xff]
      %v4565 = vld [vmem:[%s4518 + $0x170] sm:$0xff]
      %v4566 = vld [vmem:[%s4518 + $0x178] sm:$0x3]
      %v4567 = vld [vmem:[%s3 + $0x3] sm:$0x1]
      %v4568 = vlaneseq
      %v4569 = vshrl.u32 %v4568, 7
      %v4570 = vsub.s32 0, %v4569
      %v4571 = vrot.slane %v4567, %v4570
      %v4572 = vmul.f32 %v4519, %v4571
      %v4573 = vmul.f32 %v4520, %v4571
      %v4574 = vmul.f32 %v4522, %v4571
      %v4575 = vmul.f32 %v4523, %v4571
      %v4576 = vmul.f32 %v4525, %v4571
      %v4577 = vmul.f32 %v4526, %v4571
      %v4578 = vmul.f32 %v4528, %v4571
      %v4579 = vmul.f32 %v4529, %v4571
      %v4580 = vmul.f32 %v4531, %v4571
      %v4581 = vmul.f32 %v4532, %v4571
      %v4582 = vmul.f32 %v4534, %v4571
      %v4583 = vmul.f32 %v4535, %v4571
      %v4584 = vmul.f32 %v4537, %v4571
      %v4585 = vmul.f32 %v4538, %v4571
      %v4586 = vmul.f32 %v4540, %v4571
      %v4587 = vmul.f32 %v4541, %v4571
      %v4588 = vmul.f32 %v4543, %v4571
      %v4589 = vmul.f32 %v4544, %v4571
      %v4590 = vmul.f32 %v4546, %v4571
      %v4591 = vmul.f32 %v4547, %v4571
      %v4592 = vmul.f32 %v4549, %v4571
      %v4593 = vmul.f32 %v4550, %v4571
      %v4594 = vmul.f32 %v4552, %v4571
      %v4595 = vmul.f32 %v4553, %v4571
      %v4596 = vmul.f32 %v4555, %v4571
      %v4597 = vmul.f32 %v4556, %v4571
      %v4598 = vmul.f32 %v4558, %v4571
      %v4599 = vmul.f32 %v4559, %v4571
      %v4600 = vmul.f32 %v4561, %v4571
      %v4601 = vmul.f32 %v4562, %v4571
      %v4602 = vmul.f32 %v4564, %v4571
      %v4603 = vmul.f32 %v4565, %v4571
      %v4604 = vadd.f32 %v4486, %v4572
      %v4605 = vadd.f32 %v4487, %v4573
      %v4606 = vadd.f32 %v4488, %v4574
      %v4607 = vadd.f32 %v4489, %v4575
      %v4608 = vadd.f32 %v4490, %v4576
      %v4609 = vadd.f32 %v4491, %v4577
      %v4610 = vadd.f32 %v4492, %v4578
      %v4611 = vadd.f32 %v4493, %v4579
      %v4612 = vadd.f32 %v4494, %v4580
      %v4613 = vadd.f32 %v4495, %v4581
      %v4614 = vadd.f32 %v4496, %v4582
      %v4615 = vadd.f32 %v4497, %v4583
      %v4616 = vadd.f32 %v4498, %v4584
      %v4617 = vadd.f32 %v4499, %v4585
      %v4618 = vadd.f32 %v4500, %v4586
      %v4619 = vadd.f32 %v4501, %v4587
      %v4620 = vadd.f32 %v4502, %v4588
      %v4621 = vadd.f32 %v4503, %v4589
      %v4622 = vadd.f32 %v4504, %v4590
      %v4623 = vadd.f32 %v4505, %v4591
      %v4624 = vadd.f32 %v4506, %v4592
      %v4625 = vadd.f32 %v4507, %v4593
      %v4626 = vadd.f32 %v4508, %v4594
      %v4627 = vadd.f32 %v4509, %v4595
      %v4628 = vadd.f32 %v4510, %v4596
      %v4629 = vadd.f32 %v4511, %v4597
      %v4630 = vadd.f32 %v4512, %v4598
      %v4631 = vadd.f32 %v4513, %v4599
      %v4632 = vadd.f32 %v4514, %v4600
      %v4633 = vadd.f32 %v4515, %v4601
      %v4634 = vadd.f32 %v4516, %v4602
      %v4635 = vadd.f32 %v4517, %v4603
      %v4636 = vld [vmem:[%s3 + $0x4] sm:$0x1]
      %v4637 = vlaneseq
      %v4638 = vshrl.u32 %v4637, 7
      %v4639 = vsub.s32 0, %v4638
      %v4640 = vrot.slane %v4636, %v4639
      %v4641 = vmul.f32 %v4519, %v4640
      %v4642 = vmul.f32 %v4520, %v4640
      %v4643 = vmul.f32 %v4521, %v4640
      %v4644 = vmul.f32 %v4522, %v4640
      %v4645 = vmul.f32 %v4523, %v4640
      %v4646 = vmul.f32 %v4524, %v4640
      %v4647 = vmul.f32 %v4525, %v4640
      %v4648 = vmul.f32 %v4526, %v4640
      %v4649 = vmul.f32 %v4527, %v4640
      %v4650 = vmul.f32 %v4528, %v4640
      %v4651 = vmul.f32 %v4529, %v4640
      %v4652 = vmul.f32 %v4530, %v4640
      %v4653 = vmul.f32 %v4531, %v4640
      %v4654 = vmul.f32 %v4532, %v4640
      %v4655 = vmul.f32 %v4533, %v4640
      %v4656 = vmul.f32 %v4534, %v4640
      %v4657 = vmul.f32 %v4535, %v4640
      %v4658 = vmul.f32 %v4536, %v4640
      %v4659 = vmul.f32 %v4537, %v4640
      %v4660 = vmul.f32 %v4538, %v4640
      %v4661 = vmul.f32 %v4539, %v4640
      %v4662 = vmul.f32 %v4540, %v4640
      %v4663 = vmul.f32 %v4541, %v4640
      %v4664 = vmul.f32 %v4542, %v4640
      %v4665 = vmul.f32 %v4543, %v4640
      %v4666 = vmul.f32 %v4544, %v4640
      %v4667 = vmul.f32 %v4545, %v4640
      %v4668 = vmul.f32 %v4546, %v4640
      %v4669 = vmul.f32 %v4547, %v4640
      %v4670 = vmul.f32 %v4548, %v4640
      %v4671 = vmul.f32 %v4549, %v4640
      %v4672 = vmul.f32 %v4550, %v4640
      %v4673 = vmul.f32 %v4551, %v4640
      %v4674 = vmul.f32 %v4552, %v4640
      %v4675 = vmul.f32 %v4553, %v4640
      %v4676 = vmul.f32 %v4554, %v4640
      %v4677 = vmul.f32 %v4555, %v4640
      %v4678 = vmul.f32 %v4556, %v4640
      %v4679 = vmul.f32 %v4557, %v4640
      %v4680 = vmul.f32 %v4558, %v4640
      %v4681 = vmul.f32 %v4559, %v4640
      %v4682 = vmul.f32 %v4560, %v4640
      %v4683 = vmul.f32 %v4561, %v4640
      %v4684 = vmul.f32 %v4562, %v4640
      %v4685 = vmul.f32 %v4563, %v4640
      %v4686 = vmul.f32 %v4564, %v4640
      %v4687 = vmul.f32 %v4565, %v4640
      %v4688 = vmul.f32 %v4566, %v4640
      %v4737 = vrot.slane %v4641, 1
      %v4738 = vrot.slane %v4642, 1
      %v4739 = vsel %vm4127, %v4737, %v4738
      %v4740 = vrot.slane %v4643, 1
      %v4741 = vsel %vm4127, %v4738, %v4740
      %v4742 = vrot.slane %v4644, 1
      %v4743 = vrot.slane %v4645, 1
      %v4744 = vsel %vm4127, %v4742, %v4743
      %v4745 = vrot.slane %v4646, 1
      %v4746 = vsel %vm4127, %v4743, %v4745
      %v4747 = vrot.slane %v4647, 1
      %v4748 = vrot.slane %v4648, 1
      %v4749 = vsel %vm4127, %v4747, %v4748
      %v4750 = vrot.slane %v4649, 1
      %v4751 = vsel %vm4127, %v4748, %v4750
      %v4752 = vrot.slane %v4650, 1
      %v4753 = vrot.slane %v4651, 1
      %v4754 = vsel %vm4127, %v4752, %v4753
      %v4755 = vrot.slane %v4652, 1
      %v4756 = vsel %vm4127, %v4753, %v4755
      %v4757 = vrot.slane %v4653, 1
      %v4758 = vrot.slane %v4654, 1
      %v4759 = vsel %vm4127, %v4757, %v4758
      %v4760 = vrot.slane %v4655, 1
      %v4761 = vsel %vm4127, %v4758, %v4760
      %v4762 = vrot.slane %v4656, 1
      %v4763 = vrot.slane %v4657, 1
      %v4764 = vsel %vm4127, %v4762, %v4763
      %v4765 = vrot.slane %v4658, 1
      %v4766 = vsel %vm4127, %v4763, %v4765
      %v4767 = vrot.slane %v4659, 1
      %v4768 = vrot.slane %v4660, 1
      %v4769 = vsel %vm4127, %v4767, %v4768
      %v4770 = vrot.slane %v4661, 1
      %v4771 = vsel %vm4127, %v4768, %v4770
      %v4772 = vrot.slane %v4662, 1
      %v4773 = vrot.slane %v4663, 1
      %v4774 = vsel %vm4127, %v4772, %v4773
      %v4775 = vrot.slane %v4664, 1
      %v4776 = vsel %vm4127, %v4773, %v4775
      %v4777 = vrot.slane %v4665, 1
      %v4778 = vrot.slane %v4666, 1
      %v4779 = vsel %vm4127, %v4777, %v4778
      %v4780 = vrot.slane %v4667, 1
      %v4781 = vsel %vm4127, %v4778, %v4780
      %v4782 = vrot.slane %v4668, 1
      %v4783 = vrot.slane %v4669, 1
      %v4784 = vsel %vm4127, %v4782, %v4783
      %v4785 = vrot.slane %v4670, 1
      %v4786 = vsel %vm4127, %v4783, %v4785
      %v4787 = vrot.slane %v4671, 1
      %v4788 = vrot.slane %v4672, 1
      %v4789 = vsel %vm4127, %v4787, %v4788
      %v4790 = vrot.slane %v4673, 1
      %v4791 = vsel %vm4127, %v4788, %v4790
      %v4792 = vrot.slane %v4674, 1
      %v4793 = vrot.slane %v4675, 1
      %v4794 = vsel %vm4127, %v4792, %v4793
      %v4795 = vrot.slane %v4676, 1
      %v4796 = vsel %vm4127, %v4793, %v4795
      %v4797 = vrot.slane %v4677, 1
      %v4798 = vrot.slane %v4678, 1
      %v4799 = vsel %vm4127, %v4797, %v4798
      %v4800 = vrot.slane %v4679, 1
      %v4801 = vsel %vm4127, %v4798, %v4800
      %v4802 = vrot.slane %v4680, 1
      %v4803 = vrot.slane %v4681, 1
      %v4804 = vsel %vm4127, %v4802, %v4803
      %v4805 = vrot.slane %v4682, 1
      %v4806 = vsel %vm4127, %v4803, %v4805
      %v4807 = vrot.slane %v4683, 1
      %v4808 = vrot.slane %v4684, 1
      %v4809 = vsel %vm4127, %v4807, %v4808
      %v4810 = vrot.slane %v4685, 1
      %v4811 = vsel %vm4127, %v4808, %v4810
      %v4812 = vrot.slane %v4686, 1
      %v4813 = vrot.slane %v4687, 1
      %v4814 = vsel %vm4127, %v4812, %v4813
      %v4815 = vrot.slane %v4688, 1
      %v4816 = vsel %vm4127, %v4813, %v4815
      %v4849 = vadd.f32 %v4604, %v4739
      %v4850 = vadd.f32 %v4605, %v4741
      %v4851 = vadd.f32 %v4606, %v4744
      %v4852 = vadd.f32 %v4607, %v4746
      %v4853 = vadd.f32 %v4608, %v4749
      %v4854 = vadd.f32 %v4609, %v4751
      %v4855 = vadd.f32 %v4610, %v4754
      %v4856 = vadd.f32 %v4611, %v4756
      %v4857 = vadd.f32 %v4612, %v4759
      %v4858 = vadd.f32 %v4613, %v4761
      %v4859 = vadd.f32 %v4614, %v4764
      %v4860 = vadd.f32 %v4615, %v4766
      %v4861 = vadd.f32 %v4616, %v4769
      %v4862 = vadd.f32 %v4617, %v4771
      %v4863 = vadd.f32 %v4618, %v4774
      %v4864 = vadd.f32 %v4619, %v4776
      %v4865 = vadd.f32 %v4620, %v4779
      %v4866 = vadd.f32 %v4621, %v4781
      %v4867 = vadd.f32 %v4622, %v4784
      %v4868 = vadd.f32 %v4623, %v4786
      %v4869 = vadd.f32 %v4624, %v4789
      %v4870 = vadd.f32 %v4625, %v4791
      %v4871 = vadd.f32 %v4626, %v4794
      %v4872 = vadd.f32 %v4627, %v4796
      %v4873 = vadd.f32 %v4628, %v4799
      %v4874 = vadd.f32 %v4629, %v4801
      %v4875 = vadd.f32 %v4630, %v4804
      %v4876 = vadd.f32 %v4631, %v4806
      %v4877 = vadd.f32 %v4632, %v4809
      %v4878 = vadd.f32 %v4633, %v4811
      %v4879 = vadd.f32 %v4634, %v4814
      %v4880 = vadd.f32 %v4635, %v4816
      %v4881 = vld [vmem:[%s3 + $0x5] sm:$0x1]
      %v4882 = vlaneseq
      %v4883 = vshrl.u32 %v4882, 7
      %v4884 = vsub.s32 0, %v4883
      %v4885 = vrot.slane %v4881, %v4884
      %v4886 = vmul.f32 %v4519, %v4885
      %v4887 = vmul.f32 %v4520, %v4885
      %v4888 = vmul.f32 %v4521, %v4885
      %v4889 = vmul.f32 %v4522, %v4885
      %v4890 = vmul.f32 %v4523, %v4885
      %v4891 = vmul.f32 %v4524, %v4885
      %v4892 = vmul.f32 %v4525, %v4885
      %v4893 = vmul.f32 %v4526, %v4885
      %v4894 = vmul.f32 %v4527, %v4885
      %v4895 = vmul.f32 %v4528, %v4885
      %v4896 = vmul.f32 %v4529, %v4885
      %v4897 = vmul.f32 %v4530, %v4885
      %v4898 = vmul.f32 %v4531, %v4885
      %v4899 = vmul.f32 %v4532, %v4885
      %v4900 = vmul.f32 %v4533, %v4885
      %v4901 = vmul.f32 %v4534, %v4885
      %v4902 = vmul.f32 %v4535, %v4885
      %v4903 = vmul.f32 %v4536, %v4885
      %v4904 = vmul.f32 %v4537, %v4885
      %v4905 = vmul.f32 %v4538, %v4885
      %v4906 = vmul.f32 %v4539, %v4885
      %v4907 = vmul.f32 %v4540, %v4885
      %v4908 = vmul.f32 %v4541, %v4885
      %v4909 = vmul.f32 %v4542, %v4885
      %v4910 = vmul.f32 %v4543, %v4885
      %v4911 = vmul.f32 %v4544, %v4885
      %v4912 = vmul.f32 %v4545, %v4885
      %v4913 = vmul.f32 %v4546, %v4885
      %v4914 = vmul.f32 %v4547, %v4885
      %v4915 = vmul.f32 %v4548, %v4885
      %v4916 = vmul.f32 %v4549, %v4885
      %v4917 = vmul.f32 %v4550, %v4885
      %v4918 = vmul.f32 %v4551, %v4885
      %v4919 = vmul.f32 %v4552, %v4885
      %v4920 = vmul.f32 %v4553, %v4885
      %v4921 = vmul.f32 %v4554, %v4885
      %v4922 = vmul.f32 %v4555, %v4885
      %v4923 = vmul.f32 %v4556, %v4885
      %v4924 = vmul.f32 %v4557, %v4885
      %v4925 = vmul.f32 %v4558, %v4885
      %v4926 = vmul.f32 %v4559, %v4885
      %v4927 = vmul.f32 %v4560, %v4885
      %v4928 = vmul.f32 %v4561, %v4885
      %v4929 = vmul.f32 %v4562, %v4885
      %v4930 = vmul.f32 %v4563, %v4885
      %v4931 = vmul.f32 %v4564, %v4885
      %v4932 = vmul.f32 %v4565, %v4885
      %v4933 = vmul.f32 %v4566, %v4885
      %v4982 = vrot.slane %v4886, 2
      %v4983 = vrot.slane %v4887, 2
      %v4984 = vsel %vm4373, %v4982, %v4983
      %v4985 = vrot.slane %v4888, 2
      %v4986 = vsel %vm4373, %v4983, %v4985
      %v4987 = vrot.slane %v4889, 2
      %v4988 = vrot.slane %v4890, 2
      %v4989 = vsel %vm4373, %v4987, %v4988
      %v4990 = vrot.slane %v4891, 2
      %v4991 = vsel %vm4373, %v4988, %v4990
      %v4992 = vrot.slane %v4892, 2
      %v4993 = vrot.slane %v4893, 2
      %v4994 = vsel %vm4373, %v4992, %v4993
      %v4995 = vrot.slane %v4894, 2
      %v4996 = vsel %vm4373, %v4993, %v4995
      %v4997 = vrot.slane %v4895, 2
      %v4998 = vrot.slane %v4896, 2
      %v4999 = vsel %vm4373, %v4997, %v4998
      %v5000 = vrot.slane %v4897, 2
      %v5001 = vsel %vm4373, %v4998, %v5000
      %v5002 = vrot.slane %v4898, 2
      %v5003 = vrot.slane %v4899, 2
      %v5004 = vsel %vm4373, %v5002, %v5003
      %v5005 = vrot.slane %v4900, 2
      %v5006 = vsel %vm4373, %v5003, %v5005
      %v5007 = vrot.slane %v4901, 2
      %v5008 = vrot.slane %v4902, 2
      %v5009 = vsel %vm4373, %v5007, %v5008
      %v5010 = vrot.slane %v4903, 2
      %v5011 = vsel %vm4373, %v5008, %v5010
      %v5012 = vrot.slane %v4904, 2
      %v5013 = vrot.slane %v4905, 2
      %v5014 = vsel %vm4373, %v5012, %v5013
      %v5015 = vrot.slane %v4906, 2
      %v5016 = vsel %vm4373, %v5013, %v5015
      %v5017 = vrot.slane %v4907, 2
      %v5018 = vrot.slane %v4908, 2
      %v5019 = vsel %vm4373, %v5017, %v5018
      %v5020 = vrot.slane %v4909, 2
      %v5021 = vsel %vm4373, %v5018, %v5020
      %v5022 = vrot.slane %v4910, 2
      %v5023 = vrot.slane %v4911, 2
      %v5024 = vsel %vm4373, %v5022, %v5023
      %v5025 = vrot.slane %v4912, 2
      %v5026 = vsel %vm4373, %v5023, %v5025
      %v5027 = vrot.slane %v4913, 2
      %v5028 = vrot.slane %v4914, 2
      %v5029 = vsel %vm4373, %v5027, %v5028
      %v5030 = vrot.slane %v4915, 2
      %v5031 = vsel %vm4373, %v5028, %v5030
      %v5032 = vrot.slane %v4916, 2
      %v5033 = vrot.slane %v4917, 2
      %v5034 = vsel %vm4373, %v5032, %v5033
      %v5035 = vrot.slane %v4918, 2
      %v5036 = vsel %vm4373, %v5033, %v5035
      %v5037 = vrot.slane %v4919, 2
      %v5038 = vrot.slane %v4920, 2
      %v5039 = vsel %vm4373, %v5037, %v5038
      %v5040 = vrot.slane %v4921, 2
      %v5041 = vsel %vm4373, %v5038, %v5040
      %v5042 = vrot.slane %v4922, 2
      %v5043 = vrot.slane %v4923, 2
      %v5044 = vsel %vm4373, %v5042, %v5043
      %v5045 = vrot.slane %v4924, 2
      %v5046 = vsel %vm4373, %v5043, %v5045
      %v5047 = vrot.slane %v4925, 2
      %v5048 = vrot.slane %v4926, 2
      %v5049 = vsel %vm4373, %v5047, %v5048
      %v5050 = vrot.slane %v4927, 2
      %v5051 = vsel %vm4373, %v5048, %v5050
      %v5052 = vrot.slane %v4928, 2
      %v5053 = vrot.slane %v4929, 2
      %v5054 = vsel %vm4373, %v5052, %v5053
      %v5055 = vrot.slane %v4930, 2
      %v5056 = vsel %vm4373, %v5053, %v5055
      %v5057 = vrot.slane %v4931, 2
      %v5058 = vrot.slane %v4932, 2
      %v5059 = vsel %vm4373, %v5057, %v5058
      %v5060 = vrot.slane %v4933, 2
      %v5061 = vsel %vm4373, %v5058, %v5060
      %v5094 = vadd.f32 %v4849, %v4984
      %v5095 = vadd.f32 %v4850, %v4986
      %v5096 = vadd.f32 %v4851, %v4989
      %v5097 = vadd.f32 %v4852, %v4991
      %v5098 = vadd.f32 %v4853, %v4994
      %v5099 = vadd.f32 %v4854, %v4996
      %v5100 = vadd.f32 %v4855, %v4999
      %v5101 = vadd.f32 %v4856, %v5001
      %v5102 = vadd.f32 %v4857, %v5004
      %v5103 = vadd.f32 %v4858, %v5006
      %v5104 = vadd.f32 %v4859, %v5009
      %v5105 = vadd.f32 %v4860, %v5011
      %v5106 = vadd.f32 %v4861, %v5014
      %v5107 = vadd.f32 %v4862, %v5016
      %v5108 = vadd.f32 %v4863, %v5019
      %v5109 = vadd.f32 %v4864, %v5021
      %v5110 = vadd.f32 %v4865, %v5024
      %v5111 = vadd.f32 %v4866, %v5026
      %v5112 = vadd.f32 %v4867, %v5029
      %v5113 = vadd.f32 %v4868, %v5031
      %v5114 = vadd.f32 %v4869, %v5034
      %v5115 = vadd.f32 %v4870, %v5036
      %v5116 = vadd.f32 %v4871, %v5039
      %v5117 = vadd.f32 %v4872, %v5041
      %v5118 = vadd.f32 %v4873, %v5044
      %v5119 = vadd.f32 %v4874, %v5046
      %v5120 = vadd.f32 %v4875, %v5049
      %v5121 = vadd.f32 %v4876, %v5051
      %v5122 = vadd.f32 %v4877, %v5054
      %v5123 = vadd.f32 %v4878, %v5056
      %v5124 = vadd.f32 %v4879, %v5059
      %v5125 = vadd.f32 %v4880, %v5061
      %s5126 = scalar_lea.vmem [#allocation2], 48
      %v5127 = vld [vmem:[%s5126] sm:$0xff]
      %v5128 = vld [vmem:[%s5126 + $0x8] sm:$0xff]
      %v5129 = vld [vmem:[%s5126 + $0x10] sm:$0x3]
      %v5130 = vld [vmem:[%s5126 + $0x18] sm:$0xff]
      %v5131 = vld [vmem:[%s5126 + $0x20] sm:$0xff]
      %v5132 = vld [vmem:[%s5126 + $0x28] sm:$0x3]
      %v5133 = vld [vmem:[%s5126 + $0x30] sm:$0xff]
      %v5134 = vld [vmem:[%s5126 + $0x38] sm:$0xff]
      %v5135 = vld [vmem:[%s5126 + $0x40] sm:$0x3]
      %v5136 = vld [vmem:[%s5126 + $0x48] sm:$0xff]
      %v5137 = vld [vmem:[%s5126 + $0x50] sm:$0xff]
      %v5138 = vld [vmem:[%s5126 + $0x58] sm:$0x3]
      %v5139 = vld [vmem:[%s5126 + $0x60] sm:$0xff]
      %v5140 = vld [vmem:[%s5126 + $0x68] sm:$0xff]
      %v5141 = vld [vmem:[%s5126 + $0x70] sm:$0x3]
      %v5142 = vld [vmem:[%s5126 + $0x78] sm:$0xff]
      %v5143 = vld [vmem:[%s5126 + $0x80] sm:$0xff]
      %v5144 = vld [vmem:[%s5126 + $0x88] sm:$0x3]
      %v5145 = vld [vmem:[%s5126 + $0x90] sm:$0xff]
      %v5146 = vld [vmem:[%s5126 + $0x98] sm:$0xff]
      %v5147 = vld [vmem:[%s5126 + $0xa0] sm:$0x3]
      %v5148 = vld [vmem:[%s5126 + $0xa8] sm:$0xff]
      %v5149 = vld [vmem:[%s5126 + $0xb0] sm:$0xff]
      %v5150 = vld [vmem:[%s5126 + $0xb8] sm:$0x3]
      %v5151 = vld [vmem:[%s5126 + $0xc0] sm:$0xff]
      %v5152 = vld [vmem:[%s5126 + $0xc8] sm:$0xff]
      %v5153 = vld [vmem:[%s5126 + $0xd0] sm:$0x3]
      %v5154 = vld [vmem:[%s5126 + $0xd8] sm:$0xff]
      %v5155 = vld [vmem:[%s5126 + $0xe0] sm:$0xff]
      %v5156 = vld [vmem:[%s5126 + $0xe8] sm:$0x3]
      %v5157 = vld [vmem:[%s5126 + $0xf0] sm:$0xff]
      %v5158 = vld [vmem:[%s5126 + $0xf8] sm:$0xff]
      %v5159 = vld [vmem:[%s5126 + $0x100] sm:$0x3]
      %v5160 = vld [vmem:[%s5126 + $0x108] sm:$0xff]
      %v5161 = vld [vmem:[%s5126 + $0x110] sm:$0xff]
      %v5162 = vld [vmem:[%s5126 + $0x118] sm:$0x3]
      %v5163 = vld [vmem:[%s5126 + $0x120] sm:$0xff]
      %v5164 = vld [vmem:[%s5126 + $0x128] sm:$0xff]
      %v5165 = vld [vmem:[%s5126 + $0x130] sm:$0x3]
      %v5166 = vld [vmem:[%s5126 + $0x138] sm:$0xff]
      %v5167 = vld [vmem:[%s5126 + $0x140] sm:$0xff]
      %v5168 = vld [vmem:[%s5126 + $0x148] sm:$0x3]
      %v5169 = vld [vmem:[%s5126 + $0x150] sm:$0xff]
      %v5170 = vld [vmem:[%s5126 + $0x158] sm:$0xff]
      %v5171 = vld [vmem:[%s5126 + $0x160] sm:$0x3]
      %v5172 = vld [vmem:[%s5126 + $0x168] sm:$0xff]
      %v5173 = vld [vmem:[%s5126 + $0x170] sm:$0xff]
      %v5174 = vld [vmem:[%s5126 + $0x178] sm:$0x3]
      %v5175 = vld [vmem:[%s3 + $0x6] sm:$0x1]
      %v5176 = vlaneseq
      %v5177 = vshrl.u32 %v5176, 7
      %v5178 = vsub.s32 0, %v5177
      %v5179 = vrot.slane %v5175, %v5178
      %v5180 = vmul.f32 %v5127, %v5179
      %v5181 = vmul.f32 %v5128, %v5179
      %v5182 = vmul.f32 %v5130, %v5179
      %v5183 = vmul.f32 %v5131, %v5179
      %v5184 = vmul.f32 %v5133, %v5179
      %v5185 = vmul.f32 %v5134, %v5179
      %v5186 = vmul.f32 %v5136, %v5179
      %v5187 = vmul.f32 %v5137, %v5179
      %v5188 = vmul.f32 %v5139, %v5179
      %v5189 = vmul.f32 %v5140, %v5179
      %v5190 = vmul.f32 %v5142, %v5179
      %v5191 = vmul.f32 %v5143, %v5179
      %v5192 = vmul.f32 %v5145, %v5179
      %v5193 = vmul.f32 %v5146, %v5179
      %v5194 = vmul.f32 %v5148, %v5179
      %v5195 = vmul.f32 %v5149, %v5179
      %v5196 = vmul.f32 %v5151, %v5179
      %v5197 = vmul.f32 %v5152, %v5179
      %v5198 = vmul.f32 %v5154, %v5179
      %v5199 = vmul.f32 %v5155, %v5179
      %v5200 = vmul.f32 %v5157, %v5179
      %v5201 = vmul.f32 %v5158, %v5179
      %v5202 = vmul.f32 %v5160, %v5179
      %v5203 = vmul.f32 %v5161, %v5179
      %v5204 = vmul.f32 %v5163, %v5179
      %v5205 = vmul.f32 %v5164, %v5179
      %v5206 = vmul.f32 %v5166, %v5179
      %v5207 = vmul.f32 %v5167, %v5179
      %v5208 = vmul.f32 %v5169, %v5179
      %v5209 = vmul.f32 %v5170, %v5179
      %v5210 = vmul.f32 %v5172, %v5179
      %v5211 = vmul.f32 %v5173, %v5179
      %v5212 = vadd.f32 %v5094, %v5180
      %v5213 = vadd.f32 %v5095, %v5181
      %v5214 = vadd.f32 %v5096, %v5182
      %v5215 = vadd.f32 %v5097, %v5183
      %v5216 = vadd.f32 %v5098, %v5184
      %v5217 = vadd.f32 %v5099, %v5185
      %v5218 = vadd.f32 %v5100, %v5186
      %v5219 = vadd.f32 %v5101, %v5187
      %v5220 = vadd.f32 %v5102, %v5188
      %v5221 = vadd.f32 %v5103, %v5189
      %v5222 = vadd.f32 %v5104, %v5190
      %v5223 = vadd.f32 %v5105, %v5191
      %v5224 = vadd.f32 %v5106, %v5192
      %v5225 = vadd.f32 %v5107, %v5193
      %v5226 = vadd.f32 %v5108, %v5194
      %v5227 = vadd.f32 %v5109, %v5195
      %v5228 = vadd.f32 %v5110, %v5196
      %v5229 = vadd.f32 %v5111, %v5197
      %v5230 = vadd.f32 %v5112, %v5198
      %v5231 = vadd.f32 %v5113, %v5199
      %v5232 = vadd.f32 %v5114, %v5200
      %v5233 = vadd.f32 %v5115, %v5201
      %v5234 = vadd.f32 %v5116, %v5202
      %v5235 = vadd.f32 %v5117, %v5203
      %v5236 = vadd.f32 %v5118, %v5204
      %v5237 = vadd.f32 %v5119, %v5205
      %v5238 = vadd.f32 %v5120, %v5206
      %v5239 = vadd.f32 %v5121, %v5207
      %v5240 = vadd.f32 %v5122, %v5208
      %v5241 = vadd.f32 %v5123, %v5209
      %v5242 = vadd.f32 %v5124, %v5210
      %v5243 = vadd.f32 %v5125, %v5211
      %v5244 = vld [vmem:[%s3 + $0x7] sm:$0x1]
      %v5245 = vlaneseq
      %v5246 = vshrl.u32 %v5245, 7
      %v5247 = vsub.s32 0, %v5246
      %v5248 = vrot.slane %v5244, %v5247
      %v5249 = vmul.f32 %v5127, %v5248
      %v5250 = vmul.f32 %v5128, %v5248
      %v5251 = vmul.f32 %v5129, %v5248
      %v5252 = vmul.f32 %v5130, %v5248
      %v5253 = vmul.f32 %v5131, %v5248
      %v5254 = vmul.f32 %v5132, %v5248
      %v5255 = vmul.f32 %v5133, %v5248
      %v5256 = vmul.f32 %v5134, %v5248
      %v5257 = vmul.f32 %v5135, %v5248
      %v5258 = vmul.f32 %v5136, %v5248
      %v5259 = vmul.f32 %v5137, %v5248
      %v5260 = vmul.f32 %v5138, %v5248
      %v5261 = vmul.f32 %v5139, %v5248
      %v5262 = vmul.f32 %v5140, %v5248
      %v5263 = vmul.f32 %v5141, %v5248
      %v5264 = vmul.f32 %v5142, %v5248
      %v5265 = vmul.f32 %v5143, %v5248
      %v5266 = vmul.f32 %v5144, %v5248
      %v5267 = vmul.f32 %v5145, %v5248
      %v5268 = vmul.f32 %v5146, %v5248
      %v5269 = vmul.f32 %v5147, %v5248
      %v5270 = vmul.f32 %v5148, %v5248
      %v5271 = vmul.f32 %v5149, %v5248
      %v5272 = vmul.f32 %v5150, %v5248
      %v5273 = vmul.f32 %v5151, %v5248
      %v5274 = vmul.f32 %v5152, %v5248
      %v5275 = vmul.f32 %v5153, %v5248
      %v5276 = vmul.f32 %v5154, %v5248
      %v5277 = vmul.f32 %v5155, %v5248
      %v5278 = vmul.f32 %v5156, %v5248
      %v5279 = vmul.f32 %v5157, %v5248
      %v5280 = vmul.f32 %v5158, %v5248
      %v5281 = vmul.f32 %v5159, %v5248
      %v5282 = vmul.f32 %v5160, %v5248
      %v5283 = vmul.f32 %v5161, %v5248
      %v5284 = vmul.f32 %v5162, %v5248
      %v5285 = vmul.f32 %v5163, %v5248
      %v5286 = vmul.f32 %v5164, %v5248
      %v5287 = vmul.f32 %v5165, %v5248
      %v5288 = vmul.f32 %v5166, %v5248
      %v5289 = vmul.f32 %v5167, %v5248
      %v5290 = vmul.f32 %v5168, %v5248
      %v5291 = vmul.f32 %v5169, %v5248
      %v5292 = vmul.f32 %v5170, %v5248
      %v5293 = vmul.f32 %v5171, %v5248
      %v5294 = vmul.f32 %v5172, %v5248
      %v5295 = vmul.f32 %v5173, %v5248
      %v5296 = vmul.f32 %v5174, %v5248
      %v5345 = vrot.slane %v5249, 1
      %v5346 = vrot.slane %v5250, 1
      %v5347 = vsel %vm4127, %v5345, %v5346
      %v5348 = vrot.slane %v5251, 1
      %v5349 = vsel %vm4127, %v5346, %v5348
      %v5350 = vrot.slane %v5252, 1
      %v5351 = vrot.slane %v5253, 1
      %v5352 = vsel %vm4127, %v5350, %v5351
      %v5353 = vrot.slane %v5254, 1
      %v5354 = vsel %vm4127, %v5351, %v5353
      %v5355 = vrot.slane %v5255, 1
      %v5356 = vrot.slane %v5256, 1
      %v5357 = vsel %vm4127, %v5355, %v5356
      %v5358 = vrot.slane %v5257, 1
      %v5359 = vsel %vm4127, %v5356, %v5358
      %v5360 = vrot.slane %v5258, 1
      %v5361 = vrot.slane %v5259, 1
      %v5362 = vsel %vm4127, %v5360, %v5361
      %v5363 = vrot.slane %v5260, 1
      %v5364 = vsel %vm4127, %v5361, %v5363
      %v5365 = vrot.slane %v5261, 1
      %v5366 = vrot.slane %v5262, 1
      %v5367 = vsel %vm4127, %v5365, %v5366
      %v5368 = vrot.slane %v5263, 1
      %v5369 = vsel %vm4127, %v5366, %v5368
      %v5370 = vrot.slane %v5264, 1
      %v5371 = vrot.slane %v5265, 1
      %v5372 = vsel %vm4127, %v5370, %v5371
      %v5373 = vrot.slane %v5266, 1
      %v5374 = vsel %vm4127, %v5371, %v5373
      %v5375 = vrot.slane %v5267, 1
      %v5376 = vrot.slane %v5268, 1
      %v5377 = vsel %vm4127, %v5375, %v5376
      %v5378 = vrot.slane %v5269, 1
      %v5379 = vsel %vm4127, %v5376, %v5378
      %v5380 = vrot.slane %v5270, 1
      %v5381 = vrot.slane %v5271, 1
      %v5382 = vsel %vm4127, %v5380, %v5381
      %v5383 = vrot.slane %v5272, 1
      %v5384 = vsel %vm4127, %v5381, %v5383
      %v5385 = vrot.slane %v5273, 1
      %v5386 = vrot.slane %v5274, 1
      %v5387 = vsel %vm4127, %v5385, %v5386
      %v5388 = vrot.slane %v5275, 1
      %v5389 = vsel %vm4127, %v5386, %v5388
      %v5390 = vrot.slane %v5276, 1
      %v5391 = vrot.slane %v5277, 1
      %v5392 = vsel %vm4127, %v5390, %v5391
      %v5393 = vrot.slane %v5278, 1
      %v5394 = vsel %vm4127, %v5391, %v5393
      %v5395 = vrot.slane %v5279, 1
      %v5396 = vrot.slane %v5280, 1
      %v5397 = vsel %vm4127, %v5395, %v5396
      %v5398 = vrot.slane %v5281, 1
      %v5399 = vsel %vm4127, %v5396, %v5398
      %v5400 = vrot.slane %v5282, 1
      %v5401 = vrot.slane %v5283, 1
      %v5402 = vsel %vm4127, %v5400, %v5401
      %v5403 = vrot.slane %v5284, 1
      %v5404 = vsel %vm4127, %v5401, %v5403
      %v5405 = vrot.slane %v5285, 1
      %v5406 = vrot.slane %v5286, 1
      %v5407 = vsel %vm4127, %v5405, %v5406
      %v5408 = vrot.slane %v5287, 1
      %v5409 = vsel %vm4127, %v5406, %v5408
      %v5410 = vrot.slane %v5288, 1
      %v5411 = vrot.slane %v5289, 1
      %v5412 = vsel %vm4127, %v5410, %v5411
      %v5413 = vrot.slane %v5290, 1
      %v5414 = vsel %vm4127, %v5411, %v5413
      %v5415 = vrot.slane %v5291, 1
      %v5416 = vrot.slane %v5292, 1
      %v5417 = vsel %vm4127, %v5415, %v5416
      %v5418 = vrot.slane %v5293, 1
      %v5419 = vsel %vm4127, %v5416, %v5418
      %v5420 = vrot.slane %v5294, 1
      %v5421 = vrot.slane %v5295, 1
      %v5422 = vsel %vm4127, %v5420, %v5421
      %v5423 = vrot.slane %v5296, 1
      %v5424 = vsel %vm4127, %v5421, %v5423
      %v5457 = vadd.f32 %v5212, %v5347
      %v5458 = vadd.f32 %v5213, %v5349
      %v5459 = vadd.f32 %v5214, %v5352
      %v5460 = vadd.f32 %v5215, %v5354
      %v5461 = vadd.f32 %v5216, %v5357
      %v5462 = vadd.f32 %v5217, %v5359
      %v5463 = vadd.f32 %v5218, %v5362
      %v5464 = vadd.f32 %v5219, %v5364
      %v5465 = vadd.f32 %v5220, %v5367
      %v5466 = vadd.f32 %v5221, %v5369
      %v5467 = vadd.f32 %v5222, %v5372
      %v5468 = vadd.f32 %v5223, %v5374
      %v5469 = vadd.f32 %v5224, %v5377
      %v5470 = vadd.f32 %v5225, %v5379
      %v5471 = vadd.f32 %v5226, %v5382
      %v5472 = vadd.f32 %v5227, %v5384
      %v5473 = vadd.f32 %v5228, %v5387
      %v5474 = vadd.f32 %v5229, %v5389
      %v5475 = vadd.f32 %v5230, %v5392
      %v5476 = vadd.f32 %v5231, %v5394
      %v5477 = vadd.f32 %v5232, %v5397
      %v5478 = vadd.f32 %v5233, %v5399
      %v5479 = vadd.f32 %v5234, %v5402
      %v5480 = vadd.f32 %v5235, %v5404
      %v5481 = vadd.f32 %v5236, %v5407
      %v5482 = vadd.f32 %v5237, %v5409
      %v5483 = vadd.f32 %v5238, %v5412
      %v5484 = vadd.f32 %v5239, %v5414
      %v5485 = vadd.f32 %v5240, %v5417
      %v5486 = vadd.f32 %v5241, %v5419
      %v5487 = vadd.f32 %v5242, %v5422
      %v5488 = vadd.f32 %v5243, %v5424
      %v5489 = vld [vmem:[%s3 + $0x8] sm:$0x1]
      %v5490 = vlaneseq
      %v5491 = vshrl.u32 %v5490, 7
      %v5492 = vsub.s32 0, %v5491
      %v5493 = vrot.slane %v5489, %v5492
      %v5494 = vmul.f32 %v5127, %v5493
      %v5495 = vmul.f32 %v5128, %v5493
      %v5496 = vmul.f32 %v5129, %v5493
      %v5497 = vmul.f32 %v5130, %v5493
      %v5498 = vmul.f32 %v5131, %v5493
      %v5499 = vmul.f32 %v5132, %v5493
      %v5500 = vmul.f32 %v5133, %v5493
      %v5501 = vmul.f32 %v5134, %v5493
      %v5502 = vmul.f32 %v5135, %v5493
      %v5503 = vmul.f32 %v5136, %v5493
      %v5504 = vmul.f32 %v5137, %v5493
      %v5505 = vmul.f32 %v5138, %v5493
      %v5506 = vmul.f32 %v5139, %v5493
      %v5507 = vmul.f32 %v5140, %v5493
      %v5508 = vmul.f32 %v5141, %v5493
      %v5509 = vmul.f32 %v5142, %v5493
      %v5510 = vmul.f32 %v5143, %v5493
      %v5511 = vmul.f32 %v5144, %v5493
      %v5512 = vmul.f32 %v5145, %v5493
      %v5513 = vmul.f32 %v5146, %v5493
      %v5514 = vmul.f32 %v5147, %v5493
      %v5515 = vmul.f32 %v5148, %v5493
      %v5516 = vmul.f32 %v5149, %v5493
      %v5517 = vmul.f32 %v5150, %v5493
      %v5518 = vmul.f32 %v5151, %v5493
      %v5519 = vmul.f32 %v5152, %v5493
      %v5520 = vmul.f32 %v5153, %v5493
      %v5521 = vmul.f32 %v5154, %v5493
      %v5522 = vmul.f32 %v5155, %v5493
      %v5523 = vmul.f32 %v5156, %v5493
      %v5524 = vmul.f32 %v5157, %v5493
      %v5525 = vmul.f32 %v5158, %v5493
      %v5526 = vmul.f32 %v5159, %v5493
      %v5527 = vmul.f32 %v5160, %v5493
      %v5528 = vmul.f32 %v5161, %v5493
      %v5529 = vmul.f32 %v5162, %v5493
      %v5530 = vmul.f32 %v5163, %v5493
      %v5531 = vmul.f32 %v5164, %v5493
      %v5532 = vmul.f32 %v5165, %v5493
      %v5533 = vmul.f32 %v5166, %v5493
      %v5534 = vmul.f32 %v5167, %v5493
      %v5535 = vmul.f32 %v5168, %v5493
      %v5536 = vmul.f32 %v5169, %v5493
      %v5537 = vmul.f32 %v5170, %v5493
      %v5538 = vmul.f32 %v5171, %v5493
      %v5539 = vmul.f32 %v5172, %v5493
      %v5540 = vmul.f32 %v5173, %v5493
      %v5541 = vmul.f32 %v5174, %v5493
      %v5590 = vrot.slane %v5494, 2
      %v5591 = vrot.slane %v5495, 2
      %v5592 = vsel %vm4373, %v5590, %v5591
      %v5593 = vrot.slane %v5496, 2
      %v5594 = vsel %vm4373, %v5591, %v5593
      %v5595 = vrot.slane %v5497, 2
      %v5596 = vrot.slane %v5498, 2
      %v5597 = vsel %vm4373, %v5595, %v5596
      %v5598 = vrot.slane %v5499, 2
      %v5599 = vsel %vm4373, %v5596, %v5598
      %v5600 = vrot.slane %v5500, 2
      %v5601 = vrot.slane %v5501, 2
      %v5602 = vsel %vm4373, %v5600, %v5601
      %v5603 = vrot.slane %v5502, 2
      %v5604 = vsel %vm4373, %v5601, %v5603
      %v5605 = vrot.slane %v5503, 2
      %v5606 = vrot.slane %v5504, 2
      %v5607 = vsel %vm4373, %v5605, %v5606
      %v5608 = vrot.slane %v5505, 2
      %v5609 = vsel %vm4373, %v5606, %v5608
      %v5610 = vrot.slane %v5506, 2
      %v5611 = vrot.slane %v5507, 2
      %v5612 = vsel %vm4373, %v5610, %v5611
      %v5613 = vrot.slane %v5508, 2
      %v5614 = vsel %vm4373, %v5611, %v5613
      %v5615 = vrot.slane %v5509, 2
      %v5616 = vrot.slane %v5510, 2
      %v5617 = vsel %vm4373, %v5615, %v5616
      %v5618 = vrot.slane %v5511, 2
      %v5619 = vsel %vm4373, %v5616, %v5618
      %v5620 = vrot.slane %v5512, 2
      %v5621 = vrot.slane %v5513, 2
      %v5622 = vsel %vm4373, %v5620, %v5621
      %v5623 = vrot.slane %v5514, 2
      %v5624 = vsel %vm4373, %v5621, %v5623
      %v5625 = vrot.slane %v5515, 2
      %v5626 = vrot.slane %v5516, 2
      %v5627 = vsel %vm4373, %v5625, %v5626
      %v5628 = vrot.slane %v5517, 2
      %v5629 = vsel %vm4373, %v5626, %v5628
      %v5630 = vrot.slane %v5518, 2
      %v5631 = vrot.slane %v5519, 2
      %v5632 = vsel %vm4373, %v5630, %v5631
      %v5633 = vrot.slane %v5520, 2
      %v5634 = vsel %vm4373, %v5631, %v5633
      %v5635 = vrot.slane %v5521, 2
      %v5636 = vrot.slane %v5522, 2
      %v5637 = vsel %vm4373, %v5635, %v5636
      %v5638 = vrot.slane %v5523, 2
      %v5639 = vsel %vm4373, %v5636, %v5638
      %v5640 = vrot.slane %v5524, 2
      %v5641 = vrot.slane %v5525, 2
      %v5642 = vsel %vm4373, %v5640, %v5641
      %v5643 = vrot.slane %v5526, 2
      %v5644 = vsel %vm4373, %v5641, %v5643
      %v5645 = vrot.slane %v5527, 2
      %v5646 = vrot.slane %v5528, 2
      %v5647 = vsel %vm4373, %v5645, %v5646
      %v5648 = vrot.slane %v5529, 2
      %v5649 = vsel %vm4373, %v5646, %v5648
      %v5650 = vrot.slane %v5530, 2
      %v5651 = vrot.slane %v5531, 2
      %v5652 = vsel %vm4373, %v5650, %v5651
      %v5653 = vrot.slane %v5532, 2
      %v5654 = vsel %vm4373, %v5651, %v5653
      %v5655 = vrot.slane %v5533, 2
      %v5656 = vrot.slane %v5534, 2
      %v5657 = vsel %vm4373, %v5655, %v5656
      %v5658 = vrot.slane %v5535, 2
      %v5659 = vsel %vm4373, %v5656, %v5658
      %v5660 = vrot.slane %v5536, 2
      %v5661 = vrot.slane %v5537, 2
      %v5662 = vsel %vm4373, %v5660, %v5661
      %v5663 = vrot.slane %v5538, 2
      %v5664 = vsel %vm4373, %v5661, %v5663
      %v5665 = vrot.slane %v5539, 2
      %v5666 = vrot.slane %v5540, 2
      %v5667 = vsel %vm4373, %v5665, %v5666
      %v5668 = vrot.slane %v5541, 2
      %v5669 = vsel %vm4373, %v5666, %v5668
      %v5702 = vadd.f32 %v5457, %v5592
      %v5703 = vadd.f32 %v5458, %v5594
      %v5704 = vadd.f32 %v5459, %v5597
      %v5705 = vadd.f32 %v5460, %v5599
      %v5706 = vadd.f32 %v5461, %v5602
      %v5707 = vadd.f32 %v5462, %v5604
      %v5708 = vadd.f32 %v5463, %v5607
      %v5709 = vadd.f32 %v5464, %v5609
      %v5710 = vadd.f32 %v5465, %v5612
      %v5711 = vadd.f32 %v5466, %v5614
      %v5712 = vadd.f32 %v5467, %v5617
      %v5713 = vadd.f32 %v5468, %v5619
      %v5714 = vadd.f32 %v5469, %v5622
      %v5715 = vadd.f32 %v5470, %v5624
      %v5716 = vadd.f32 %v5471, %v5627
      %v5717 = vadd.f32 %v5472, %v5629
      %v5718 = vadd.f32 %v5473, %v5632
      %v5719 = vadd.f32 %v5474, %v5634
      %v5720 = vadd.f32 %v5475, %v5637
      %v5721 = vadd.f32 %v5476, %v5639
      %v5722 = vadd.f32 %v5477, %v5642
      %v5723 = vadd.f32 %v5478, %v5644
      %v5724 = vadd.f32 %v5479, %v5647
      %v5725 = vadd.f32 %v5480, %v5649
      %v5726 = vadd.f32 %v5481, %v5652
      %v5727 = vadd.f32 %v5482, %v5654
      %v5728 = vadd.f32 %v5483, %v5657
      %v5729 = vadd.f32 %v5484, %v5659
      %v5730 = vadd.f32 %v5485, %v5662
      %v5731 = vadd.f32 %v5486, %v5664
      %v5732 = vadd.f32 %v5487, %v5667
      %v5733 = vadd.f32 %v5488, %v5669
      %v5734 = vld [vmem:[%s4] sm:$0x1]
      %v5736 = vlaneseq
      %v5737 = vshrl.u32 %v5736, 7
      %v5738 = vsub.s32 0, %v5737
      %v5739 = vrot.slane %v5734, %v5738
      %v5741 = vadd.f32 %v5702, %v5739
      %v5742 = vadd.f32 %v5703, %v5739
      %v5743 = vadd.f32 %v5704, %v5739
      %v5744 = vadd.f32 %v5705, %v5739
      %v5745 = vadd.f32 %v5706, %v5739
      %v5746 = vadd.f32 %v5707, %v5739
      %v5747 = vadd.f32 %v5708, %v5739
      %v5748 = vadd.f32 %v5709, %v5739
      %v5749 = vadd.f32 %v5710, %v5739
      %v5750 = vadd.f32 %v5711, %v5739
      %v5751 = vadd.f32 %v5712, %v5739
      %v5752 = vadd.f32 %v5713, %v5739
      %v5753 = vadd.f32 %v5714, %v5739
      %v5754 = vadd.f32 %v5715, %v5739
      %v5755 = vadd.f32 %v5716, %v5739
      %v5756 = vadd.f32 %v5717, %v5739
      %v5757 = vadd.f32 %v5718, %v5739
      %v5758 = vadd.f32 %v5719, %v5739
      %v5759 = vadd.f32 %v5720, %v5739
      %v5760 = vadd.f32 %v5721, %v5739
      %v5761 = vadd.f32 %v5722, %v5739
      %v5762 = vadd.f32 %v5723, %v5739
      %v5763 = vadd.f32 %v5724, %v5739
      %v5764 = vadd.f32 %v5725, %v5739
      %v5765 = vadd.f32 %v5726, %v5739
      %v5766 = vadd.f32 %v5727, %v5739
      %v5767 = vadd.f32 %v5728, %v5739
      %v5768 = vadd.f32 %v5729, %v5739
      %v5769 = vadd.f32 %v5730, %v5739
      %v5770 = vadd.f32 %v5731, %v5739
      %v5771 = vadd.f32 %v5732, %v5739
      %v5772 = vadd.f32 %v5733, %v5739
      %v5773 = vmax.f32 %v5741, 0.0
      %v5774 = vmax.f32 %v5742, 0.0
      %v5775 = vmax.f32 %v5743, 0.0
      %v5776 = vmax.f32 %v5744, 0.0
      %v5777 = vmax.f32 %v5745, 0.0
      %v5778 = vmax.f32 %v5746, 0.0
      %v5779 = vmax.f32 %v5747, 0.0
      %v5780 = vmax.f32 %v5748, 0.0
      %v5781 = vmax.f32 %v5749, 0.0
      %v5782 = vmax.f32 %v5750, 0.0
      %v5783 = vmax.f32 %v5751, 0.0
      %v5784 = vmax.f32 %v5752, 0.0
      %v5785 = vmax.f32 %v5753, 0.0
      %v5786 = vmax.f32 %v5754, 0.0
      %v5787 = vmax.f32 %v5755, 0.0
      %v5788 = vmax.f32 %v5756, 0.0
      %v5789 = vmax.f32 %v5757, 0.0
      %v5790 = vmax.f32 %v5758, 0.0
      %v5791 = vmax.f32 %v5759, 0.0
      %v5792 = vmax.f32 %v5760, 0.0
      %v5793 = vmax.f32 %v5761, 0.0
      %v5794 = vmax.f32 %v5762, 0.0
      %v5795 = vmax.f32 %v5763, 0.0
      %v5796 = vmax.f32 %v5764, 0.0
      %v5797 = vmax.f32 %v5765, 0.0
      %v5798 = vmax.f32 %v5766, 0.0
      %v5799 = vmax.f32 %v5767, 0.0
      %v5800 = vmax.f32 %v5768, 0.0
      %v5801 = vmax.f32 %v5769, 0.0
      %v5802 = vmax.f32 %v5770, 0.0
      %v5803 = vmax.f32 %v5771, 0.0
      %v5804 = vmax.f32 %v5772, 0.0
      %v5805 = vmin.f32 %v5773, 6.0
      %v5806 = vmin.f32 %v5774, 6.0
      %v5807 = vmin.f32 %v5775, 6.0
      %v5808 = vmin.f32 %v5776, 6.0
      %v5809 = vmin.f32 %v5777, 6.0
      %v5810 = vmin.f32 %v5778, 6.0
      %v5811 = vmin.f32 %v5779, 6.0
      %v5812 = vmin.f32 %v5780, 6.0
      %v5813 = vmin.f32 %v5781, 6.0
      %v5814 = vmin.f32 %v5782, 6.0
      %v5815 = vmin.f32 %v5783, 6.0
      %v5816 = vmin.f32 %v5784, 6.0
      %v5817 = vmin.f32 %v5785, 6.0
      %v5818 = vmin.f32 %v5786, 6.0
      %v5819 = vmin.f32 %v5787, 6.0
      %v5820 = vmin.f32 %v5788, 6.0
      %v5821 = vmin.f32 %v5789, 6.0
      %v5822 = vmin.f32 %v5790, 6.0
      %v5823 = vmin.f32 %v5791, 6.0
      %v5824 = vmin.f32 %v5792, 6.0
      %v5825 = vmin.f32 %v5793, 6.0
      %v5826 = vmin.f32 %v5794, 6.0
      %v5827 = vmin.f32 %v5795, 6.0
      %v5828 = vmin.f32 %v5796, 6.0
      %v5829 = vmin.f32 %v5797, 6.0
      %v5830 = vmin.f32 %v5798, 6.0
      %v5831 = vmin.f32 %v5799, 6.0
      %v5832 = vmin.f32 %v5800, 6.0
      %v5833 = vmin.f32 %v5801, 6.0
      %v5834 = vmin.f32 %v5802, 6.0
      %v5835 = vmin.f32 %v5803, 6.0
      %v5836 = vmin.f32 %v5804, 6.0
      %v5837 = vld [vmem:[%s5] sm:$0xff]
      %v5838 = vld [vmem:[%s5 + $0x8] sm:$0xff]
      %v5839 = vld [vmem:[%s5 + $0x10] sm:$0xff]
      %v5840 = vld [vmem:[%s5 + $0x18] sm:$0xff]
      %v5841 = vld [vmem:[%s6] sm:$0x1]
      %v5843 = vlaneseq
      %v5844 = vshrl.u32 %v5843, 7
      %v5845 = vsub.s32 0, %v5844
      %v5846 = vrot.slane %v5841, %v5845
      %v5849 = vsel %vm3805, %v5805, 0
      %v5852 = vsel %vm3805, %v5806, 0
      %v5855 = vsel %vm3805, %v5807, 0
      %v5858 = vsel %vm3805, %v5808, 0
      %v5861 = vsel %vm3805, %v5809, 0
      %v5864 = vsel %vm3805, %v5810, 0
      %v5867 = vsel %vm3805, %v5811, 0
      %v5870 = vsel %vm3805, %v5812, 0
      %v5873 = vsel %vm3805, %v5813, 0
      %v5876 = vsel %vm3805, %v5814, 0
      %v5879 = vsel %vm3805, %v5815, 0
      %v5882 = vsel %vm3805, %v5816, 0
      %v5885 = vsel %vm3805, %v5817, 0
      %v5888 = vsel %vm3805, %v5818, 0
      %v5891 = vsel %vm3805, %v5819, 0
      %v5894 = vsel %vm3805, %v5820, 0
      %v5897 = vsel %vm3805, %v5821, 0
      %v5900 = vsel %vm3805, %v5822, 0
      %v5903 = vsel %vm3805, %v5823, 0
      %v5906 = vsel %vm3805, %v5824, 0
      %v5909 = vsel %vm3805, %v5825, 0
      %v5912 = vsel %vm3805, %v5826, 0
      %v5915 = vsel %vm3805, %v5827, 0
      %v5918 = vsel %vm3805, %v5828, 0
      %v5921 = vsel %vm3805, %v5829, 0
      %v5924 = vsel %vm3805, %v5830, 0
      %v5927 = vsel %vm3805, %v5831, 0
      %v5930 = vsel %vm3805, %v5832, 0
      %v5933 = vsel %vm3805, %v5833, 0
      %v5936 = vsel %vm3805, %v5834, 0
      %v5939 = vsel %vm3805, %v5835, 0
      %v5942 = vsel %vm3805, %v5836, 0
      %5944 = vmatprep.subr.mxu0 0.0
      %5945 = vmatpush1.msra.mxu0 0.0
      %5946 = vmatprep.subr.mxu0 0.0
      %5947 = vmatpush1.msra.mxu0 0.0
      %5948 = vmatprep.subr.mxu0 0.0
      %5949 = vmatpush1.msra.mxu0 0.0
      %5950 = vmatprep.subr.mxu0 0.0
      %5951 = vmatpush1.msra.mxu0 0.0
      %5952 = vmatprep.subr.mxu0 0.0
      %5953 = vmatpush1.msra.mxu0 0.0
      %5954 = vmatprep.subr.mxu0 0.0
      %5955 = vmatpush1.msra.mxu0 0.0
      %5956 = vmatprep.subr.mxu0 0.0
      %5957 = vmatpush1.msra.mxu0 0.0
      %5958 = vmatprep.subr.mxu0 0.0
      %5959 = vmatpush1.msra.mxu0 0.0
      %5960 = vmatprep.subr.mxu0 0.0
      %5961 = vmatpush1.msra.mxu0 0.0
      %5962 = vmatprep.subr.mxu0 0.0
      %5963 = vmatpush1.msra.mxu0 0.0
      %5964 = vmatprep.subr.mxu0 0.0
      %5965 = vmatpush1.msra.mxu0 0.0
      %5966 = vmatprep.subr.mxu0 0.0
      %5967 = vmatpush1.msra.mxu0 0.0
      %5968 = vmatprep.subr.mxu0 0.0
      %5969 = vmatpush1.msra.mxu0 %v5840
      %5970 = vmatprep.subr.mxu0 0.0
      %5971 = vmatpush1.msra.mxu0 %v5839
      %5972 = vmatprep.subr.mxu0 0.0
      %5973 = vmatpush1.msra.mxu0 %v5838
      %5974 = vmatprep.subr.mxu0 0.0
      %5975 = vmatpush1.msra.mxu0 %v5837
      %5976 = vmatprep.subr.mxu0 0.0
      %5977 = vmatpush2.msra.mxu0 0.0
      %5978 = vmatprep.subr.mxu0 0.0
      %5979 = vmatpush2.msra.mxu0 0.0
      %5980 = vmatprep.subr.mxu0 0.0
      %5981 = vmatpush2.msra.mxu0 0.0
      %5982 = vmatprep.subr.mxu0 0.0
      %5983 = vmatpush2.msra.mxu0 0.0
      %5984 = vmatprep.subr.mxu0 0.0
      %5985 = vmatpush2.msra.mxu0 0.0
      %5986 = vmatprep.subr.mxu0 0.0
      %5987 = vmatpush2.msra.mxu0 0.0
      %5988 = vmatprep.subr.mxu0 0.0
      %5989 = vmatpush2.msra.mxu0 0.0
      %5990 = vmatprep.subr.mxu0 0.0
      %5991 = vmatpush2.msra.mxu0 0.0
      %5992 = vmatprep.subr.mxu0 0.0
      %5993 = vmatpush2.msra.mxu0 0.0
      %5994 = vmatprep.subr.mxu0 0.0
      %5995 = vmatpush2.msra.mxu0 0.0
      %5996 = vmatprep.subr.mxu0 0.0
      %5997 = vmatpush2.msra.mxu0 0.0
      %5998 = vmatprep.subr.mxu0 0.0
      %5999 = vmatpush2.msra.mxu0 0.0
      %6000 = vmatprep.subr.mxu0 0.0
      %6001 = vmatpush2.msra.mxu0 0.0
      %6002 = vmatprep.subr.mxu0 0.0
      %6003 = vmatpush2.msra.mxu0 0.0
      %6004 = vmatprep.subr.mxu0 0.0
      %6005 = vmatpush2.msra.mxu0 0.0
      %6006 = vmatprep.subr.mxu0 0.0
      %6007 = vmatpush2.msra.mxu0 0.0
      %6008 = vmatprep.mubr.f32.mxu0 0.0
      %6009 = vmatmul.mubr.f32.gmra.mxu0 %v5849
      %v6010 = vpop.f32.mrf.mxu0
      %v6011 = vadd.f32 %v5846, %v6010
      %v6012 = vpop.f32.mrf.mxu0
      %6013 = vmatprep.mubr.f32.mxu0 0.0
      %6014 = vmatmul.mubr.f32.gmra.mxu0 %v5852
      %v6015 = vpop.f32.mrf.mxu0
      %v6016 = vadd.f32 %v5846, %v6015
      %v6017 = vpop.f32.mrf.mxu0
      %6018 = vmatprep.mubr.f32.mxu0 0.0
      %6019 = vmatmul.mubr.f32.gmra.mxu0 %v5855
      %v6020 = vpop.f32.mrf.mxu0
      %v6021 = vadd.f32 %v5846, %v6020
      %v6022 = vpop.f32.mrf.mxu0
      %6023 = vmatprep.mubr.f32.mxu0 0.0
      %6024 = vmatmul.mubr.f32.gmra.mxu0 %v5858
      %v6025 = vpop.f32.mrf.mxu0
      %v6026 = vadd.f32 %v5846, %v6025
      %v6027 = vpop.f32.mrf.mxu0
      %6028 = vmatprep.mubr.f32.mxu0 0.0
      %6029 = vmatmul.mubr.f32.gmra.mxu0 %v5861
      %v6030 = vpop.f32.mrf.mxu0
      %v6031 = vadd.f32 %v5846, %v6030
      %v6032 = vpop.f32.mrf.mxu0
      %6033 = vmatprep.mubr.f32.mxu0 0.0
      %6034 = vmatmul.mubr.f32.gmra.mxu0 %v5864
      %v6035 = vpop.f32.mrf.mxu0
      %v6036 = vadd.f32 %v5846, %v6035
      %v6037 = vpop.f32.mrf.mxu0
      %6038 = vmatprep.mubr.f32.mxu0 0.0
      %6039 = vmatmul.mubr.f32.gmra.mxu0 %v5867
      %v6040 = vpop.f32.mrf.mxu0
      %v6041 = vadd.f32 %v5846, %v6040
      %v6042 = vpop.f32.mrf.mxu0
      %6043 = vmatprep.mubr.f32.mxu0 0.0
      %6044 = vmatmul.mubr.f32.gmra.mxu0 %v5870
      %v6045 = vpop.f32.mrf.mxu0
      %v6046 = vadd.f32 %v5846, %v6045
      %v6047 = vpop.f32.mrf.mxu0
      %6048 = vmatprep.mubr.f32.mxu0 0.0
      %6049 = vmatmul.mubr.f32.gmra.mxu0 %v5873
      %v6050 = vpop.f32.mrf.mxu0
      %v6051 = vadd.f32 %v5846, %v6050
      %v6052 = vpop.f32.mrf.mxu0
      %6053 = vmatprep.mubr.f32.mxu0 0.0
      %6054 = vmatmul.mubr.f32.gmra.mxu0 %v5876
      %v6055 = vpop.f32.mrf.mxu0
      %v6056 = vadd.f32 %v5846, %v6055
      %v6057 = vpop.f32.mrf.mxu0
      %6058 = vmatprep.mubr.f32.mxu0 0.0
      %6059 = vmatmul.mubr.f32.gmra.mxu0 %v5879
      %v6060 = vpop.f32.mrf.mxu0
      %v6061 = vadd.f32 %v5846, %v6060
      %v6062 = vpop.f32.mrf.mxu0
      %6063 = vmatprep.mubr.f32.mxu0 0.0
      %6064 = vmatmul.mubr.f32.gmra.mxu0 %v5882
      %v6065 = vpop.f32.mrf.mxu0
      %v6066 = vadd.f32 %v5846, %v6065
      %v6067 = vpop.f32.mrf.mxu0
      %6068 = vmatprep.mubr.f32.mxu0 0.0
      %6069 = vmatmul.mubr.f32.gmra.mxu0 %v5885
      %v6070 = vpop.f32.mrf.mxu0
      %v6071 = vadd.f32 %v5846, %v6070
      %v6072 = vpop.f32.mrf.mxu0
      %6073 = vmatprep.mubr.f32.mxu0 0.0
      %6074 = vmatmul.mubr.f32.gmra.mxu0 %v5888
      %v6075 = vpop.f32.mrf.mxu0
      %v6076 = vadd.f32 %v5846, %v6075
      %v6077 = vpop.f32.mrf.mxu0
      %6078 = vmatprep.mubr.f32.mxu0 0.0
      %6079 = vmatmul.mubr.f32.gmra.mxu0 %v5891
      %v6080 = vpop.f32.mrf.mxu0
      %v6081 = vadd.f32 %v5846, %v6080
      %v6082 = vpop.f32.mrf.mxu0
      %6083 = vmatprep.mubr.f32.mxu0 0.0
      %6084 = vmatmul.mubr.f32.gmra.mxu0 %v5894
      %v6085 = vpop.f32.mrf.mxu0
      %v6086 = vadd.f32 %v5846, %v6085
      %v6087 = vpop.f32.mrf.mxu0
      %6088 = vmatprep.mubr.f32.mxu0 0.0
      %6089 = vmatmul.mubr.f32.gmra.mxu0 %v5897
      %v6090 = vpop.f32.mrf.mxu0
      %v6091 = vadd.f32 %v5846, %v6090
      %v6092 = vpop.f32.mrf.mxu0
      %6093 = vmatprep.mubr.f32.mxu0 0.0
      %6094 = vmatmul.mubr.f32.gmra.mxu0 %v5900
      %v6095 = vpop.f32.mrf.mxu0
      %v6096 = vadd.f32 %v5846, %v6095
      %v6097 = vpop.f32.mrf.mxu0
      %6098 = vmatprep.mubr.f32.mxu0 0.0
      %6099 = vmatmul.mubr.f32.gmra.mxu0 %v5903
      %v6100 = vpop.f32.mrf.mxu0
      %v6101 = vadd.f32 %v5846, %v6100
      %v6102 = vpop.f32.mrf.mxu0
      %6103 = vmatprep.mubr.f32.mxu0 0.0
      %6104 = vmatmul.mubr.f32.gmra.mxu0 %v5906
      %v6105 = vpop.f32.mrf.mxu0
      %v6106 = vadd.f32 %v5846, %v6105
      %v6107 = vpop.f32.mrf.mxu0
      %6108 = vmatprep.mubr.f32.mxu0 0.0
      %6109 = vmatmul.mubr.f32.gmra.mxu0 %v5909
      %v6110 = vpop.f32.mrf.mxu0
      %v6111 = vadd.f32 %v5846, %v6110
      %v6112 = vpop.f32.mrf.mxu0
      %6113 = vmatprep.mubr.f32.mxu0 0.0
      %6114 = vmatmul.mubr.f32.gmra.mxu0 %v5912
      %v6115 = vpop.f32.mrf.mxu0
      %v6116 = vadd.f32 %v5846, %v6115
      %v6117 = vpop.f32.mrf.mxu0
      %6118 = vmatprep.mubr.f32.mxu0 0.0
      %6119 = vmatmul.mubr.f32.gmra.mxu0 %v5915
      %v6120 = vpop.f32.mrf.mxu0
      %v6121 = vadd.f32 %v5846, %v6120
      %v6122 = vpop.f32.mrf.mxu0
      %6123 = vmatprep.mubr.f32.mxu0 0.0
      %6124 = vmatmul.mubr.f32.gmra.mxu0 %v5918
      %v6125 = vpop.f32.mrf.mxu0
      %v6126 = vadd.f32 %v5846, %v6125
      %v6127 = vpop.f32.mrf.mxu0
      %6128 = vmatprep.mubr.f32.mxu0 0.0
      %6129 = vmatmul.mubr.f32.gmra.mxu0 %v5921
      %v6130 = vpop.f32.mrf.mxu0
      %v6131 = vadd.f32 %v5846, %v6130
      %v6132 = vpop.f32.mrf.mxu0
      %6133 = vmatprep.mubr.f32.mxu0 0.0
      %6134 = vmatmul.mubr.f32.gmra.mxu0 %v5924
      %v6135 = vpop.f32.mrf.mxu0
      %v6136 = vadd.f32 %v5846, %v6135
      %v6137 = vpop.f32.mrf.mxu0
      %6138 = vmatprep.mubr.f32.mxu0 0.0
      %6139 = vmatmul.mubr.f32.gmra.mxu0 %v5927
      %v6140 = vpop.f32.mrf.mxu0
      %v6141 = vadd.f32 %v5846, %v6140
      %v6142 = vpop.f32.mrf.mxu0
      %6143 = vmatprep.mubr.f32.mxu0 0.0
      %6144 = vmatmul.mubr.f32.gmra.mxu0 %v5930
      %v6145 = vpop.f32.mrf.mxu0
      %v6146 = vadd.f32 %v5846, %v6145
      %v6147 = vpop.f32.mrf.mxu0
      %6148 = vmatprep.mubr.f32.mxu0 0.0
      %6149 = vmatmul.mubr.f32.gmra.mxu0 %v5933
      %v6150 = vpop.f32.mrf.mxu0
      %v6151 = vadd.f32 %v5846, %v6150
      %v6152 = vpop.f32.mrf.mxu0
      %6153 = vmatprep.mubr.f32.mxu0 0.0
      %6154 = vmatmul.mubr.f32.gmra.mxu0 %v5936
      %v6155 = vpop.f32.mrf.mxu0
      %v6156 = vadd.f32 %v5846, %v6155
      %v6157 = vpop.f32.mrf.mxu0
      %6158 = vmatprep.mubr.f32.mxu0 0.0
      %6159 = vmatmul.mubr.f32.gmra.mxu0 %v5939
      %v6160 = vpop.f32.mrf.mxu0
      %v6161 = vadd.f32 %v5846, %v6160
      %v6162 = vpop.f32.mrf.mxu0
      %6163 = vmatprep.mubr.f32.mxu0 0.0
      %6164 = vmatmul.mubr.f32.gmra.mxu0 %v5942
      %v6165 = vpop.f32.mrf.mxu0
      %v6166 = vadd.f32 %v5846, %v6165
      %v6167 = vpop.f32.mrf.mxu0
      %6168 = vdwg.mxu0
      %s6169 = sadd.s32 %s304, 1
      %s6170 = smul.u32 %s6169, 24
      %s6171 = scalar_lea.vmem %s292, %s6170
      %v6172 = vld [vmem:[%s6171 + $0x1] sm:$0xff]
      %v6173 = vld [vmem:[%s6171 + $0x9] sm:$0xff]
      %v6174 = vld [vmem:[%s6171 + $0x19] sm:$0xff]
      %v6175 = vld [vmem:[%s6171 + $0x21] sm:$0xff]
      %v6176 = vld [vmem:[%s6171 + $0x31] sm:$0xff]
      %v6177 = vld [vmem:[%s6171 + $0x39] sm:$0xff]
      %v6178 = vld [vmem:[%s6171 + $0x49] sm:$0xff]
      %v6179 = vld [vmem:[%s6171 + $0x51] sm:$0xff]
      %v6180 = vld [vmem:[%s6171 + $0x61] sm:$0xff]
      %v6181 = vld [vmem:[%s6171 + $0x69] sm:$0xff]
      %v6182 = vld [vmem:[%s6171 + $0x79] sm:$0xff]
      %v6183 = vld [vmem:[%s6171 + $0x81] sm:$0xff]
      %v6184 = vld [vmem:[%s6171 + $0x91] sm:$0xff]
      %v6185 = vld [vmem:[%s6171 + $0x99] sm:$0xff]
      %v6186 = vld [vmem:[%s6171 + $0xa9] sm:$0xff]
      %v6187 = vld [vmem:[%s6171 + $0xb1] sm:$0xff]
      %v6188 = vld [vmem:[%s6171 + $0xc1] sm:$0xff]
      %v6189 = vld [vmem:[%s6171 + $0xc9] sm:$0xff]
      %v6190 = vld [vmem:[%s6171 + $0xd9] sm:$0xff]
      %v6191 = vld [vmem:[%s6171 + $0xe1] sm:$0xff]
      %v6192 = vld [vmem:[%s6171 + $0xf1] sm:$0xff]
      %v6193 = vld [vmem:[%s6171 + $0xf9] sm:$0xff]
      %v6194 = vld [vmem:[%s6171 + $0x109] sm:$0xff]
      %v6195 = vld [vmem:[%s6171 + $0x111] sm:$0xff]
      %v6196 = vld [vmem:[%s6171 + $0x121] sm:$0xff]
      %v6197 = vld [vmem:[%s6171 + $0x129] sm:$0xff]
      %v6198 = vld [vmem:[%s6171 + $0x139] sm:$0xff]
      %v6199 = vld [vmem:[%s6171 + $0x141] sm:$0xff]
      %v6200 = vld [vmem:[%s6171 + $0x151] sm:$0xff]
      %v6201 = vld [vmem:[%s6171 + $0x159] sm:$0xff]
      %v6202 = vld [vmem:[%s6171 + $0x169] sm:$0xff]
      %v6203 = vld [vmem:[%s6171 + $0x171] sm:$0xff]
      %v6204 = vadd.f32 %v6011, %v6172
      %v6205 = vadd.f32 %v6016, %v6173
      %v6206 = vadd.f32 %v6021, %v6174
      %v6207 = vadd.f32 %v6026, %v6175
      %v6208 = vadd.f32 %v6031, %v6176
      %v6209 = vadd.f32 %v6036, %v6177
      %v6210 = vadd.f32 %v6041, %v6178
      %v6211 = vadd.f32 %v6046, %v6179
      %v6212 = vadd.f32 %v6051, %v6180
      %v6213 = vadd.f32 %v6056, %v6181
      %v6214 = vadd.f32 %v6061, %v6182
      %v6215 = vadd.f32 %v6066, %v6183
      %v6216 = vadd.f32 %v6071, %v6184
      %v6217 = vadd.f32 %v6076, %v6185
      %v6218 = vadd.f32 %v6081, %v6186
      %v6219 = vadd.f32 %v6086, %v6187
      %v6220 = vadd.f32 %v6091, %v6188
      %v6221 = vadd.f32 %v6096, %v6189
      %v6222 = vadd.f32 %v6101, %v6190
      %v6223 = vadd.f32 %v6106, %v6191
      %v6224 = vadd.f32 %v6111, %v6192
      %v6225 = vadd.f32 %v6116, %v6193
      %v6226 = vadd.f32 %v6121, %v6194
      %v6227 = vadd.f32 %v6126, %v6195
      %v6228 = vadd.f32 %v6131, %v6196
      %v6229 = vadd.f32 %v6136, %v6197
      %v6230 = vadd.f32 %v6141, %v6198
      %v6231 = vadd.f32 %v6146, %v6199
      %v6232 = vadd.f32 %v6151, %v6200
      %v6233 = vadd.f32 %v6156, %v6201
      %v6234 = vadd.f32 %v6161, %v6202
      %v6235 = vadd.f32 %v6166, %v6203
      %6236 = vst.msk [vmem:[%s302] sm:$0xff] %vm1849, %v6204
      %6237 = vst.msk [vmem:[%s302 + $0x8] sm:$0xff] %vm1849, %v6205
      %6238 = vst.msk [vmem:[%s302 + $0x10] sm:$0xff] %vm1849, %v6206
      %6239 = vst.msk [vmem:[%s302 + $0x18] sm:$0xff] %vm1849, %v6207
      %6240 = vst.msk [vmem:[%s302 + $0x20] sm:$0xff] %vm1849, %v6208
      %6241 = vst.msk [vmem:[%s302 + $0x28] sm:$0xff] %vm1849, %v6209
      %6242 = vst.msk [vmem:[%s302 + $0x30] sm:$0xff] %vm1849, %v6210
      %6243 = vst.msk [vmem:[%s302 + $0x38] sm:$0xff] %vm1849, %v6211
      %6244 = vst.msk [vmem:[%s302 + $0x40] sm:$0xff] %vm1849, %v6212
      %6245 = vst.msk [vmem:[%s302 + $0x48] sm:$0xff] %vm1849, %v6213
      %6246 = vst.msk [vmem:[%s302 + $0x50] sm:$0xff] %vm1849, %v6214
      %6247 = vst.msk [vmem:[%s302 + $0x58] sm:$0xff] %vm1849, %v6215
      %6248 = vst.msk [vmem:[%s302 + $0x60] sm:$0xff] %vm1849, %v6216
      %6249 = vst.msk [vmem:[%s302 + $0x68] sm:$0xff] %vm1849, %v6217
      %6250 = vst.msk [vmem:[%s302 + $0x70] sm:$0xff] %vm1849, %v6218
      %6251 = vst.msk [vmem:[%s302 + $0x78] sm:$0xff] %vm1849, %v6219
      %6252 = vst.msk [vmem:[%s302 + $0x80] sm:$0xff] %vm1849, %v6220
      %6253 = vst.msk [vmem:[%s302 + $0x88] sm:$0xff] %vm1849, %v6221
      %6254 = vst.msk [vmem:[%s302 + $0x90] sm:$0xff] %vm1849, %v6222
      %6255 = vst.msk [vmem:[%s302 + $0x98] sm:$0xff] %vm1849, %v6223
      %6256 = vst.msk [vmem:[%s302 + $0xa0] sm:$0xff] %vm1849, %v6224
      %6257 = vst.msk [vmem:[%s302 + $0xa8] sm:$0xff] %vm1849, %v6225
      %6258 = vst.msk [vmem:[%s302 + $0xb0] sm:$0xff] %vm1849, %v6226
      %6259 = vst.msk [vmem:[%s302 + $0xb8] sm:$0xff] %vm1849, %v6227
      %6260 = vst.msk [vmem:[%s302 + $0xc0] sm:$0xff] %vm1849, %v6228
      %6261 = vst.msk [vmem:[%s302 + $0xc8] sm:$0xff] %vm1849, %v6229
      %6262 = vst.msk [vmem:[%s302 + $0xd0] sm:$0xff] %vm1849, %v6230
      %6263 = vst.msk [vmem:[%s302 + $0xd8] sm:$0xff] %vm1849, %v6231
      %6264 = vst.msk [vmem:[%s302 + $0xe0] sm:$0xff] %vm1849, %v6232
      %6265 = vst.msk [vmem:[%s302 + $0xe8] sm:$0xff] %vm1849, %v6233
      %6266 = vst.msk [vmem:[%s302 + $0xf0] sm:$0xff] %vm1849, %v6234
      %6267 = vst.msk [vmem:[%s302 + $0xf8] sm:$0xff] %vm1849, %v6235
      %s6268 = smul.u32 16, %s23
      %p6269 = scmp.lt.s32.totalorder %s22, 1
      %s6270 = scalar_select %p6269, %s22, 1
      %p6271 = scmp.lt.s32.totalorder %s6268, 15
      %s6272 = scalar_select %p6271, %s6268, 15
      %s6273 = smul.addr %s6272, 2
      %s6274 = smul.addr %s6270, 32
      %s6275 = sadd.s32 %s6273, %s6274
      %s6276 = smul.addr %s6275, 8
      %s6277 = scalar_lea.vmem %s7, %s6276
      // Predicated region
      $region53: #{tpu_custom_call.1} parent=47 // pred_check
        %p6278 = pneg %p202
      $region54: #{tpu_custom_call.1} parent=47 // pred_check_branch
        %6280 = sbr.rel (%p6278) target = $region56
      $region55: #{tpu_custom_call.1} parent=47 // pred_region
        %s6281 = smul.u32 16, %s23
      $region56: #{tpu_custom_call.1} parent=47 // pred_fallthru
        _
    $region48: #{tpu_custom_call.1} parent=5 // pred_fallthru
      _
    %p6282 = scmp.le.s32.totalorder 2, %s13
    // Predicated region
    $region57: #{tpu_custom_call.1} parent=5 // pred_check
      %p6283 = pneg %p6282
    $region58: #{tpu_custom_call.1} parent=5 // pred_check_branch
      %6285 = sbr.rel (%p6283) target = $region60
    $region59: #{tpu_custom_call.1} parent=5 // pred_region
      %s6286 = ssub.s32 %s13, 2
      // Predicated region
      $region61: #{tpu_custom_call.1} parent=59 // pred_check
        %p6287 = pneg %p208
      $region62: #{tpu_custom_call.1} parent=59 // pred_check_branch
        %6289 = sbr.rel (%p6287) target = $region64
      $region63: #{tpu_custom_call.1} parent=59 // pred_region
        %s6290 = smul.u32 16, %s25
        %p6291 = scmp.lt.s32.totalorder %s24, 1
        %s6292 = scalar_select %p6291, %s24, 1
        %p6293 = scmp.lt.s32.totalorder %s6290, 15
        %s6294 = scalar_select %p6293, %s6290, 15
        %s6295 = smul.addr %s6294, 2
        %s6296 = smul.addr %s6292, 32
        %s6297 = sadd.s32 %s6295, %s6296
        %s6298 = smul.addr %s6297, 8
        %s6299 = scalar_lea.vmem %s7, %s6298
      $region64: #{tpu_custom_call.1} parent=59 // pred_fallthru
        _
    $region60: #{tpu_custom_call.1} parent=5 // pred_fallthru
      _
  $region6: #{tpu_custom_call.1} parent=0 // loop_footer
    %s17 = sadd.s32 1, %s13
  $region7: #{tpu_custom_call.1} parent=0 // loop_footer_branch
    %12 = sbr.rel target = $region3
  $region8: #{tpu_custom_call.1} parent=0 // loop_exit
    _

</llo_original>
